<compile_context>
chip_gen: v6e
topology: v6e:2x2x1
jax: 0.10.0
libtpu: 0.0.40
codegen_flags: <defaults>
</compile_context>

<pallas_src>
import functools

import jax
import jax.numpy as jnp
from jax import lax
from jax.experimental import pallas as pl
from jax.experimental.pallas import tpu as pltpu


HIDDEN_ENC_LAST = 256
HIDDEN_DEC = [128, 64, 32]
PARA_DICT = {0: [[3, 2], 2, [3, 5], 0], 1: [[3, 3], 2, [2, 4], 0],
             2: [[2, 2], 2, [6, 1], 0], 3: [[3, 3], 2, [3, 7], 0],
             4: [[3, 3], 2, [3, 2], 0], 5: [[2, 2], 2, [4, 6], 0],
             6: [[3, 3], 2, [4, 7], 0]}

COMPUTE_DTYPE = jnp.bfloat16


# -----------------------------------------------------------------------------
# Pallas kernel: single-K-block matmul + bias + optional ReLU
# -----------------------------------------------------------------------------
def _matmul_bias_kernel(x_ref, w_ref, b_ref, o_ref, *, apply_relu):
    acc = jnp.dot(x_ref[...], w_ref[...], preferred_element_type=jnp.float32)
    acc = acc + b_ref[...]
    if apply_relu:
        acc = jnp.maximum(acc, 0.0)
    o_ref[...] = acc.astype(o_ref.dtype)


def _round_up(x, m):
    return (x + m - 1) // m * m


def _pick_tm(m):
    """Single exact block for tiny M; otherwise >=2 blocks (2 TCs on v7x),
    capped at 512 rows so per-block VMEM stays small."""
    if m <= 64:
        return m
    if m <= 1024:
        return _round_up(m, 16) // 2        # multiple of 8, exactly 2 blocks
    return 512


def pallas_matmul_bias(x, w, b, *, apply_relu, out_dtype):
    """out = maybe_relu(x @ w + b).  x:(M,K) bf16, w:(K,N) bf16, b:(N,) f32.
    K and N are single full VMEM blocks; only M is tiled (padded if needed)."""
    M, K = x.shape
    K2, N = w.shape
    assert K == K2 and b.shape == (N,)
    tm = _pick_tm(M)
    Mp = _round_up(M, tm)
    xp = x if Mp == M else jnp.pad(x, ((0, Mp - M), (0, 0)))
    b2 = b.reshape(1, N).astype(jnp.float32)

    kernel = functools.partial(_matmul_bias_kernel, apply_relu=apply_relu)
    out = pl.pallas_call(
        kernel,
        out_shape=jax.ShapeDtypeStruct((Mp, N), out_dtype),
        grid_spec=pltpu.PrefetchScalarGridSpec(
            num_scalar_prefetch=0,
            grid=(Mp // tm,),
            in_specs=[
                pl.BlockSpec((tm, K), lambda i: (i, 0)),
                pl.BlockSpec((K, N), lambda i: (0, 0)),
                pl.BlockSpec((1, N), lambda i: (0, 0)),
            ],
            out_specs=pl.BlockSpec((tm, N), lambda i: (i, 0)),
        ),
        compiler_params=pltpu.CompilerParams(
            dimension_semantics=("parallel",)),
    )(xp, w, b2)
    return out if Mp == M else out[:M]


# -----------------------------------------------------------------------------
# Layers (NHWC activations)
# -----------------------------------------------------------------------------
def _dec_layer(h, w_mat, b_vec, co):
    """Phase-decomposed ConvTranspose2d(k=3, s=2, p=1, op=1) + ReLU, NHWC."""
    B, Hin, Win, ci = h.shape
    hp = jnp.pad(h, ((0, 0), (0, 1), (0, 1), (0, 0)))
    # 4 non-dilated taps (dy, dx) in {0,1}^2 -> (M, 4*Ci); no interior zeros.
    taps = [hp[:, dy:dy + Hin, dx:dx + Win, :] for dy in (0, 1) for dx in (0, 1)]
    xt = jnp.concatenate(taps, axis=-1).reshape(B * Hin * Win, 4 * ci)
    o = pallas_matmul_bias(xt, w_mat, b_vec, apply_relu=True,
                           out_dtype=COMPUTE_DTYPE)
    # pixel shuffle: (B, Hin, Win, ry, rx, Co) -> (B, 2Hin, 2Win, Co)
    o = o.reshape(B, Hin, Win, 2, 2, co).transpose(0, 1, 3, 2, 4, 5)
    return o.reshape(B, 2 * Hin, 2 * Win, co)


def _pred_layer(h, w_mat, b_vec, co, kdims, s, pad, opad):
    """General ConvTranspose2d via zero-dilation + edge pad + tap gather, NHWC.
    # TODO(synk): phase-decompose this general case too (asymmetric padding,
    # odd output sizes); kept as dilate+gather since its cost is already tiny.
    """
    B, Hin, Win, ci = h.shape
    kH, kW = kdims
    pH, pW = pad
    Hout = (Hin - 1) * s - 2 * pH + kH + opad
    Wout = (Win - 1) * s - 2 * pW + kW + opad
    z = lax.pad(h, jnp.array(0.0, h.dtype),
                ((0, 0, 0),
                 (kH - 1 - pH, kH - 1 - pH + opad, s - 1),
                 (kW - 1 - pW, kW - 1 - pW + opad, s - 1),
                 (0, 0, 0)))
    taps = [z[:, a:a + Hout, c:c + Wout, :]
            for a in range(kH) for c in range(kW)]
    xt = jnp.concatenate(taps, axis=-1).reshape(B * Hout * Wout, kH * kW * ci)
    o = pallas_matmul_bias(xt, w_mat, b_vec, apply_relu=False,
                           out_dtype=jnp.float32)
    return o.reshape(B, Hout, Wout, co)


# -----------------------------------------------------------------------------
# Parameter init (PyTorch layout) + one-time preprocessing
# -----------------------------------------------------------------------------
def init_decoder_params(key, latent_dim, H, W, output_channels, name_id=1):
    params = {}
    k = key
    k, sub = jax.random.split(k)
    params['fc_w'] = 0.05 * jax.random.normal(
        sub, (H * W * HIDDEN_ENC_LAST, latent_dim), jnp.float32)   # (out, in)
    k, sub = jax.random.split(k)
    params['fc_b'] = 0.05 * jax.random.normal(
        sub, (H * W * HIDDEN_ENC_LAST,), jnp.float32)
    prev = HIDDEN_ENC_LAST
    for i, co in enumerate(HIDDEN_DEC):
        k, sub = jax.random.split(k)
        params[f'dec{i}_w'] = 0.05 * jax.random.normal(
            sub, (prev, co, 3, 3), jnp.float32)                    # (Ci,Co,kH,kW)
        k, sub = jax.random.split(k)
        params[f'dec{i}_b'] = 0.05 * jax.random.normal(sub, (co,), jnp.float32)
        prev = co
    kdims, _, _, _ = PARA_DICT[name_id]
    k, sub = jax.random.split(k)
    params['pred_w'] = 0.05 * jax.random.normal(
        sub, (HIDDEN_DEC[-1], output_channels, kdims[0], kdims[1]), jnp.float32)
    k, sub = jax.random.split(k)
    params['pred_b'] = 0.05 * jax.random.normal(sub, (output_channels,), jnp.float32)
    return params


# Phase selector for k=3, s=2, p=1: ((phase r, base offset d), kernel index k)
_PHASE_TAPS = (((0, 0), 1), ((1, 0), 2), ((1, 1), 0))


def prepare_decoder_params(params, latent_dim, H, W, output_channels, name_id=1):
    """Hoist all weight preprocessing out of the forward path."""
    fp = {}
    # fc: permute columns so the output is NHWC-ordered (B, H, W, 256).
    fw = params['fc_w'].T.reshape(latent_dim, HIDDEN_ENC_LAST, H, W)
    fp['fc_w'] = fw.transpose(0, 2, 3, 1).reshape(
        latent_dim, H * W * HIDDEN_ENC_LAST).astype(COMPUTE_DTYPE)
    fp['fc_b'] = params['fc_b'].reshape(HIDDEN_ENC_LAST, H, W).transpose(
        1, 2, 0).reshape(-1).astype(jnp.float32)

    # dec layers: phase-combined (sub-pixel) weight matrices (4*Ci, 4*Co).
    prev = HIDDEN_ENC_LAST
    for i, co in enumerate(HIDDEN_DEC):
        w = params[f'dec{i}_w']                      # (Ci, Co, 3, 3)
        ci = prev
        wc = jnp.zeros((2, 2, ci, 2, 2, co), jnp.float32)
        for (ry, dy), ky in _PHASE_TAPS:
            for (rx, dx), kx in _PHASE_TAPS:
                wc = wc.at[dy, dx, :, ry, rx, :].set(w[:, :, ky, kx])
        fp[f'dec{i}_w'] = wc.reshape(4 * ci, 4 * co).astype(COMPUTE_DTYPE)
        fp[f'dec{i}_b'] = jnp.tile(params[f'dec{i}_b'], 4).astype(jnp.float32)
        prev = co

    # pred layer: flipped, channel-swapped kernel as a (kH*kW*Ci, Co) matrix.
    wp = params['pred_w']                            # (Ci, Co, kH, kW)
    kH, kW = wp.shape[2], wp.shape[3]
    wf = jnp.flip(wp, (2, 3)).transpose(2, 3, 0, 1)  # (kH, kW, Ci, Co)
    fp['pred_w'] = wf.reshape(kH * kW * prev, output_channels).astype(COMPUTE_DTYPE)
    fp['pred_b'] = params['pred_b'].astype(jnp.float32)
    return fp


# -----------------------------------------------------------------------------
# Forward
# -----------------------------------------------------------------------------
def decoder_forward(fparams, x, batch_size, H, W, output_channels, name_id=1):
    B = batch_size
    z = x.reshape(B, -1).astype(COMPUTE_DTYPE)       # robust torch .squeeze()
    h = pallas_matmul_bias(z, fparams['fc_w'], fparams['fc_b'],
                           apply_relu=False, out_dtype=COMPUTE_DTYPE)
    h = h.reshape(B, H, W, HIDDEN_ENC_LAST)          # already NHWC-ordered
    for i, co in enumerate(HIDDEN_DEC):
        h = _dec_layer(h, fparams[f'dec{i}_w'], fparams[f'dec{i}_b'], co)
    kdims, s, pad, opad = PARA_DICT[name_id]
    h = _pred_layer(h, fparams['pred_w'], fparams['pred_b'], output_channels,
                    kdims, s, pad, opad)
    return h.transpose(0, 3, 1, 2)                   # NCHW at module boundary


# -----------------------------------------------------------------------------
# Pure-JAX f32 reference of the PyTorch forward (for numerical validation)
# -----------------------------------------------------------------------------
def _conv_transpose_ref(x, w, b, stride, padding, output_padding):
    kH, kW = w.shape[2], w.shape[3]
    sH, sW = stride
    pH, pW = padding
    opH, opW = output_padding
    z = lax.pad(x, jnp.array(0.0, x.dtype),
                ((0, 0, 0), (0, 0, 0),
                 (kH - 1 - pH, kH - 1 - pH + opH, sH - 1),
                 (kW - 1 - pW, kW - 1 - pW + opW, sW - 1)))
    w_t = jnp.flip(w, (2, 3)).transpose(1, 0, 2, 3)  # (Co, Ci, kH, kW)
    out = lax.conv_general_dilated(
        z, w_t, window_strides=(1, 1), padding='VALID',
        dimension_numbers=('NCHW', 'OIHW', 'NCHW'),
        precision=lax.Precision.HIGHEST)
    return out + b.reshape(1, -1, 1, 1)


def decoder_reference(params, x, batch_size, H, W, name_id=1):
    z = x.reshape(batch_size, -1).astype(jnp.float32)
    h = jnp.dot(z, params['fc_w'].T, precision=lax.Precision.HIGHEST) + params['fc_b']
    h = h.reshape(batch_size, HIDDEN_ENC_LAST, H, W)
    for i in range(len(HIDDEN_DEC)):
        h = _conv_transpose_ref(h, params[f'dec{i}_w'], params[f'dec{i}_b'],
                                (2, 2), (1, 1), (1, 1))
        h = jnp.maximum(h, 0.0)
    kdims, s, pad, opad = PARA_DICT[name_id]
    h = _conv_transpose_ref(h, params['pred_w'], params['pred_b'],
                            (s, s), (pad[0], pad[1]), (opad, opad))
    return h


if __name__ == "__main__":
    batch_size = 2
    latent_dim = 16
    H = W = 4
    output_channels = 3
    name_id = 1

    key = jax.random.PRNGKey(0)
    key_x, key_p = jax.random.split(key)
    x = jax.random.normal(key_x, (batch_size, 1, latent_dim), jnp.float32)
    params = init_decoder_params(key_p, latent_dim, H, W, output_channels, name_id)

    # One-time weight preprocessing (hoisted out of the forward path).
    fparams = prepare_decoder_params(params, latent_dim, H, W,
                                     output_channels, name_id)
    fparams = jax.tree_util.tree_map(jax.block_until_ready, fparams)

    fwd = jax.jit(functools.partial(
        decoder_forward, batch_size=batch_size, H=H, W=W,
        output_channels=output_channels, name_id=name_id))
    recon = jax.block_until_ready(fwd(fparams, x))

    # Shape contract of the PyTorch module (name_id=1: 4 -> 8 -> 16 -> 32 -> (61, 57)).
    assert recon.shape == (batch_size, output_channels, 61, 57), recon.shape
    assert recon.dtype == jnp.float32

    # Numerical check against the f32 pure-JAX reference (bf16 MXU inputs,
    # f32 accumulation -> a few percent of full scale at most).
    ref = jax.block_until_ready(
        decoder_reference(params, x, batch_size, H, W, name_id))
    err = float(jnp.max(jnp.abs(recon - ref)))
    scale = float(jnp.max(jnp.abs(ref)))
    assert err <= 0.1 * scale + 1e-3, (err, scale)

    print("KERNEL_OK")
</pallas_src>

<mosaic_0001>
module attributes {stable_mosaic.version = 11 : i64} {
  func.func @_matmul_bias_kernel(%arg0: i32, %arg1: memref<2x16xbf16, #tpu.memory_space<vmem>>, %arg2: memref<16x4096xbf16, #tpu.memory_space<vmem>>, %arg3: memref<1x4096xf32, #tpu.memory_space<vmem>>, %arg4: memref<2x4096xbf16, #tpu.memory_space<vmem>>) attributes {dimension_semantics = [#tpu.dimension_semantics<parallel>], iteration_bounds = array<i64: 1>, scalar_prefetch = 0 : i64, scratch_operands = 0 : i64, tpu.core_type = #tpu.core_type<tc>, window_params = [{transform_indices = @transform_0, window_bounds = array<i64: 2, 16>}, {pipeline_mode = #tpu.pipeline_mode<synchronous>, transform_indices = @transform_1, window_bounds = array<i64: 16, 4096>}, {pipeline_mode = #tpu.pipeline_mode<synchronous>, transform_indices = @transform_2, window_bounds = array<i64: 1, 4096>}, {transform_indices = @transform_3, window_bounds = array<i64: 2, 4096>}]} {
    %c0 = arith.constant 0 : index
    %c0_0 = arith.constant 0 : index
    %0 = vector.load %arg1[%c0, %c0_0] : memref<2x16xbf16, #tpu.memory_space<vmem>>, vector<2x16xbf16>
    %c0_1 = arith.constant 0 : index
    %c0_2 = arith.constant 0 : index
    %1 = vector.load %arg2[%c0_1, %c0_2] : memref<16x4096xbf16, #tpu.memory_space<vmem>>, vector<16x4096xbf16>
    %cst = arith.constant dense<0.000000e+00> : vector<2x4096xf32>
    %2 = tpu.matmul %0, %1, %cst {dimension_numbers = #tpu.dot_dimension_numbers<[1], [0], [0], [1], [0, 0, 1, 1], [], []>} : vector<2x16xbf16>, vector<16x4096xbf16>, vector<2x4096xf32> -> vector<2x4096xf32>
    %c0_3 = arith.constant 0 : index
    %c0_4 = arith.constant 0 : index
    %3 = vector.load %arg3[%c0_3, %c0_4] : memref<1x4096xf32, #tpu.memory_space<vmem>>, vector<1x4096xf32>
    %4 = vector.broadcast %3 : vector<1x4096xf32> to vector<2x4096xf32>
    %5 = arith.addf %2, %4 : vector<2x4096xf32>
    %6 = arith.truncf %5 : vector<2x4096xf32> to vector<2x4096xbf16>
    %c0_5 = arith.constant 0 : index
    %c0_6 = arith.constant 0 : index
    %7 = vector.load %arg4[%c0_5, %c0_6] : memref<2x4096xbf16, #tpu.memory_space<vmem>>, vector<2x4096xbf16>
    tpu.vector_store %arg4[%c0_5, %c0_6], %6 {strides = array<i32>} : memref<2x4096xbf16, #tpu.memory_space<vmem>>, vector<2x4096xbf16>,
    return
  }
  func.func @transform_0(%arg0: i32) -> (i32, i32) {
    %c0_i32 = arith.constant 0 : i32
    %c0_i32_0 = arith.constant 0 : i32
    return %arg0, %c0_i32 : i32, i32
  }
  func.func @transform_1(%arg0: i32) -> (i32, i32) {
    %c0_i32 = arith.constant 0 : i32
    %c0_i32_0 = arith.constant 0 : i32
    %c0_i32_1 = arith.constant 0 : i32
    return %c0_i32, %c0_i32_0 : i32, i32
  }
  func.func @transform_2(%arg0: i32) -> (i32, i32) {
    %c0_i32 = arith.constant 0 : i32
    %c0_i32_0 = arith.constant 0 : i32
    %c0_i32_1 = arith.constant 0 : i32
    return %c0_i32, %c0_i32_0 : i32, i32
  }
  func.func @transform_3(%arg0: i32) -> (i32, i32) {
    %c0_i32 = arith.constant 0 : i32
    %c0_i32_0 = arith.constant 0 : i32
    return %arg0, %c0_i32 : i32, i32
  }
}

module attributes {stable_mosaic.version = 11 : i64} {
  func.func @_matmul_bias_kernel(%arg0: i32, %arg1: memref<32x1024xbf16, #tpu.memory_space<vmem>>, %arg2: memref<1024x512xbf16, #tpu.memory_space<vmem>>, %arg3: memref<1x512xf32, #tpu.memory_space<vmem>>, %arg4: memref<32x512xbf16, #tpu.memory_space<vmem>>) attributes {dimension_semantics = [#tpu.dimension_semantics<parallel>], iteration_bounds = array<i64: 1>, scalar_prefetch = 0 : i64, scratch_operands = 0 : i64, tpu.core_type = #tpu.core_type<tc>, window_params = [{transform_indices = @transform_0, window_bounds = array<i64: 32, 1024>}, {pipeline_mode = #tpu.pipeline_mode<synchronous>, transform_indices = @transform_1, window_bounds = array<i64: 1024, 512>}, {pipeline_mode = #tpu.pipeline_mode<synchronous>, transform_indices = @transform_2, window_bounds = array<i64: 1, 512>}, {transform_indices = @transform_3, window_bounds = array<i64: 32, 512>}]} {
    %c0 = arith.constant 0 : index
    %c0_0 = arith.constant 0 : index
    %0 = vector.load %arg1[%c0, %c0_0] : memref<32x1024xbf16, #tpu.memory_space<vmem>>, vector<32x1024xbf16>
    %c0_1 = arith.constant 0 : index
    %c0_2 = arith.constant 0 : index
    %1 = vector.load %arg2[%c0_1, %c0_2] : memref<1024x512xbf16, #tpu.memory_space<vmem>>, vector<1024x512xbf16>
    %cst = arith.constant dense<0.000000e+00> : vector<32x512xf32>
    %2 = tpu.matmul %0, %1, %cst {dimension_numbers = #tpu.dot_dimension_numbers<[1], [0], [0], [1], [0, 0, 1, 1], [], []>} : vector<32x1024xbf16>, vector<1024x512xbf16>, vector<32x512xf32> -> vector<32x512xf32>
    %c0_3 = arith.constant 0 : index
    %c0_4 = arith.constant 0 : index
    %3 = vector.load %arg3[%c0_3, %c0_4] : memref<1x512xf32, #tpu.memory_space<vmem>>, vector<1x512xf32>
    %4 = vector.broadcast %3 : vector<1x512xf32> to vector<32x512xf32>
    %5 = arith.addf %2, %4 : vector<32x512xf32>
    %cst_5 = arith.constant 0.000000e+00 : f32
    %6 = vector.broadcast %cst_5 : f32 to vector<32x512xf32>
    %7 = arith.maximumf %5, %6 : vector<32x512xf32>
    %8 = arith.truncf %7 : vector<32x512xf32> to vector<32x512xbf16>
    %c0_6 = arith.constant 0 : index
    %c0_7 = arith.constant 0 : index
    %9 = vector.load %arg4[%c0_6, %c0_7] : memref<32x512xbf16, #tpu.memory_space<vmem>>, vector<32x512xbf16>
    tpu.vector_store %arg4[%c0_6, %c0_7], %8 {strides = array<i32>} : memref<32x512xbf16, #tpu.memory_space<vmem>>, vector<32x512xbf16>,
    return
  }
  func.func @transform_0(%arg0: i32) -> (i32, i32) {
    %c0_i32 = arith.constant 0 : i32
    %c0_i32_0 = arith.constant 0 : i32
    return %arg0, %c0_i32 : i32, i32
  }
  func.func @transform_1(%arg0: i32) -> (i32, i32) {
    %c0_i32 = arith.constant 0 : i32
    %c0_i32_0 = arith.constant 0 : i32
    %c0_i32_1 = arith.constant 0 : i32
    return %c0_i32, %c0_i32_0 : i32, i32
  }
  func.func @transform_2(%arg0: i32) -> (i32, i32) {
    %c0_i32 = arith.constant 0 : i32
    %c0_i32_0 = arith.constant 0 : i32
    %c0_i32_1 = arith.constant 0 : i32
    return %c0_i32, %c0_i32_0 : i32, i32
  }
  func.func @transform_3(%arg0: i32) -> (i32, i32) {
    %c0_i32 = arith.constant 0 : i32
    %c0_i32_0 = arith.constant 0 : i32
    return %arg0, %c0_i32 : i32, i32
  }
}

module attributes {stable_mosaic.version = 11 : i64} {
  func.func @_matmul_bias_kernel(%arg0: i32, %arg1: memref<64x512xbf16, #tpu.memory_space<vmem>>, %arg2: memref<512x256xbf16, #tpu.memory_space<vmem>>, %arg3: memref<1x256xf32, #tpu.memory_space<vmem>>, %arg4: memref<64x256xbf16, #tpu.memory_space<vmem>>) attributes {dimension_semantics = [#tpu.dimension_semantics<parallel>], iteration_bounds = array<i64: 2>, scalar_prefetch = 0 : i64, scratch_operands = 0 : i64, tpu.core_type = #tpu.core_type<tc>, window_params = [{transform_indices = @transform_0, window_bounds = array<i64: 64, 512>}, {pipeline_mode = #tpu.pipeline_mode<synchronous>, transform_indices = @transform_1, window_bounds = array<i64: 512, 256>}, {pipeline_mode = #tpu.pipeline_mode<synchronous>, transform_indices = @transform_2, window_bounds = array<i64: 1, 256>}, {transform_indices = @transform_3, window_bounds = array<i64: 64, 256>}]} {
    %c0 = arith.constant 0 : index
    %c0_0 = arith.constant 0 : index
    %0 = vector.load %arg1[%c0, %c0_0] : memref<64x512xbf16, #tpu.memory_space<vmem>>, vector<64x512xbf16>
    %c0_1 = arith.constant 0 : index
    %c0_2 = arith.constant 0 : index
    %1 = vector.load %arg2[%c0_1, %c0_2] : memref<512x256xbf16, #tpu.memory_space<vmem>>, vector<512x256xbf16>
    %cst = arith.constant dense<0.000000e+00> : vector<64x256xf32>
    %2 = tpu.matmul %0, %1, %cst {dimension_numbers = #tpu.dot_dimension_numbers<[1], [0], [0], [1], [0, 0, 1, 1], [], []>} : vector<64x512xbf16>, vector<512x256xbf16>, vector<64x256xf32> -> vector<64x256xf32>
    %c0_3 = arith.constant 0 : index
    %c0_4 = arith.constant 0 : index
    %3 = vector.load %arg3[%c0_3, %c0_4] : memref<1x256xf32, #tpu.memory_space<vmem>>, vector<1x256xf32>
    %4 = vector.broadcast %3 : vector<1x256xf32> to vector<64x256xf32>
    %5 = arith.addf %2, %4 : vector<64x256xf32>
    %cst_5 = arith.constant 0.000000e+00 : f32
    %6 = vector.broadcast %cst_5 : f32 to vector<64x256xf32>
    %7 = arith.maximumf %5, %6 : vector<64x256xf32>
    %8 = arith.truncf %7 : vector<64x256xf32> to vector<64x256xbf16>
    %c0_6 = arith.constant 0 : index
    %c0_7 = arith.constant 0 : index
    %9 = vector.load %arg4[%c0_6, %c0_7] : memref<64x256xbf16, #tpu.memory_space<vmem>>, vector<64x256xbf16>
    tpu.vector_store %arg4[%c0_6, %c0_7], %8 {strides = array<i32>} : memref<64x256xbf16, #tpu.memory_space<vmem>>, vector<64x256xbf16>,
    return
  }
  func.func @transform_0(%arg0: i32) -> (i32, i32) {
    %c0_i32 = arith.constant 0 : i32
    %c0_i32_0 = arith.constant 0 : i32
    return %arg0, %c0_i32 : i32, i32
  }
  func.func @transform_1(%arg0: i32) -> (i32, i32) {
    %c0_i32 = arith.constant 0 : i32
    %c0_i32_0 = arith.constant 0 : i32
    %c0_i32_1 = arith.constant 0 : i32
    return %c0_i32, %c0_i32_0 : i32, i32
  }
  func.func @transform_2(%arg0: i32) -> (i32, i32) {
    %c0_i32 = arith.constant 0 : i32
    %c0_i32_0 = arith.constant 0 : i32
    %c0_i32_1 = arith.constant 0 : i32
    return %c0_i32, %c0_i32_0 : i32, i32
  }
  func.func @transform_3(%arg0: i32) -> (i32, i32) {
    %c0_i32 = arith.constant 0 : i32
    %c0_i32_0 = arith.constant 0 : i32
    return %arg0, %c0_i32 : i32, i32
  }
}

module attributes {stable_mosaic.version = 11 : i64} {
  func.func @_matmul_bias_kernel(%arg0: i32, %arg1: memref<256x256xbf16, #tpu.memory_space<vmem>>, %arg2: memref<256x128xbf16, #tpu.memory_space<vmem>>, %arg3: memref<1x128xf32, #tpu.memory_space<vmem>>, %arg4: memref<256x128xbf16, #tpu.memory_space<vmem>>) attributes {dimension_semantics = [#tpu.dimension_semantics<parallel>], iteration_bounds = array<i64: 2>, scalar_prefetch = 0 : i64, scratch_operands = 0 : i64, tpu.core_type = #tpu.core_type<tc>, window_params = [{transform_indices = @transform_0, window_bounds = array<i64: 256, 256>}, {pipeline_mode = #tpu.pipeline_mode<synchronous>, transform_indices = @transform_1, window_bounds = array<i64: 256, 128>}, {pipeline_mode = #tpu.pipeline_mode<synchronous>, transform_indices = @transform_2, window_bounds = array<i64: 1, 128>}, {transform_indices = @transform_3, window_bounds = array<i64: 256, 128>}]} {
    %c0 = arith.constant 0 : index
    %c0_0 = arith.constant 0 : index
    %0 = vector.load %arg1[%c0, %c0_0] : memref<256x256xbf16, #tpu.memory_space<vmem>>, vector<256x256xbf16>
    %c0_1 = arith.constant 0 : index
    %c0_2 = arith.constant 0 : index
    %1 = vector.load %arg2[%c0_1, %c0_2] : memref<256x128xbf16, #tpu.memory_space<vmem>>, vector<256x128xbf16>
    %cst = arith.constant dense<0.000000e+00> : vector<256x128xf32>
    %2 = tpu.matmul %0, %1, %cst {dimension_numbers = #tpu.dot_dimension_numbers<[1], [0], [0], [1], [0, 0, 1, 1], [], []>} : vector<256x256xbf16>, vector<256x128xbf16>, vector<256x128xf32> -> vector<256x128xf32>
    %c0_3 = arith.constant 0 : index
    %c0_4 = arith.constant 0 : index
    %3 = vector.load %arg3[%c0_3, %c0_4] : memref<1x128xf32, #tpu.memory_space<vmem>>, vector<1x128xf32>
    %4 = vector.broadcast %3 : vector<1x128xf32> to vector<256x128xf32>
    %5 = arith.addf %2, %4 : vector<256x128xf32>
    %cst_5 = arith.constant 0.000000e+00 : f32
    %6 = vector.broadcast %cst_5 : f32 to vector<256x128xf32>
    %7 = arith.maximumf %5, %6 : vector<256x128xf32>
    %8 = arith.truncf %7 : vector<256x128xf32> to vector<256x128xbf16>
    %c0_6 = arith.constant 0 : index
    %c0_7 = arith.constant 0 : index
    %9 = vector.load %arg4[%c0_6, %c0_7] : memref<256x128xbf16, #tpu.memory_space<vmem>>, vector<256x128xbf16>
    tpu.vector_store %arg4[%c0_6, %c0_7], %8 {strides = array<i32>} : memref<256x128xbf16, #tpu.memory_space<vmem>>, vector<256x128xbf16>,
    return
  }
  func.func @transform_0(%arg0: i32) -> (i32, i32) {
    %c0_i32 = arith.constant 0 : i32
    %c0_i32_0 = arith.constant 0 : i32
    return %arg0, %c0_i32 : i32, i32
  }
  func.func @transform_1(%arg0: i32) -> (i32, i32) {
    %c0_i32 = arith.constant 0 : i32
    %c0_i32_0 = arith.constant 0 : i32
    %c0_i32_1 = arith.constant 0 : i32
    return %c0_i32, %c0_i32_0 : i32, i32
  }
  func.func @transform_2(%arg0: i32) -> (i32, i32) {
    %c0_i32 = arith.constant 0 : i32
    %c0_i32_0 = arith.constant 0 : i32
    %c0_i32_1 = arith.constant 0 : i32
    return %c0_i32, %c0_i32_0 : i32, i32
  }
  func.func @transform_3(%arg0: i32) -> (i32, i32) {
    %c0_i32 = arith.constant 0 : i32
    %c0_i32_0 = arith.constant 0 : i32
    return %arg0, %c0_i32 : i32, i32
  }
}

module attributes {stable_mosaic.version = 11 : i64} {
  func.func @_matmul_bias_kernel(%arg0: i32, %arg1: memref<512x288xbf16, #tpu.memory_space<vmem>>, %arg2: memref<288x3xbf16, #tpu.memory_space<vmem>>, %arg3: memref<1x3xf32, #tpu.memory_space<vmem>>, %arg4: memref<512x3xf32, #tpu.memory_space<vmem>>) attributes {dimension_semantics = [#tpu.dimension_semantics<parallel>], iteration_bounds = array<i64: 14>, scalar_prefetch = 0 : i64, scratch_operands = 0 : i64, tpu.core_type = #tpu.core_type<tc>, window_params = [{transform_indices = @transform_0, window_bounds = array<i64: 512, 288>}, {pipeline_mode = #tpu.pipeline_mode<synchronous>, transform_indices = @transform_1, window_bounds = array<i64: 288, 3>}, {pipeline_mode = #tpu.pipeline_mode<synchronous>, transform_indices = @transform_2, window_bounds = array<i64: 1, 3>}, {transform_indices = @transform_3, window_bounds = array<i64: 512, 3>}]} {
    %c0 = arith.constant 0 : index
    %c0_0 = arith.constant 0 : index
    %0 = vector.load %arg1[%c0, %c0_0] : memref<512x288xbf16, #tpu.memory_space<vmem>>, vector<512x288xbf16>
    %c0_1 = arith.constant 0 : index
    %c0_2 = arith.constant 0 : index
    %1 = vector.load %arg2[%c0_1, %c0_2] : memref<288x3xbf16, #tpu.memory_space<vmem>>, vector<288x3xbf16>
    %cst = arith.constant dense<0.000000e+00> : vector<512x3xf32>
    %2 = tpu.matmul %0, %1, %cst {dimension_numbers = #tpu.dot_dimension_numbers<[1], [0], [0], [1], [0, 0, 1, 1], [], []>} : vector<512x288xbf16>, vector<288x3xbf16>, vector<512x3xf32> -> vector<512x3xf32>
    %c0_3 = arith.constant 0 : index
    %c0_4 = arith.constant 0 : index
    %3 = vector.load %arg3[%c0_3, %c0_4] : memref<1x3xf32, #tpu.memory_space<vmem>>, vector<1x3xf32>
    %4 = vector.broadcast %3 : vector<1x3xf32> to vector<512x3xf32>
    %5 = arith.addf %2, %4 : vector<512x3xf32>
    %c0_5 = arith.constant 0 : index
    %c0_6 = arith.constant 0 : index
    %6 = vector.load %arg4[%c0_5, %c0_6] : memref<512x3xf32, #tpu.memory_space<vmem>>, vector<512x3xf32>
    tpu.vector_store %arg4[%c0_5, %c0_6], %5 {strides = array<i32>} : memref<512x3xf32, #tpu.memory_space<vmem>>, vector<512x3xf32>,
    return
  }
  func.func @transform_0(%arg0: i32) -> (i32, i32) {
    %c0_i32 = arith.constant 0 : i32
    %c0_i32_0 = arith.constant 0 : i32
    return %arg0, %c0_i32 : i32, i32
  }
  func.func @transform_1(%arg0: i32) -> (i32, i32) {
    %c0_i32 = arith.constant 0 : i32
    %c0_i32_0 = arith.constant 0 : i32
    %c0_i32_1 = arith.constant 0 : i32
    return %c0_i32, %c0_i32_0 : i32, i32
  }
  func.func @transform_2(%arg0: i32) -> (i32, i32) {
    %c0_i32 = arith.constant 0 : i32
    %c0_i32_0 = arith.constant 0 : i32
    %c0_i32_1 = arith.constant 0 : i32
    return %c0_i32, %c0_i32_0 : i32, i32
  }
  func.func @transform_3(%arg0: i32) -> (i32, i32) {
    %c0_i32 = arith.constant 0 : i32
    %c0_i32_0 = arith.constant 0 : i32
    return %arg0, %c0_i32 : i32, i32
  }
}

</mosaic_0001>

<llo_original>
// kernel: decoder_forward.5
$region0: #{decoder_forward.5}
  #allocation0 [shape = 'u32[]', space=smem, size = 0x4, offset = 0x4, fixed_abs, tag = 'smem constant byte address 0x4 - core index']
  #allocation1 [shape = 'u32[144,128]{1,0:T(1,128)}', space=vmem, size = 0x12000, scoped, tag = 'internal scratch']
  %s0 = inlined_call_operand.vmem [shape: bf16[2,16], index: 0, kind: input, shape index: {}]
  %s1 = inlined_call_operand.hbm [shape: bf16[16,4096], index: 1, kind: input, shape index: {}]
  %s2 = inlined_call_operand.hbm [shape: f32[1,4096], index: 2, kind: input, shape index: {}]
  %s3 = inlined_call_operand.vmem [shape: bf16[2,4096], index: 3, kind: output, shape index: {}]
  %s4 = sld [smem:[#allocation0]]
  $region30: #{decoder_forward.5} parent=0
    _
  %s6 = ssub.s32 1, %s4
  %s7 = scalar_select 0, %s6, %s4
  $region1: #{decoder_forward.5} parent=0
    #allocation2 [shape = 'u8[131072]{0}', space=vmem, size = 0x20000, scoped, tag = 'input window, operand 1, single buffered']
    #allocation3 [shape = 's32[1]{0}', space=sflag, size = 0x4, scoped, tag = 'scoped memory for decoder_forward.5']
    #allocation4 [shape = 'u8[16384]{0}', space=vmem, size = 0x4000, scoped, tag = 'input window, operand 2, single buffered']
    #allocation5 [shape = 's32[1]{0}', space=sflag, size = 0x4, scoped, tag = 'scoped memory for decoder_forward.5']
    %8 = vsyncpa [#allocation3], 0
    %9 = vsyncpa [#allocation5], 0
    // Predicated region
    $region2: #{decoder_forward.5} parent=1 // pred_check
      _
    $region3: #{decoder_forward.5} parent=1 // pred_check_branch
      %11 = sbr.rel (0) target = $region5
    $region4: #{decoder_forward.5} parent=1 // pred_region
      _
    $region5: #{decoder_forward.5} parent=1 // pred_fallthru
      _
    // Predicated region
    $region6: #{decoder_forward.5} parent=1 // pred_check
      _
    $region7: #{decoder_forward.5} parent=1 // pred_check_branch
      %13 = sbr.rel (0) target = $region9
    $region8: #{decoder_forward.5} parent=1 // pred_region
      %s15 = ssub.s32 4096, 4096
      %16 = vsyncadd [#allocation3], %s15
      %s17 = sshll.u32 [#allocation2], 4
      %s18 = int_to_ptr.vmem [resolvable:$true] %s17
      %23 = dma.hbm_to_vmem [thread:$0]  %s1, 4096, %s18, [#allocation3], 2048, 2048, 128
    $region9: #{decoder_forward.5} parent=1 // pred_fallthru
      _
    // Predicated region
    $region10: #{decoder_forward.5} parent=1 // pred_check
      _
    $region11: #{decoder_forward.5} parent=1 // pred_check_branch
      %25 = sbr.rel (0) target = $region13
    $region12: #{decoder_forward.5} parent=1 // pred_region
      %s27 = ssub.s32 512, 512
      %28 = vsyncadd [#allocation5], %s27
      %s30 = sshll.u32 [#allocation4], 4
      %s31 = int_to_ptr.vmem [resolvable:$true] %s30
      %33 = dma.hbm_to_vmem [thread:$0]  %s2, 512, %s31, [#allocation5]
    $region13: #{decoder_forward.5} parent=1 // pred_fallthru
      _
    // Predicated region
    $region14: #{decoder_forward.5} parent=1 // pred_check
      _
    $region15: #{decoder_forward.5} parent=1 // pred_check_branch
      %35 = sbr.rel (0) target = $region17
    $region16: #{decoder_forward.5} parent=1 // pred_region
      %36 = dma.done [#allocation3], 4096
    $region17: #{decoder_forward.5} parent=1 // pred_fallthru
      _
    // Predicated region
    $region18: #{decoder_forward.5} parent=1 // pred_check
      _
    $region19: #{decoder_forward.5} parent=1 // pred_check_branch
      %38 = sbr.rel (0) target = $region21
    $region20: #{decoder_forward.5} parent=1 // pred_region
      %39 = dma.done [#allocation5], 512
    $region21: #{decoder_forward.5} parent=1 // pred_fallthru
      _
    %v41 = vld [vmem:[%s0] sm:$0x1]
    %v42 = vld [vmem:[#allocation2] sm:$0xff]
    %v43 = vld [vmem:[#allocation2 + $0x8] sm:$0xff]
    %v44 = vld [vmem:[#allocation2 + $0x10] sm:$0xff]
    %v45 = vld [vmem:[#allocation2 + $0x18] sm:$0xff]
    %v46 = vld [vmem:[#allocation2 + $0x20] sm:$0xff]
    %v47 = vld [vmem:[#allocation2 + $0x28] sm:$0xff]
    %v48 = vld [vmem:[#allocation2 + $0x30] sm:$0xff]
    %v49 = vld [vmem:[#allocation2 + $0x38] sm:$0xff]
    %v50 = vld [vmem:[#allocation2 + $0x40] sm:$0xff]
    %v51 = vld [vmem:[#allocation2 + $0x48] sm:$0xff]
    %v52 = vld [vmem:[#allocation2 + $0x50] sm:$0xff]
    %v53 = vld [vmem:[#allocation2 + $0x58] sm:$0xff]
    %v54 = vld [vmem:[#allocation2 + $0x60] sm:$0xff]
    %v55 = vld [vmem:[#allocation2 + $0x68] sm:$0xff]
    %v56 = vld [vmem:[#allocation2 + $0x70] sm:$0xff]
    %v57 = vld [vmem:[#allocation2 + $0x78] sm:$0xff]
    %v58 = vld [vmem:[#allocation2 + $0x80] sm:$0xff]
    %v59 = vld [vmem:[#allocation2 + $0x88] sm:$0xff]
    %v60 = vld [vmem:[#allocation2 + $0x90] sm:$0xff]
    %v61 = vld [vmem:[#allocation2 + $0x98] sm:$0xff]
    %v62 = vld [vmem:[#allocation2 + $0xa0] sm:$0xff]
    %v63 = vld [vmem:[#allocation2 + $0xa8] sm:$0xff]
    %v64 = vld [vmem:[#allocation2 + $0xb0] sm:$0xff]
    %v65 = vld [vmem:[#allocation2 + $0xb8] sm:$0xff]
    %v66 = vld [vmem:[#allocation2 + $0xc0] sm:$0xff]
    %v67 = vld [vmem:[#allocation2 + $0xc8] sm:$0xff]
    %v68 = vld [vmem:[#allocation2 + $0xd0] sm:$0xff]
    %v69 = vld [vmem:[#allocation2 + $0xd8] sm:$0xff]
    %v70 = vld [vmem:[#allocation2 + $0xe0] sm:$0xff]
    %v71 = vld [vmem:[#allocation2 + $0xe8] sm:$0xff]
    %v72 = vld [vmem:[#allocation2 + $0xf0] sm:$0xff]
    %v73 = vld [vmem:[#allocation2 + $0xf8] sm:$0xff]
    %v74 = vld [vmem:[#allocation4] sm:$0xff]
    %v75 = vld [vmem:[#allocation4 + $0x8] sm:$0xff]
    %v76 = vld [vmem:[#allocation4 + $0x10] sm:$0xff]
    %v77 = vld [vmem:[#allocation4 + $0x18] sm:$0xff]
    %v82 = vlaneseq
    %v83 = vshrl.u32 %v82, 7
    %v84 = vsub.s32 0, %v83
    %v85 = vrot.slane %v74, %v84
    %v86 = vlaneseq
    %v87 = vshrl.u32 %v86, 7
    %v88 = vsub.s32 1, %v87
    %v89 = vrot.slane %v74, %v88
    %v90 = vlaneseq
    %v91 = vshrl.u32 %v90, 7
    %v92 = vsub.s32 2, %v91
    %v93 = vrot.slane %v74, %v92
    %v94 = vlaneseq
    %v95 = vshrl.u32 %v94, 7
    %v96 = vsub.s32 3, %v95
    %v97 = vrot.slane %v74, %v96
    %v98 = vlaneseq
    %v99 = vshrl.u32 %v98, 7
    %v100 = vsub.s32 4, %v99
    %v101 = vrot.slane %v74, %v100
    %v102 = vlaneseq
    %v103 = vshrl.u32 %v102, 7
    %v104 = vsub.s32 5, %v103
    %v105 = vrot.slane %v74, %v104
    %v106 = vlaneseq
    %v107 = vshrl.u32 %v106, 7
    %v108 = vsub.s32 6, %v107
    %v109 = vrot.slane %v74, %v108
    %v110 = vlaneseq
    %v111 = vshrl.u32 %v110, 7
    %v112 = vsub.s32 7, %v111
    %v113 = vrot.slane %v74, %v112
    %v114 = vlaneseq
    %v115 = vshrl.u32 %v114, 7
    %v116 = vsub.s32 0, %v115
    %v117 = vrot.slane %v75, %v116
    %v118 = vlaneseq
    %v119 = vshrl.u32 %v118, 7
    %v120 = vsub.s32 1, %v119
    %v121 = vrot.slane %v75, %v120
    %v122 = vlaneseq
    %v123 = vshrl.u32 %v122, 7
    %v124 = vsub.s32 2, %v123
    %v125 = vrot.slane %v75, %v124
    %v126 = vlaneseq
    %v127 = vshrl.u32 %v126, 7
    %v128 = vsub.s32 3, %v127
    %v129 = vrot.slane %v75, %v128
    %v130 = vlaneseq
    %v131 = vshrl.u32 %v130, 7
    %v132 = vsub.s32 4, %v131
    %v133 = vrot.slane %v75, %v132
    %v134 = vlaneseq
    %v135 = vshrl.u32 %v134, 7
    %v136 = vsub.s32 5, %v135
    %v137 = vrot.slane %v75, %v136
    %v138 = vlaneseq
    %v139 = vshrl.u32 %v138, 7
    %v140 = vsub.s32 6, %v139
    %v141 = vrot.slane %v75, %v140
    %v142 = vlaneseq
    %v143 = vshrl.u32 %v142, 7
    %v144 = vsub.s32 7, %v143
    %v145 = vrot.slane %v75, %v144
    %v146 = vlaneseq
    %v147 = vshrl.u32 %v146, 7
    %v148 = vsub.s32 0, %v147
    %v149 = vrot.slane %v76, %v148
    %v150 = vlaneseq
    %v151 = vshrl.u32 %v150, 7
    %v152 = vsub.s32 1, %v151
    %v153 = vrot.slane %v76, %v152
    %v154 = vlaneseq
    %v155 = vshrl.u32 %v154, 7
    %v156 = vsub.s32 2, %v155
    %v157 = vrot.slane %v76, %v156
    %v158 = vlaneseq
    %v159 = vshrl.u32 %v158, 7
    %v160 = vsub.s32 3, %v159
    %v161 = vrot.slane %v76, %v160
    %v162 = vlaneseq
    %v163 = vshrl.u32 %v162, 7
    %v164 = vsub.s32 4, %v163
    %v165 = vrot.slane %v76, %v164
    %v166 = vlaneseq
    %v167 = vshrl.u32 %v166, 7
    %v168 = vsub.s32 5, %v167
    %v169 = vrot.slane %v76, %v168
    %v170 = vlaneseq
    %v171 = vshrl.u32 %v170, 7
    %v172 = vsub.s32 6, %v171
    %v173 = vrot.slane %v76, %v172
    %v174 = vlaneseq
    %v175 = vshrl.u32 %v174, 7
    %v176 = vsub.s32 7, %v175
    %v177 = vrot.slane %v76, %v176
    %v178 = vlaneseq
    %v179 = vshrl.u32 %v178, 7
    %v180 = vsub.s32 0, %v179
    %v181 = vrot.slane %v77, %v180
    %v182 = vlaneseq
    %v183 = vshrl.u32 %v182, 7
    %v184 = vsub.s32 1, %v183
    %v185 = vrot.slane %v77, %v184
    %v186 = vlaneseq
    %v187 = vshrl.u32 %v186, 7
    %v188 = vsub.s32 2, %v187
    %v189 = vrot.slane %v77, %v188
    %v190 = vlaneseq
    %v191 = vshrl.u32 %v190, 7
    %v192 = vsub.s32 3, %v191
    %v193 = vrot.slane %v77, %v192
    %v194 = vlaneseq
    %v195 = vshrl.u32 %v194, 7
    %v196 = vsub.s32 4, %v195
    %v197 = vrot.slane %v77, %v196
    %v198 = vlaneseq
    %v199 = vshrl.u32 %v198, 7
    %v200 = vsub.s32 5, %v199
    %v201 = vrot.slane %v77, %v200
    %v202 = vlaneseq
    %v203 = vshrl.u32 %v202, 7
    %v204 = vsub.s32 6, %v203
    %v205 = vrot.slane %v77, %v204
    %v206 = vlaneseq
    %v207 = vshrl.u32 %v206, 7
    %v208 = vsub.s32 7, %v207
    %v209 = vrot.slane %v77, %v208
    %v274 = vunpack.c.l.b16 %v42
    %v275 = vunpack.c.h.b16 %v42
    %v276 = vunpack.c.l.b16 %v43
    %v277 = vunpack.c.h.b16 %v43
    %v278 = vunpack.c.l.b16 %v44
    %v279 = vunpack.c.h.b16 %v44
    %v280 = vunpack.c.l.b16 %v45
    %v281 = vunpack.c.h.b16 %v45
    %v282 = vunpack.c.l.b16 %v46
    %v283 = vunpack.c.h.b16 %v46
    %v284 = vunpack.c.l.b16 %v47
    %v285 = vunpack.c.h.b16 %v47
    %v286 = vunpack.c.l.b16 %v48
    %v287 = vunpack.c.h.b16 %v48
    %v288 = vunpack.c.l.b16 %v49
    %v289 = vunpack.c.h.b16 %v49
    %v290 = vunpack.c.l.b16 %v50
    %v291 = vunpack.c.h.b16 %v50
    %v292 = vunpack.c.l.b16 %v51
    %v293 = vunpack.c.h.b16 %v51
    %v294 = vunpack.c.l.b16 %v52
    %v295 = vunpack.c.h.b16 %v52
    %v296 = vunpack.c.l.b16 %v53
    %v297 = vunpack.c.h.b16 %v53
    %v298 = vunpack.c.l.b16 %v54
    %v299 = vunpack.c.h.b16 %v54
    %v300 = vunpack.c.l.b16 %v55
    %v301 = vunpack.c.h.b16 %v55
    %v302 = vunpack.c.l.b16 %v56
    %v303 = vunpack.c.h.b16 %v56
    %v304 = vunpack.c.l.b16 %v57
    %v305 = vunpack.c.h.b16 %v57
    %v306 = vunpack.c.l.b16 %v58
    %v307 = vunpack.c.h.b16 %v58
    %v308 = vunpack.c.l.b16 %v59
    %v309 = vunpack.c.h.b16 %v59
    %v310 = vunpack.c.l.b16 %v60
    %v311 = vunpack.c.h.b16 %v60
    %v312 = vunpack.c.l.b16 %v61
    %v313 = vunpack.c.h.b16 %v61
    %v314 = vunpack.c.l.b16 %v62
    %v315 = vunpack.c.h.b16 %v62
    %v316 = vunpack.c.l.b16 %v63
    %v317 = vunpack.c.h.b16 %v63
    %v318 = vunpack.c.l.b16 %v64
    %v319 = vunpack.c.h.b16 %v64
    %v320 = vunpack.c.l.b16 %v65
    %v321 = vunpack.c.h.b16 %v65
    %v322 = vunpack.c.l.b16 %v66
    %v323 = vunpack.c.h.b16 %v66
    %v324 = vunpack.c.l.b16 %v67
    %v325 = vunpack.c.h.b16 %v67
    %v326 = vunpack.c.l.b16 %v68
    %v327 = vunpack.c.h.b16 %v68
    %v328 = vunpack.c.l.b16 %v69
    %v329 = vunpack.c.h.b16 %v69
    %v330 = vunpack.c.l.b16 %v70
    %v331 = vunpack.c.h.b16 %v70
    %v332 = vunpack.c.l.b16 %v71
    %v333 = vunpack.c.h.b16 %v71
    %v334 = vunpack.c.l.b16 %v72
    %v335 = vunpack.c.h.b16 %v72
    %v336 = vunpack.c.l.b16 %v73
    %v337 = vunpack.c.h.b16 %v73
    %v338 = vpack.c.b16 %v306, %v274
    %v339 = vpack.c.b16 %v307, %v275
    %v340 = vpack.c.b16 %v308, %v276
    %v341 = vpack.c.b16 %v309, %v277
    %v342 = vpack.c.b16 %v310, %v278
    %v343 = vpack.c.b16 %v311, %v279
    %v344 = vpack.c.b16 %v312, %v280
    %v345 = vpack.c.b16 %v313, %v281
    %v346 = vpack.c.b16 %v314, %v282
    %v347 = vpack.c.b16 %v315, %v283
    %v348 = vpack.c.b16 %v316, %v284
    %v349 = vpack.c.b16 %v317, %v285
    %v350 = vpack.c.b16 %v318, %v286
    %v351 = vpack.c.b16 %v319, %v287
    %v352 = vpack.c.b16 %v320, %v288
    %v353 = vpack.c.b16 %v321, %v289
    %v354 = vpack.c.b16 %v322, %v290
    %v355 = vpack.c.b16 %v323, %v291
    %v356 = vpack.c.b16 %v324, %v292
    %v357 = vpack.c.b16 %v325, %v293
    %v358 = vpack.c.b16 %v326, %v294
    %v359 = vpack.c.b16 %v327, %v295
    %v360 = vpack.c.b16 %v328, %v296
    %v361 = vpack.c.b16 %v329, %v297
    %v362 = vpack.c.b16 %v330, %v298
    %v363 = vpack.c.b16 %v331, %v299
    %v364 = vpack.c.b16 %v332, %v300
    %v365 = vpack.c.b16 %v333, %v301
    %v366 = vpack.c.b16 %v334, %v302
    %v367 = vpack.c.b16 %v335, %v303
    %v368 = vpack.c.b16 %v336, %v304
    %v369 = vpack.c.b16 %v337, %v305
    %vm402 = vcmask 130048
    %v404 = vsel %vm402, %v41, 0
    %406 = vmatprep.subr.bf16.mxu0 0
    %407 = vmatpush1.bf16.msra.mxu0 0
    %408 = vmatprep.subr.bf16.mxu0 0
    %409 = vmatpush1.bf16.msra.mxu0 0
    %410 = vmatprep.subr.bf16.mxu0 0
    %411 = vmatpush1.bf16.msra.mxu0 0
    %412 = vmatprep.subr.bf16.mxu0 0
    %413 = vmatpush1.bf16.msra.mxu0 0
    %414 = vmatprep.subr.bf16.mxu0 0
    %415 = vmatpush1.bf16.msra.mxu0 0
    %416 = vmatprep.subr.bf16.mxu0 0
    %417 = vmatpush1.bf16.msra.mxu0 0
    %418 = vmatprep.subr.bf16.mxu0 0
    %419 = vmatpush1.bf16.msra.mxu0 0
    %420 = vmatprep.subr.bf16.mxu0 %v339
    %421 = vmatpush1.bf16.msra.mxu0 %v338
    %422 = vmatprep.subr.bf16.mxu0 0
    %423 = vmatpush2.bf16.msra.mxu0 0
    %424 = vmatprep.subr.bf16.mxu0 0
    %425 = vmatpush2.bf16.msra.mxu0 0
    %426 = vmatprep.subr.bf16.mxu0 0
    %427 = vmatpush2.bf16.msra.mxu0 0
    %428 = vmatprep.subr.bf16.mxu0 0
    %429 = vmatpush2.bf16.msra.mxu0 0
    %430 = vmatprep.subr.bf16.mxu0 0
    %431 = vmatpush2.bf16.msra.mxu0 0
    %432 = vmatprep.subr.bf16.mxu0 0
    %433 = vmatpush2.bf16.msra.mxu0 0
    %434 = vmatprep.subr.bf16.mxu0 0
    %435 = vmatpush2.bf16.msra.mxu0 0
    %436 = vmatprep.subr.bf16.mxu0 0
    %437 = vmatpush2.bf16.msra.mxu0 0
    %438 = vmatprep.mubr.bf16.mxu0 0
    %439 = vmatmul.mubr.bf16.gmra.mxu0 %v404
    %v440 = vpop.f32.mrf.mxu0
    %v441 = vadd.f32 %v85, %v440
    %v442 = vpop.f32.mrf.mxu0
    %v443 = vadd.f32 %v89, %v442
    %v444 = vpop.f32.mrf.mxu0
    %v445 = vpop.f32.mrf.mxu0
    %446 = vdwg.mxu0
    %447 = vmatprep.subr.bf16.mxu0 0
    %448 = vmatpush1.bf16.msra.mxu0 0
    %449 = vmatprep.subr.bf16.mxu0 0
    %450 = vmatpush1.bf16.msra.mxu0 0
    %451 = vmatprep.subr.bf16.mxu0 0
    %452 = vmatpush1.bf16.msra.mxu0 0
    %453 = vmatprep.subr.bf16.mxu0 0
    %454 = vmatpush1.bf16.msra.mxu0 0
    %455 = vmatprep.subr.bf16.mxu0 0
    %456 = vmatpush1.bf16.msra.mxu0 0
    %457 = vmatprep.subr.bf16.mxu0 0
    %458 = vmatpush1.bf16.msra.mxu0 0
    %459 = vmatprep.subr.bf16.mxu0 0
    %460 = vmatpush1.bf16.msra.mxu0 0
    %461 = vmatprep.subr.bf16.mxu0 %v341
    %462 = vmatpush1.bf16.msra.mxu0 %v340
    %463 = vmatprep.subr.bf16.mxu0 0
    %464 = vmatpush2.bf16.msra.mxu0 0
    %465 = vmatprep.subr.bf16.mxu0 0
    %466 = vmatpush2.bf16.msra.mxu0 0
    %467 = vmatprep.subr.bf16.mxu0 0
    %468 = vmatpush2.bf16.msra.mxu0 0
    %469 = vmatprep.subr.bf16.mxu0 0
    %470 = vmatpush2.bf16.msra.mxu0 0
    %471 = vmatprep.subr.bf16.mxu0 0
    %472 = vmatpush2.bf16.msra.mxu0 0
    %473 = vmatprep.subr.bf16.mxu0 0
    %474 = vmatpush2.bf16.msra.mxu0 0
    %475 = vmatprep.subr.bf16.mxu0 0
    %476 = vmatpush2.bf16.msra.mxu0 0
    %477 = vmatprep.subr.bf16.mxu0 0
    %478 = vmatpush2.bf16.msra.mxu0 0
    %479 = vmatprep.mubr.bf16.mxu0 0
    %480 = vmatmul.mubr.bf16.gmra.mxu0 %v404
    %v481 = vpop.f32.mrf.mxu0
    %v482 = vadd.f32 %v93, %v481
    %v483 = vpop.f32.mrf.mxu0
    %v484 = vadd.f32 %v97, %v483
    %v485 = vpop.f32.mrf.mxu0
    %v486 = vpop.f32.mrf.mxu0
    %487 = vdwg.mxu0
    %488 = vmatprep.subr.bf16.mxu0 0
    %489 = vmatpush1.bf16.msra.mxu0 0
    %490 = vmatprep.subr.bf16.mxu0 0
    %491 = vmatpush1.bf16.msra.mxu0 0
    %492 = vmatprep.subr.bf16.mxu0 0
    %493 = vmatpush1.bf16.msra.mxu0 0
    %494 = vmatprep.subr.bf16.mxu0 0
    %495 = vmatpush1.bf16.msra.mxu0 0
    %496 = vmatprep.subr.bf16.mxu0 0
    %497 = vmatpush1.bf16.msra.mxu0 0
    %498 = vmatprep.subr.bf16.mxu0 0
    %499 = vmatpush1.bf16.msra.mxu0 0
    %500 = vmatprep.subr.bf16.mxu0 0
    %501 = vmatpush1.bf16.msra.mxu0 0
    %502 = vmatprep.subr.bf16.mxu0 %v343
    %503 = vmatpush1.bf16.msra.mxu0 %v342
    %504 = vmatprep.subr.bf16.mxu0 0
    %505 = vmatpush2.bf16.msra.mxu0 0
    %506 = vmatprep.subr.bf16.mxu0 0
    %507 = vmatpush2.bf16.msra.mxu0 0
    %508 = vmatprep.subr.bf16.mxu0 0
    %509 = vmatpush2.bf16.msra.mxu0 0
    %510 = vmatprep.subr.bf16.mxu0 0
    %511 = vmatpush2.bf16.msra.mxu0 0
    %512 = vmatprep.subr.bf16.mxu0 0
    %513 = vmatpush2.bf16.msra.mxu0 0
    %514 = vmatprep.subr.bf16.mxu0 0
    %515 = vmatpush2.bf16.msra.mxu0 0
    %516 = vmatprep.subr.bf16.mxu0 0
    %517 = vmatpush2.bf16.msra.mxu0 0
    %518 = vmatprep.subr.bf16.mxu0 0
    %519 = vmatpush2.bf16.msra.mxu0 0
    %520 = vmatprep.mubr.bf16.mxu0 0
    %521 = vmatmul.mubr.bf16.gmra.mxu0 %v404
    %v522 = vpop.f32.mrf.mxu0
    %v523 = vadd.f32 %v101, %v522
    %v524 = vpop.f32.mrf.mxu0
    %v525 = vadd.f32 %v105, %v524
    %v526 = vpop.f32.mrf.mxu0
    %v527 = vpop.f32.mrf.mxu0
    %528 = vdwg.mxu0
    %529 = vmatprep.subr.bf16.mxu0 0
    %530 = vmatpush1.bf16.msra.mxu0 0
    %531 = vmatprep.subr.bf16.mxu0 0
    %532 = vmatpush1.bf16.msra.mxu0 0
    %533 = vmatprep.subr.bf16.mxu0 0
    %534 = vmatpush1.bf16.msra.mxu0 0
    %535 = vmatprep.subr.bf16.mxu0 0
    %536 = vmatpush1.bf16.msra.mxu0 0
    %537 = vmatprep.subr.bf16.mxu0 0
    %538 = vmatpush1.bf16.msra.mxu0 0
    %539 = vmatprep.subr.bf16.mxu0 0
    %540 = vmatpush1.bf16.msra.mxu0 0
    %541 = vmatprep.subr.bf16.mxu0 0
    %542 = vmatpush1.bf16.msra.mxu0 0
    %543 = vmatprep.subr.bf16.mxu0 %v345
    %544 = vmatpush1.bf16.msra.mxu0 %v344
    %545 = vmatprep.subr.bf16.mxu0 0
    %546 = vmatpush2.bf16.msra.mxu0 0
    %547 = vmatprep.subr.bf16.mxu0 0
    %548 = vmatpush2.bf16.msra.mxu0 0
    %549 = vmatprep.subr.bf16.mxu0 0
    %550 = vmatpush2.bf16.msra.mxu0 0
    %551 = vmatprep.subr.bf16.mxu0 0
    %552 = vmatpush2.bf16.msra.mxu0 0
    %553 = vmatprep.subr.bf16.mxu0 0
    %554 = vmatpush2.bf16.msra.mxu0 0
    %555 = vmatprep.subr.bf16.mxu0 0
    %556 = vmatpush2.bf16.msra.mxu0 0
    %557 = vmatprep.subr.bf16.mxu0 0
    %558 = vmatpush2.bf16.msra.mxu0 0
    %559 = vmatprep.subr.bf16.mxu0 0
    %560 = vmatpush2.bf16.msra.mxu0 0
    %561 = vmatprep.mubr.bf16.mxu0 0
    %562 = vmatmul.mubr.bf16.gmra.mxu0 %v404
    %v563 = vpop.f32.mrf.mxu0
    %v564 = vadd.f32 %v109, %v563
    %v565 = vpop.f32.mrf.mxu0
    %v566 = vadd.f32 %v113, %v565
    %v567 = vpop.f32.mrf.mxu0
    %v568 = vpop.f32.mrf.mxu0
    %569 = vdwg.mxu0
    %570 = vmatprep.subr.bf16.mxu0 0
    %571 = vmatpush1.bf16.msra.mxu0 0
    %572 = vmatprep.subr.bf16.mxu0 0
    %573 = vmatpush1.bf16.msra.mxu0 0
    %574 = vmatprep.subr.bf16.mxu0 0
    %575 = vmatpush1.bf16.msra.mxu0 0
    %576 = vmatprep.subr.bf16.mxu0 0
    %577 = vmatpush1.bf16.msra.mxu0 0
    %578 = vmatprep.subr.bf16.mxu0 0
    %579 = vmatpush1.bf16.msra.mxu0 0
    %580 = vmatprep.subr.bf16.mxu0 0
    %581 = vmatpush1.bf16.msra.mxu0 0
    %582 = vmatprep.subr.bf16.mxu0 0
    %583 = vmatpush1.bf16.msra.mxu0 0
    %584 = vmatprep.subr.bf16.mxu0 %v347
    %585 = vmatpush1.bf16.msra.mxu0 %v346
    %586 = vmatprep.subr.bf16.mxu0 0
    %587 = vmatpush2.bf16.msra.mxu0 0
    %588 = vmatprep.subr.bf16.mxu0 0
    %589 = vmatpush2.bf16.msra.mxu0 0
    %590 = vmatprep.subr.bf16.mxu0 0
    %591 = vmatpush2.bf16.msra.mxu0 0
    %592 = vmatprep.subr.bf16.mxu0 0
    %593 = vmatpush2.bf16.msra.mxu0 0
    %594 = vmatprep.subr.bf16.mxu0 0
    %595 = vmatpush2.bf16.msra.mxu0 0
    %596 = vmatprep.subr.bf16.mxu0 0
    %597 = vmatpush2.bf16.msra.mxu0 0
    %598 = vmatprep.subr.bf16.mxu0 0
    %599 = vmatpush2.bf16.msra.mxu0 0
    %600 = vmatprep.subr.bf16.mxu0 0
    %601 = vmatpush2.bf16.msra.mxu0 0
    %602 = vmatprep.mubr.bf16.mxu0 0
    %603 = vmatmul.mubr.bf16.gmra.mxu0 %v404
    %v604 = vpop.f32.mrf.mxu0
    %v605 = vadd.f32 %v117, %v604
    %v606 = vpop.f32.mrf.mxu0
    %v607 = vadd.f32 %v121, %v606
    %v608 = vpop.f32.mrf.mxu0
    %v609 = vpop.f32.mrf.mxu0
    %610 = vdwg.mxu0
    %611 = vmatprep.subr.bf16.mxu0 0
    %612 = vmatpush1.bf16.msra.mxu0 0
    %613 = vmatprep.subr.bf16.mxu0 0
    %614 = vmatpush1.bf16.msra.mxu0 0
    %615 = vmatprep.subr.bf16.mxu0 0
    %616 = vmatpush1.bf16.msra.mxu0 0
    %617 = vmatprep.subr.bf16.mxu0 0
    %618 = vmatpush1.bf16.msra.mxu0 0
    %619 = vmatprep.subr.bf16.mxu0 0
    %620 = vmatpush1.bf16.msra.mxu0 0
    %621 = vmatprep.subr.bf16.mxu0 0
    %622 = vmatpush1.bf16.msra.mxu0 0
    %623 = vmatprep.subr.bf16.mxu0 0
    %624 = vmatpush1.bf16.msra.mxu0 0
    %625 = vmatprep.subr.bf16.mxu0 %v349
    %626 = vmatpush1.bf16.msra.mxu0 %v348
    %627 = vmatprep.subr.bf16.mxu0 0
    %628 = vmatpush2.bf16.msra.mxu0 0
    %629 = vmatprep.subr.bf16.mxu0 0
    %630 = vmatpush2.bf16.msra.mxu0 0
    %631 = vmatprep.subr.bf16.mxu0 0
    %632 = vmatpush2.bf16.msra.mxu0 0
    %633 = vmatprep.subr.bf16.mxu0 0
    %634 = vmatpush2.bf16.msra.mxu0 0
    %635 = vmatprep.subr.bf16.mxu0 0
    %636 = vmatpush2.bf16.msra.mxu0 0
    %637 = vmatprep.subr.bf16.mxu0 0
    %638 = vmatpush2.bf16.msra.mxu0 0
    %639 = vmatprep.subr.bf16.mxu0 0
    %640 = vmatpush2.bf16.msra.mxu0 0
    %641 = vmatprep.subr.bf16.mxu0 0
    %642 = vmatpush2.bf16.msra.mxu0 0
    %643 = vmatprep.mubr.bf16.mxu0 0
    %644 = vmatmul.mubr.bf16.gmra.mxu0 %v404
    %v645 = vpop.f32.mrf.mxu0
    %v646 = vadd.f32 %v125, %v645
    %v647 = vpop.f32.mrf.mxu0
    %v648 = vadd.f32 %v129, %v647
    %v649 = vpop.f32.mrf.mxu0
    %v650 = vpop.f32.mrf.mxu0
    %651 = vdwg.mxu0
    %652 = vmatprep.subr.bf16.mxu0 0
    %653 = vmatpush1.bf16.msra.mxu0 0
    %654 = vmatprep.subr.bf16.mxu0 0
    %655 = vmatpush1.bf16.msra.mxu0 0
    %656 = vmatprep.subr.bf16.mxu0 0
    %657 = vmatpush1.bf16.msra.mxu0 0
    %658 = vmatprep.subr.bf16.mxu0 0
    %659 = vmatpush1.bf16.msra.mxu0 0
    %660 = vmatprep.subr.bf16.mxu0 0
    %661 = vmatpush1.bf16.msra.mxu0 0
    %662 = vmatprep.subr.bf16.mxu0 0
    %663 = vmatpush1.bf16.msra.mxu0 0
    %664 = vmatprep.subr.bf16.mxu0 0
    %665 = vmatpush1.bf16.msra.mxu0 0
    %666 = vmatprep.subr.bf16.mxu0 %v351
    %667 = vmatpush1.bf16.msra.mxu0 %v350
    %668 = vmatprep.subr.bf16.mxu0 0
    %669 = vmatpush2.bf16.msra.mxu0 0
    %670 = vmatprep.subr.bf16.mxu0 0
    %671 = vmatpush2.bf16.msra.mxu0 0
    %672 = vmatprep.subr.bf16.mxu0 0
    %673 = vmatpush2.bf16.msra.mxu0 0
    %674 = vmatprep.subr.bf16.mxu0 0
    %675 = vmatpush2.bf16.msra.mxu0 0
    %676 = vmatprep.subr.bf16.mxu0 0
    %677 = vmatpush2.bf16.msra.mxu0 0
    %678 = vmatprep.subr.bf16.mxu0 0
    %679 = vmatpush2.bf16.msra.mxu0 0
    %680 = vmatprep.subr.bf16.mxu0 0
    %681 = vmatpush2.bf16.msra.mxu0 0
    %682 = vmatprep.subr.bf16.mxu0 0
    %683 = vmatpush2.bf16.msra.mxu0 0
    %684 = vmatprep.mubr.bf16.mxu0 0
    %685 = vmatmul.mubr.bf16.gmra.mxu0 %v404
    %v686 = vpop.f32.mrf.mxu0
    %v687 = vadd.f32 %v133, %v686
    %v688 = vpop.f32.mrf.mxu0
    %v689 = vadd.f32 %v137, %v688
    %v690 = vpop.f32.mrf.mxu0
    %v691 = vpop.f32.mrf.mxu0
    %692 = vdwg.mxu0
    %693 = vmatprep.subr.bf16.mxu0 0
    %694 = vmatpush1.bf16.msra.mxu0 0
    %695 = vmatprep.subr.bf16.mxu0 0
    %696 = vmatpush1.bf16.msra.mxu0 0
    %697 = vmatprep.subr.bf16.mxu0 0
    %698 = vmatpush1.bf16.msra.mxu0 0
    %699 = vmatprep.subr.bf16.mxu0 0
    %700 = vmatpush1.bf16.msra.mxu0 0
    %701 = vmatprep.subr.bf16.mxu0 0
    %702 = vmatpush1.bf16.msra.mxu0 0
    %703 = vmatprep.subr.bf16.mxu0 0
    %704 = vmatpush1.bf16.msra.mxu0 0
    %705 = vmatprep.subr.bf16.mxu0 0
    %706 = vmatpush1.bf16.msra.mxu0 0
    %707 = vmatprep.subr.bf16.mxu0 %v353
    %708 = vmatpush1.bf16.msra.mxu0 %v352
    %709 = vmatprep.subr.bf16.mxu0 0
    %710 = vmatpush2.bf16.msra.mxu0 0
    %711 = vmatprep.subr.bf16.mxu0 0
    %712 = vmatpush2.bf16.msra.mxu0 0
    %713 = vmatprep.subr.bf16.mxu0 0
    %714 = vmatpush2.bf16.msra.mxu0 0
    %715 = vmatprep.subr.bf16.mxu0 0
    %716 = vmatpush2.bf16.msra.mxu0 0
    %717 = vmatprep.subr.bf16.mxu0 0
    %718 = vmatpush2.bf16.msra.mxu0 0
    %719 = vmatprep.subr.bf16.mxu0 0
    %720 = vmatpush2.bf16.msra.mxu0 0
    %721 = vmatprep.subr.bf16.mxu0 0
    %722 = vmatpush2.bf16.msra.mxu0 0
    %723 = vmatprep.subr.bf16.mxu0 0
    %724 = vmatpush2.bf16.msra.mxu0 0
    %725 = vmatprep.mubr.bf16.mxu0 0
    %726 = vmatmul.mubr.bf16.gmra.mxu0 %v404
    %v727 = vpop.f32.mrf.mxu0
    %v728 = vadd.f32 %v141, %v727
    %v729 = vpop.f32.mrf.mxu0
    %v730 = vadd.f32 %v145, %v729
    %v731 = vpop.f32.mrf.mxu0
    %v732 = vpop.f32.mrf.mxu0
    %733 = vdwg.mxu0
    %734 = vmatprep.subr.bf16.mxu0 0
    %735 = vmatpush1.bf16.msra.mxu0 0
    %736 = vmatprep.subr.bf16.mxu0 0
    %737 = vmatpush1.bf16.msra.mxu0 0
    %738 = vmatprep.subr.bf16.mxu0 0
    %739 = vmatpush1.bf16.msra.mxu0 0
    %740 = vmatprep.subr.bf16.mxu0 0
    %741 = vmatpush1.bf16.msra.mxu0 0
    %742 = vmatprep.subr.bf16.mxu0 0
    %743 = vmatpush1.bf16.msra.mxu0 0
    %744 = vmatprep.subr.bf16.mxu0 0
    %745 = vmatpush1.bf16.msra.mxu0 0
    %746 = vmatprep.subr.bf16.mxu0 0
    %747 = vmatpush1.bf16.msra.mxu0 0
    %748 = vmatprep.subr.bf16.mxu0 %v355
    %749 = vmatpush1.bf16.msra.mxu0 %v354
    %750 = vmatprep.subr.bf16.mxu0 0
    %751 = vmatpush2.bf16.msra.mxu0 0
    %752 = vmatprep.subr.bf16.mxu0 0
    %753 = vmatpush2.bf16.msra.mxu0 0
    %754 = vmatprep.subr.bf16.mxu0 0
    %755 = vmatpush2.bf16.msra.mxu0 0
    %756 = vmatprep.subr.bf16.mxu0 0
    %757 = vmatpush2.bf16.msra.mxu0 0
    %758 = vmatprep.subr.bf16.mxu0 0
    %759 = vmatpush2.bf16.msra.mxu0 0
    %760 = vmatprep.subr.bf16.mxu0 0
    %761 = vmatpush2.bf16.msra.mxu0 0
    %762 = vmatprep.subr.bf16.mxu0 0
    %763 = vmatpush2.bf16.msra.mxu0 0
    %764 = vmatprep.subr.bf16.mxu0 0
    %765 = vmatpush2.bf16.msra.mxu0 0
    %766 = vmatprep.mubr.bf16.mxu0 0
    %767 = vmatmul.mubr.bf16.gmra.mxu0 %v404
    %v768 = vpop.f32.mrf.mxu0
    %v769 = vadd.f32 %v149, %v768
    %v770 = vpop.f32.mrf.mxu0
    %v771 = vadd.f32 %v153, %v770
    %v772 = vpop.f32.mrf.mxu0
    %v773 = vpop.f32.mrf.mxu0
    %774 = vdwg.mxu0
    %775 = vmatprep.subr.bf16.mxu0 0
    %776 = vmatpush1.bf16.msra.mxu0 0
    %777 = vmatprep.subr.bf16.mxu0 0
    %778 = vmatpush1.bf16.msra.mxu0 0
    %779 = vmatprep.subr.bf16.mxu0 0
    %780 = vmatpush1.bf16.msra.mxu0 0
    %781 = vmatprep.subr.bf16.mxu0 0
    %782 = vmatpush1.bf16.msra.mxu0 0
    %783 = vmatprep.subr.bf16.mxu0 0
    %784 = vmatpush1.bf16.msra.mxu0 0
    %785 = vmatprep.subr.bf16.mxu0 0
    %786 = vmatpush1.bf16.msra.mxu0 0
    %787 = vmatprep.subr.bf16.mxu0 0
    %788 = vmatpush1.bf16.msra.mxu0 0
    %789 = vmatprep.subr.bf16.mxu0 %v357
    %790 = vmatpush1.bf16.msra.mxu0 %v356
    %791 = vmatprep.subr.bf16.mxu0 0
    %792 = vmatpush2.bf16.msra.mxu0 0
    %793 = vmatprep.subr.bf16.mxu0 0
    %794 = vmatpush2.bf16.msra.mxu0 0
    %795 = vmatprep.subr.bf16.mxu0 0
    %796 = vmatpush2.bf16.msra.mxu0 0
    %797 = vmatprep.subr.bf16.mxu0 0
    %798 = vmatpush2.bf16.msra.mxu0 0
    %799 = vmatprep.subr.bf16.mxu0 0
    %800 = vmatpush2.bf16.msra.mxu0 0
    %801 = vmatprep.subr.bf16.mxu0 0
    %802 = vmatpush2.bf16.msra.mxu0 0
    %803 = vmatprep.subr.bf16.mxu0 0
    %804 = vmatpush2.bf16.msra.mxu0 0
    %805 = vmatprep.subr.bf16.mxu0 0
    %806 = vmatpush2.bf16.msra.mxu0 0
    %807 = vmatprep.mubr.bf16.mxu0 0
    %808 = vmatmul.mubr.bf16.gmra.mxu0 %v404
    %v809 = vpop.f32.mrf.mxu0
    %v810 = vadd.f32 %v157, %v809
    %v811 = vpop.f32.mrf.mxu0
    %v812 = vadd.f32 %v161, %v811
    %v813 = vpop.f32.mrf.mxu0
    %v814 = vpop.f32.mrf.mxu0
    %815 = vdwg.mxu0
    %816 = vmatprep.subr.bf16.mxu0 0
    %817 = vmatpush1.bf16.msra.mxu0 0
    %818 = vmatprep.subr.bf16.mxu0 0
    %819 = vmatpush1.bf16.msra.mxu0 0
    %820 = vmatprep.subr.bf16.mxu0 0
    %821 = vmatpush1.bf16.msra.mxu0 0
    %822 = vmatprep.subr.bf16.mxu0 0
    %823 = vmatpush1.bf16.msra.mxu0 0
    %824 = vmatprep.subr.bf16.mxu0 0
    %825 = vmatpush1.bf16.msra.mxu0 0
    %826 = vmatprep.subr.bf16.mxu0 0
    %827 = vmatpush1.bf16.msra.mxu0 0
    %828 = vmatprep.subr.bf16.mxu0 0
    %829 = vmatpush1.bf16.msra.mxu0 0
    %830 = vmatprep.subr.bf16.mxu0 %v359
    %831 = vmatpush1.bf16.msra.mxu0 %v358
    %832 = vmatprep.subr.bf16.mxu0 0
    %833 = vmatpush2.bf16.msra.mxu0 0
    %834 = vmatprep.subr.bf16.mxu0 0
    %835 = vmatpush2.bf16.msra.mxu0 0
    %836 = vmatprep.subr.bf16.mxu0 0
    %837 = vmatpush2.bf16.msra.mxu0 0
    %838 = vmatprep.subr.bf16.mxu0 0
    %839 = vmatpush2.bf16.msra.mxu0 0
    %840 = vmatprep.subr.bf16.mxu0 0
    %841 = vmatpush2.bf16.msra.mxu0 0
    %842 = vmatprep.subr.bf16.mxu0 0
    %843 = vmatpush2.bf16.msra.mxu0 0
    %844 = vmatprep.subr.bf16.mxu0 0
    %845 = vmatpush2.bf16.msra.mxu0 0
    %846 = vmatprep.subr.bf16.mxu0 0
    %847 = vmatpush2.bf16.msra.mxu0 0
    %848 = vmatprep.mubr.bf16.mxu0 0
    %849 = vmatmul.mubr.bf16.gmra.mxu0 %v404
    %v850 = vpop.f32.mrf.mxu0
    %v851 = vadd.f32 %v165, %v850
    %v852 = vpop.f32.mrf.mxu0
    %v853 = vadd.f32 %v169, %v852
    %v854 = vpop.f32.mrf.mxu0
    %v855 = vpop.f32.mrf.mxu0
    %856 = vdwg.mxu0
    %857 = vmatprep.subr.bf16.mxu0 0
    %858 = vmatpush1.bf16.msra.mxu0 0
    %859 = vmatprep.subr.bf16.mxu0 0
    %860 = vmatpush1.bf16.msra.mxu0 0
    %861 = vmatprep.subr.bf16.mxu0 0
    %862 = vmatpush1.bf16.msra.mxu0 0
    %863 = vmatprep.subr.bf16.mxu0 0
    %864 = vmatpush1.bf16.msra.mxu0 0
    %865 = vmatprep.subr.bf16.mxu0 0
    %866 = vmatpush1.bf16.msra.mxu0 0
    %867 = vmatprep.subr.bf16.mxu0 0
    %868 = vmatpush1.bf16.msra.mxu0 0
    %869 = vmatprep.subr.bf16.mxu0 0
    %870 = vmatpush1.bf16.msra.mxu0 0
    %871 = vmatprep.subr.bf16.mxu0 %v361
    %872 = vmatpush1.bf16.msra.mxu0 %v360
    %873 = vmatprep.subr.bf16.mxu0 0
    %874 = vmatpush2.bf16.msra.mxu0 0
    %875 = vmatprep.subr.bf16.mxu0 0
    %876 = vmatpush2.bf16.msra.mxu0 0
    %877 = vmatprep.subr.bf16.mxu0 0
    %878 = vmatpush2.bf16.msra.mxu0 0
    %879 = vmatprep.subr.bf16.mxu0 0
    %880 = vmatpush2.bf16.msra.mxu0 0
    %881 = vmatprep.subr.bf16.mxu0 0
    %882 = vmatpush2.bf16.msra.mxu0 0
    %883 = vmatprep.subr.bf16.mxu0 0
    %884 = vmatpush2.bf16.msra.mxu0 0
    %885 = vmatprep.subr.bf16.mxu0 0
    %886 = vmatpush2.bf16.msra.mxu0 0
    %887 = vmatprep.subr.bf16.mxu0 0
    %888 = vmatpush2.bf16.msra.mxu0 0
    %889 = vmatprep.mubr.bf16.mxu0 0
    %890 = vmatmul.mubr.bf16.gmra.mxu0 %v404
    %v891 = vpop.f32.mrf.mxu0
    %v892 = vadd.f32 %v173, %v891
    %v893 = vpop.f32.mrf.mxu0
    %v894 = vadd.f32 %v177, %v893
    %v895 = vpop.f32.mrf.mxu0
    %v896 = vpop.f32.mrf.mxu0
    %897 = vdwg.mxu0
    %898 = vmatprep.subr.bf16.mxu0 0
    %899 = vmatpush1.bf16.msra.mxu0 0
    %900 = vmatprep.subr.bf16.mxu0 0
    %901 = vmatpush1.bf16.msra.mxu0 0
    %902 = vmatprep.subr.bf16.mxu0 0
    %903 = vmatpush1.bf16.msra.mxu0 0
    %904 = vmatprep.subr.bf16.mxu0 0
    %905 = vmatpush1.bf16.msra.mxu0 0
    %906 = vmatprep.subr.bf16.mxu0 0
    %907 = vmatpush1.bf16.msra.mxu0 0
    %908 = vmatprep.subr.bf16.mxu0 0
    %909 = vmatpush1.bf16.msra.mxu0 0
    %910 = vmatprep.subr.bf16.mxu0 0
    %911 = vmatpush1.bf16.msra.mxu0 0
    %912 = vmatprep.subr.bf16.mxu0 %v363
    %913 = vmatpush1.bf16.msra.mxu0 %v362
    %914 = vmatprep.subr.bf16.mxu0 0
    %915 = vmatpush2.bf16.msra.mxu0 0
    %916 = vmatprep.subr.bf16.mxu0 0
    %917 = vmatpush2.bf16.msra.mxu0 0
    %918 = vmatprep.subr.bf16.mxu0 0
    %919 = vmatpush2.bf16.msra.mxu0 0
    %920 = vmatprep.subr.bf16.mxu0 0
    %921 = vmatpush2.bf16.msra.mxu0 0
    %922 = vmatprep.subr.bf16.mxu0 0
    %923 = vmatpush2.bf16.msra.mxu0 0
    %924 = vmatprep.subr.bf16.mxu0 0
    %925 = vmatpush2.bf16.msra.mxu0 0
    %926 = vmatprep.subr.bf16.mxu0 0
    %927 = vmatpush2.bf16.msra.mxu0 0
    %928 = vmatprep.subr.bf16.mxu0 0
    %929 = vmatpush2.bf16.msra.mxu0 0
    %930 = vmatprep.mubr.bf16.mxu0 0
    %931 = vmatmul.mubr.bf16.gmra.mxu0 %v404
    %v932 = vpop.f32.mrf.mxu0
    %v933 = vadd.f32 %v181, %v932
    %v934 = vpop.f32.mrf.mxu0
    %v935 = vadd.f32 %v185, %v934
    %v936 = vpop.f32.mrf.mxu0
    %v937 = vpop.f32.mrf.mxu0
    %938 = vdwg.mxu0
    %939 = vmatprep.subr.bf16.mxu0 0
    %940 = vmatpush1.bf16.msra.mxu0 0
    %941 = vmatprep.subr.bf16.mxu0 0
    %942 = vmatpush1.bf16.msra.mxu0 0
    %943 = vmatprep.subr.bf16.mxu0 0
    %944 = vmatpush1.bf16.msra.mxu0 0
    %945 = vmatprep.subr.bf16.mxu0 0
    %946 = vmatpush1.bf16.msra.mxu0 0
    %947 = vmatprep.subr.bf16.mxu0 0
    %948 = vmatpush1.bf16.msra.mxu0 0
    %949 = vmatprep.subr.bf16.mxu0 0
    %950 = vmatpush1.bf16.msra.mxu0 0
    %951 = vmatprep.subr.bf16.mxu0 0
    %952 = vmatpush1.bf16.msra.mxu0 0
    %953 = vmatprep.subr.bf16.mxu0 %v365
    %954 = vmatpush1.bf16.msra.mxu0 %v364
    %955 = vmatprep.subr.bf16.mxu0 0
    %956 = vmatpush2.bf16.msra.mxu0 0
    %957 = vmatprep.subr.bf16.mxu0 0
    %958 = vmatpush2.bf16.msra.mxu0 0
    %959 = vmatprep.subr.bf16.mxu0 0
    %960 = vmatpush2.bf16.msra.mxu0 0
    %961 = vmatprep.subr.bf16.mxu0 0
    %962 = vmatpush2.bf16.msra.mxu0 0
    %963 = vmatprep.subr.bf16.mxu0 0
    %964 = vmatpush2.bf16.msra.mxu0 0
    %965 = vmatprep.subr.bf16.mxu0 0
    %966 = vmatpush2.bf16.msra.mxu0 0
    %967 = vmatprep.subr.bf16.mxu0 0
    %968 = vmatpush2.bf16.msra.mxu0 0
    %969 = vmatprep.subr.bf16.mxu0 0
    %970 = vmatpush2.bf16.msra.mxu0 0
    %971 = vmatprep.mubr.bf16.mxu0 0
    %972 = vmatmul.mubr.bf16.gmra.mxu0 %v404
    %v973 = vpop.f32.mrf.mxu0
    %v974 = vadd.f32 %v189, %v973
    %v975 = vpop.f32.mrf.mxu0
    %v976 = vadd.f32 %v193, %v975
    %v977 = vpop.f32.mrf.mxu0
    %v978 = vpop.f32.mrf.mxu0
    %979 = vdwg.mxu0
    %980 = vmatprep.subr.bf16.mxu0 0
    %981 = vmatpush1.bf16.msra.mxu0 0
    %982 = vmatprep.subr.bf16.mxu0 0
    %983 = vmatpush1.bf16.msra.mxu0 0
    %984 = vmatprep.subr.bf16.mxu0 0
    %985 = vmatpush1.bf16.msra.mxu0 0
    %986 = vmatprep.subr.bf16.mxu0 0
    %987 = vmatpush1.bf16.msra.mxu0 0
    %988 = vmatprep.subr.bf16.mxu0 0
    %989 = vmatpush1.bf16.msra.mxu0 0
    %990 = vmatprep.subr.bf16.mxu0 0
    %991 = vmatpush1.bf16.msra.mxu0 0
    %992 = vmatprep.subr.bf16.mxu0 0
    %993 = vmatpush1.bf16.msra.mxu0 0
    %994 = vmatprep.subr.bf16.mxu0 %v367
    %995 = vmatpush1.bf16.msra.mxu0 %v366
    %996 = vmatprep.subr.bf16.mxu0 0
    %997 = vmatpush2.bf16.msra.mxu0 0
    %998 = vmatprep.subr.bf16.mxu0 0
    %999 = vmatpush2.bf16.msra.mxu0 0
    %1000 = vmatprep.subr.bf16.mxu0 0
    %1001 = vmatpush2.bf16.msra.mxu0 0
    %1002 = vmatprep.subr.bf16.mxu0 0
    %1003 = vmatpush2.bf16.msra.mxu0 0
    %1004 = vmatprep.subr.bf16.mxu0 0
    %1005 = vmatpush2.bf16.msra.mxu0 0
    %1006 = vmatprep.subr.bf16.mxu0 0
    %1007 = vmatpush2.bf16.msra.mxu0 0
    %1008 = vmatprep.subr.bf16.mxu0 0
    %1009 = vmatpush2.bf16.msra.mxu0 0
    %1010 = vmatprep.subr.bf16.mxu0 0
    %1011 = vmatpush2.bf16.msra.mxu0 0
    %1012 = vmatprep.mubr.bf16.mxu0 0
    %1013 = vmatmul.mubr.bf16.gmra.mxu0 %v404
    %v1014 = vpop.f32.mrf.mxu0
    %v1015 = vadd.f32 %v197, %v1014
    %v1016 = vpop.f32.mrf.mxu0
    %v1017 = vadd.f32 %v201, %v1016
    %v1018 = vpop.f32.mrf.mxu0
    %v1019 = vpop.f32.mrf.mxu0
    %1020 = vdwg.mxu0
    %1021 = vmatprep.subr.bf16.mxu0 0
    %1022 = vmatpush1.bf16.msra.mxu0 0
    %1023 = vmatprep.subr.bf16.mxu0 0
    %1024 = vmatpush1.bf16.msra.mxu0 0
    %1025 = vmatprep.subr.bf16.mxu0 0
    %1026 = vmatpush1.bf16.msra.mxu0 0
    %1027 = vmatprep.subr.bf16.mxu0 0
    %1028 = vmatpush1.bf16.msra.mxu0 0
    %1029 = vmatprep.subr.bf16.mxu0 0
    %1030 = vmatpush1.bf16.msra.mxu0 0
    %1031 = vmatprep.subr.bf16.mxu0 0
    %1032 = vmatpush1.bf16.msra.mxu0 0
    %1033 = vmatprep.subr.bf16.mxu0 0
    %1034 = vmatpush1.bf16.msra.mxu0 0
    %1035 = vmatprep.subr.bf16.mxu0 %v369
    %1036 = vmatpush1.bf16.msra.mxu0 %v368
    %1037 = vmatprep.subr.bf16.mxu0 0
    %1038 = vmatpush2.bf16.msra.mxu0 0
    %1039 = vmatprep.subr.bf16.mxu0 0
    %1040 = vmatpush2.bf16.msra.mxu0 0
    %1041 = vmatprep.subr.bf16.mxu0 0
    %1042 = vmatpush2.bf16.msra.mxu0 0
    %1043 = vmatprep.subr.bf16.mxu0 0
    %1044 = vmatpush2.bf16.msra.mxu0 0
    %1045 = vmatprep.subr.bf16.mxu0 0
    %1046 = vmatpush2.bf16.msra.mxu0 0
    %1047 = vmatprep.subr.bf16.mxu0 0
    %1048 = vmatpush2.bf16.msra.mxu0 0
    %1049 = vmatprep.subr.bf16.mxu0 0
    %1050 = vmatpush2.bf16.msra.mxu0 0
    %1051 = vmatprep.subr.bf16.mxu0 0
    %1052 = vmatpush2.bf16.msra.mxu0 0
    %1053 = vmatprep.mubr.bf16.mxu0 0
    %1054 = vmatmul.mubr.bf16.gmra.mxu0 %v404
    %v1055 = vpop.f32.mrf.mxu0
    %v1056 = vadd.f32 %v205, %v1055
    %v1057 = vpop.f32.mrf.mxu0
    %v1058 = vadd.f32 %v209, %v1057
    %v1059 = vpop.f32.mrf.mxu0
    %v1060 = vpop.f32.mrf.mxu0
    %1061 = vdwg.mxu0
    %v1062 = vpack.c.bf16 %v441, %v441
    %v1063 = vpack.c.bf16 %v443, %v443
    %v1064 = vpack.c.bf16 %v482, %v482
    %v1065 = vpack.c.bf16 %v484, %v484
    %v1066 = vpack.c.bf16 %v523, %v523
    %v1067 = vpack.c.bf16 %v525, %v525
    %v1068 = vpack.c.bf16 %v564, %v564
    %v1069 = vpack.c.bf16 %v566, %v566
    %v1070 = vpack.c.bf16 %v605, %v605
    %v1071 = vpack.c.bf16 %v607, %v607
    %v1072 = vpack.c.bf16 %v646, %v646
    %v1073 = vpack.c.bf16 %v648, %v648
    %v1074 = vpack.c.bf16 %v687, %v687
    %v1075 = vpack.c.bf16 %v689, %v689
    %v1076 = vpack.c.bf16 %v728, %v728
    %v1077 = vpack.c.bf16 %v730, %v730
    %v1078 = vpack.c.bf16 %v769, %v769
    %v1079 = vpack.c.bf16 %v771, %v771
    %v1080 = vpack.c.bf16 %v810, %v810
    %v1081 = vpack.c.bf16 %v812, %v812
    %v1082 = vpack.c.bf16 %v851, %v851
    %v1083 = vpack.c.bf16 %v853, %v853
    %v1084 = vpack.c.bf16 %v892, %v892
    %v1085 = vpack.c.bf16 %v894, %v894
    %v1086 = vpack.c.bf16 %v933, %v933
    %v1087 = vpack.c.bf16 %v935, %v935
    %v1088 = vpack.c.bf16 %v974, %v974
    %v1089 = vpack.c.bf16 %v976, %v976
    %v1090 = vpack.c.bf16 %v1015, %v1015
    %v1091 = vpack.c.bf16 %v1017, %v1017
    %v1092 = vpack.c.bf16 %v1056, %v1056
    %v1093 = vpack.c.bf16 %v1058, %v1058
    %v1126 = vcombine.low %v1062, %v1063
    %v1127 = vcombine.low %v1064, %v1065
    %v1128 = vcombine.low %v1066, %v1067
    %v1129 = vcombine.low %v1068, %v1069
    %v1131 = vunpack.c.l.s4 1966171168
    %v1132 = vunpack.c.0.s8 %v1131
    %v1133 = vlaneseq
    %v1134 = vshrl.u32 %v1133, 7
    %v1135 = vsub.s32 %v1132, %v1134
    %v1136 = vrot.slane %v1126, %v1135
    %v1138 = vunpack.c.l.s4 1966171168
    %v1139 = vunpack.c.0.s8 %v1138
    %v1140 = vlaneseq
    %v1141 = vshrl.u32 %v1140, 7
    %v1142 = vsub.s32 %v1139, %v1141
    %v1143 = vrot.slane %v1127, %v1142
    %v1145 = vunpack.c.l.s4 1966171168
    %v1146 = vunpack.c.0.s8 %v1145
    %v1147 = vlaneseq
    %v1148 = vshrl.u32 %v1147, 7
    %v1149 = vsub.s32 %v1146, %v1148
    %v1150 = vrot.slane %v1128, %v1149
    %v1152 = vunpack.c.l.s4 1966171168
    %v1153 = vunpack.c.0.s8 %v1152
    %v1154 = vlaneseq
    %v1155 = vshrl.u32 %v1154, 7
    %v1156 = vsub.s32 %v1153, %v1155
    %v1157 = vrot.slane %v1129, %v1156
    %v1158 = vcombine.low %v1136, %v1143
    %v1159 = vcombine.low %v1150, %v1157
    %v1161 = vunpack.c.l.s4 1966171168
    %v1162 = vunpack.c.0.s8 %v1161
    %v1163 = vlaneseq
    %v1164 = vshrl.u32 %v1163, 7
    %v1165 = vsub.s32 %v1162, %v1164
    %v1166 = vrot.slane %v1158, %v1165
    %v1168 = vunpack.c.l.s4 1966171168
    %v1169 = vunpack.c.0.s8 %v1168
    %v1170 = vlaneseq
    %v1171 = vshrl.u32 %v1170, 7
    %v1172 = vsub.s32 %v1169, %v1171
    %v1173 = vrot.slane %v1159, %v1172
    %v1174 = vcombine.low %v1166, %v1173
    %v1175 = vcombine.low %v1070, %v1071
    %v1176 = vcombine.low %v1072, %v1073
    %v1177 = vcombine.low %v1074, %v1075
    %v1178 = vcombine.low %v1076, %v1077
    %v1180 = vunpack.c.l.s4 1966171168
    %v1181 = vunpack.c.0.s8 %v1180
    %v1182 = vlaneseq
    %v1183 = vshrl.u32 %v1182, 7
    %v1184 = vsub.s32 %v1181, %v1183
    %v1185 = vrot.slane %v1175, %v1184
    %v1187 = vunpack.c.l.s4 1966171168
    %v1188 = vunpack.c.0.s8 %v1187
    %v1189 = vlaneseq
    %v1190 = vshrl.u32 %v1189, 7
    %v1191 = vsub.s32 %v1188, %v1190
    %v1192 = vrot.slane %v1176, %v1191
    %v1194 = vunpack.c.l.s4 1966171168
    %v1195 = vunpack.c.0.s8 %v1194
    %v1196 = vlaneseq
    %v1197 = vshrl.u32 %v1196, 7
    %v1198 = vsub.s32 %v1195, %v1197
    %v1199 = vrot.slane %v1177, %v1198
    %v1201 = vunpack.c.l.s4 1966171168
    %v1202 = vunpack.c.0.s8 %v1201
    %v1203 = vlaneseq
    %v1204 = vshrl.u32 %v1203, 7
    %v1205 = vsub.s32 %v1202, %v1204
    %v1206 = vrot.slane %v1178, %v1205
    %v1207 = vcombine.low %v1185, %v1192
    %v1208 = vcombine.low %v1199, %v1206
    %v1210 = vunpack.c.l.s4 1966171168
    %v1211 = vunpack.c.0.s8 %v1210
    %v1212 = vlaneseq
    %v1213 = vshrl.u32 %v1212, 7
    %v1214 = vsub.s32 %v1211, %v1213
    %v1215 = vrot.slane %v1207, %v1214
    %v1217 = vunpack.c.l.s4 1966171168
    %v1218 = vunpack.c.0.s8 %v1217
    %v1219 = vlaneseq
    %v1220 = vshrl.u32 %v1219, 7
    %v1221 = vsub.s32 %v1218, %v1220
    %v1222 = vrot.slane %v1208, %v1221
    %v1223 = vcombine.low %v1215, %v1222
    %v1224 = vcombine.low %v1078, %v1079
    %v1225 = vcombine.low %v1080, %v1081
    %v1226 = vcombine.low %v1082, %v1083
    %v1227 = vcombine.low %v1084, %v1085
    %v1229 = vunpack.c.l.s4 1966171168
    %v1230 = vunpack.c.0.s8 %v1229
    %v1231 = vlaneseq
    %v1232 = vshrl.u32 %v1231, 7
    %v1233 = vsub.s32 %v1230, %v1232
    %v1234 = vrot.slane %v1224, %v1233
    %v1236 = vunpack.c.l.s4 1966171168
    %v1237 = vunpack.c.0.s8 %v1236
    %v1238 = vlaneseq
    %v1239 = vshrl.u32 %v1238, 7
    %v1240 = vsub.s32 %v1237, %v1239
    %v1241 = vrot.slane %v1225, %v1240
    %v1243 = vunpack.c.l.s4 1966171168
    %v1244 = vunpack.c.0.s8 %v1243
    %v1245 = vlaneseq
    %v1246 = vshrl.u32 %v1245, 7
    %v1247 = vsub.s32 %v1244, %v1246
    %v1248 = vrot.slane %v1226, %v1247
    %v1250 = vunpack.c.l.s4 1966171168
    %v1251 = vunpack.c.0.s8 %v1250
    %v1252 = vlaneseq
    %v1253 = vshrl.u32 %v1252, 7
    %v1254 = vsub.s32 %v1251, %v1253
    %v1255 = vrot.slane %v1227, %v1254
    %v1256 = vcombine.low %v1234, %v1241
    %v1257 = vcombine.low %v1248, %v1255
    %v1259 = vunpack.c.l.s4 1966171168
    %v1260 = vunpack.c.0.s8 %v1259
    %v1261 = vlaneseq
    %v1262 = vshrl.u32 %v1261, 7
    %v1263 = vsub.s32 %v1260, %v1262
    %v1264 = vrot.slane %v1256, %v1263
    %v1266 = vunpack.c.l.s4 1966171168
    %v1267 = vunpack.c.0.s8 %v1266
    %v1268 = vlaneseq
    %v1269 = vshrl.u32 %v1268, 7
    %v1270 = vsub.s32 %v1267, %v1269
    %v1271 = vrot.slane %v1257, %v1270
    %v1272 = vcombine.low %v1264, %v1271
    %v1273 = vcombine.low %v1086, %v1087
    %v1274 = vcombine.low %v1088, %v1089
    %v1275 = vcombine.low %v1090, %v1091
    %v1276 = vcombine.low %v1092, %v1093
    %v1278 = vunpack.c.l.s4 1966171168
    %v1279 = vunpack.c.0.s8 %v1278
    %v1280 = vlaneseq
    %v1281 = vshrl.u32 %v1280, 7
    %v1282 = vsub.s32 %v1279, %v1281
    %v1283 = vrot.slane %v1273, %v1282
    %v1285 = vunpack.c.l.s4 1966171168
    %v1286 = vunpack.c.0.s8 %v1285
    %v1287 = vlaneseq
    %v1288 = vshrl.u32 %v1287, 7
    %v1289 = vsub.s32 %v1286, %v1288
    %v1290 = vrot.slane %v1274, %v1289
    %v1292 = vunpack.c.l.s4 1966171168
    %v1293 = vunpack.c.0.s8 %v1292
    %v1294 = vlaneseq
    %v1295 = vshrl.u32 %v1294, 7
    %v1296 = vsub.s32 %v1293, %v1295
    %v1297 = vrot.slane %v1275, %v1296
    %v1299 = vunpack.c.l.s4 1966171168
    %v1300 = vunpack.c.0.s8 %v1299
    %v1301 = vlaneseq
    %v1302 = vshrl.u32 %v1301, 7
    %v1303 = vsub.s32 %v1300, %v1302
    %v1304 = vrot.slane %v1276, %v1303
    %v1305 = vcombine.low %v1283, %v1290
    %v1306 = vcombine.low %v1297, %v1304
    %v1308 = vunpack.c.l.s4 1966171168
    %v1309 = vunpack.c.0.s8 %v1308
    %v1310 = vlaneseq
    %v1311 = vshrl.u32 %v1310, 7
    %v1312 = vsub.s32 %v1309, %v1311
    %v1313 = vrot.slane %v1305, %v1312
    %v1315 = vunpack.c.l.s4 1966171168
    %v1316 = vunpack.c.0.s8 %v1315
    %v1317 = vlaneseq
    %v1318 = vshrl.u32 %v1317, 7
    %v1319 = vsub.s32 %v1316, %v1318
    %v1320 = vrot.slane %v1306, %v1319
    %v1321 = vcombine.low %v1313, %v1320
    %1326 = vst [vmem:[%s3] sm:$0xff] %v1174
    %1327 = vst [vmem:[%s3 + $0x8] sm:$0xff] %v1223
    %1328 = vst [vmem:[%s3 + $0x10] sm:$0xff] %v1272
    %1329 = vst [vmem:[%s3 + $0x18] sm:$0xff] %v1321
    // Predicated region
    $region22: #{decoder_forward.5} parent=1 // pred_check
      _
    $region23: #{decoder_forward.5} parent=1 // pred_check_branch
      %1331 = sbr.rel (0) target = $region25
    $region24: #{decoder_forward.5} parent=1 // pred_region
      _
    $region25: #{decoder_forward.5} parent=1 // pred_fallthru
      _
    // Predicated region
    $region26: #{decoder_forward.5} parent=1 // pred_check
      _
    $region27: #{decoder_forward.5} parent=1 // pred_check_branch
      %1333 = sbr.rel (0) target = $region29
    $region28: #{decoder_forward.5} parent=1 // pred_region
      _
    $region29: #{decoder_forward.5} parent=1 // pred_fallthru
      _
    %1334 = vsyncpa [#allocation3], 1
    %1335 = vsyncpa [#allocation5], 1

// kernel: decoder_forward.7
$region0: #{decoder_forward.7}
  #allocation0 [shape = 'u32[]', space=smem, size = 0x4, offset = 0x4, fixed_abs, tag = 'smem constant byte address 0x4 - core index']
  #allocation1 [shape = 'u32[144,128]{1,0:T(1,128)}', space=vmem, size = 0x12000, scoped, tag = 'internal scratch']
  %s0 = inlined_call_operand.vmem [shape: bf16[128,512], index: 0, kind: input, shape index: {}]
  %s1 = inlined_call_operand.vmem [shape: bf16[512,256], index: 1, kind: input, shape index: {}]
  %s2 = inlined_call_operand.vmem [shape: f32[1,256], index: 2, kind: input, shape index: {}]
  %s3 = inlined_call_operand.vmem [shape: bf16[128,256], index: 3, kind: output, shape index: {}]
  %s4 = sld [smem:[#allocation0]]
  $region45: #{decoder_forward.7} parent=0
    _
  %s6 = ssub.s32 1, %s4
  %s7 = scalar_select 0, %s6, %s4
  loop: start=0, step=1, limit=4
  $region2: #{decoder_forward.7} parent=0 // loop_pre_header
    _
  $region3: #{decoder_forward.7} parent=0 // loop_header
    %s9 = sphi 0, %s13
    %p10 = scmp.ge.s32.totalorder %s9, 4
    %s19 = sphi 0, %s21
    %s22 = sphi 0, %s19
    %s23 = sphi 0, %s22
    %s39 = sphi 0, %s23
    %s43 = sphi 0, %s43
    %s45 = sphi 0, %s43
    %s46 = sphi 0, %s45
    %s60 = sphi 0, %s46
    %s64 = sphi 0, %s64
    %s66 = sphi 0, %s64
    %s67 = sphi 0, %s66
    %s81 = sphi 0, %s67
    %s87 = sphi 0, %s89
    %s90 = sphi 0, %s87
    %s91 = sphi 0, %s90
    %s107 = sphi 0, %s91
  $region4: #{decoder_forward.7} parent=0 // loop_header_branch
    %12 = sbr.rel (%p10) target = $region8
  $region5: #{decoder_forward.7} parent=0 // loop_body
    %s14 = ssub.s32 %s9, 1
    %s15 = ssub.s32 %s9, 2
    %s16 = sadd.s32 %s9, 1
    %s17 = ssub.s32 %s9, %s16
    %p18 = scmp.eq.s32.totalorder %s17, 0
    %s20 = sadd.s32 %s19, 1
    %s21 = scalar_select %p18, %s19, %s20
    %p24 = pneg %p18
    %p25 = scmp.eq.s32.totalorder %s9, 1
    %p26 = por %p24, %p25
    %p27 = scmp.ne.s32.totalorder %s19, %s22
    %p28 = scmp.eq.s32.totalorder %s9, 0
    %p29 = por %p27, %p28
    %p30 = scmp.ne.s32.totalorder %s19, %s22
    %p31 = scmp.eq.s32.totalorder %s14, 1
    %p32 = por %p30, %p31
    %p33 = scmp.ne.s32.totalorder %s22, %s23
    %p34 = scmp.eq.s32.totalorder %s14, 0
    %p35 = por %p33, %p34
    %p36 = scmp.ne.s32.totalorder %s22, %s23
    %p37 = scmp.eq.s32.totalorder %s15, 1
    %p38 = por %p36, %p37
    %p40 = scmp.ne.s32.totalorder %s23, %s39
    %p41 = scmp.eq.s32.totalorder %s15, 0
    %p42 = por %p40, %p41
    %s44 = sadd.s32 %s43, 1
    %p47 = scmp.eq.s32.totalorder %s9, 1
    %p48 = scmp.ne.s32.totalorder %s43, %s45
    %p49 = scmp.eq.s32.totalorder %s9, 0
    %p50 = por %p48, %p49
    %p51 = scmp.ne.s32.totalorder %s43, %s45
    %p52 = scmp.eq.s32.totalorder %s14, 1
    %p53 = por %p51, %p52
    %p54 = scmp.ne.s32.totalorder %s45, %s46
    %p55 = scmp.eq.s32.totalorder %s14, 0
    %p56 = por %p54, %p55
    %p57 = scmp.ne.s32.totalorder %s45, %s46
    %p58 = scmp.eq.s32.totalorder %s15, 1
    %p59 = por %p57, %p58
    %p61 = scmp.ne.s32.totalorder %s46, %s60
    %p62 = scmp.eq.s32.totalorder %s15, 0
    %p63 = por %p61, %p62
    %s65 = sadd.s32 %s64, 1
    %p68 = scmp.eq.s32.totalorder %s9, 1
    %p69 = scmp.ne.s32.totalorder %s64, %s66
    %p70 = scmp.eq.s32.totalorder %s9, 0
    %p71 = por %p69, %p70
    %p72 = scmp.ne.s32.totalorder %s64, %s66
    %p73 = scmp.eq.s32.totalorder %s14, 1
    %p74 = por %p72, %p73
    %p75 = scmp.ne.s32.totalorder %s66, %s67
    %p76 = scmp.eq.s32.totalorder %s14, 0
    %p77 = por %p75, %p76
    %p78 = scmp.ne.s32.totalorder %s66, %s67
    %p79 = scmp.eq.s32.totalorder %s15, 1
    %p80 = por %p78, %p79
    %p82 = scmp.ne.s32.totalorder %s67, %s81
    %p83 = scmp.eq.s32.totalorder %s15, 0
    %p84 = por %p82, %p83
    %s85 = ssub.s32 %s9, %s16
    %p86 = scmp.eq.s32.totalorder %s85, 0
    %s88 = sadd.s32 %s87, 1
    %s89 = scalar_select %p86, %s87, %s88
    %p92 = pneg %p86
    %p93 = scmp.eq.s32.totalorder %s9, 1
    %p94 = por %p92, %p93
    %p95 = scmp.ne.s32.totalorder %s87, %s90
    %p96 = scmp.eq.s32.totalorder %s9, 0
    %p97 = por %p95, %p96
    %p98 = scmp.ne.s32.totalorder %s87, %s90
    %p99 = scmp.eq.s32.totalorder %s14, 1
    %p100 = por %p98, %p99
    %p101 = scmp.ne.s32.totalorder %s90, %s91
    %p102 = scmp.eq.s32.totalorder %s14, 0
    %p103 = por %p101, %p102
    %p104 = scmp.ne.s32.totalorder %s90, %s91
    %p105 = scmp.eq.s32.totalorder %s15, 1
    %p106 = por %p104, %p105
    %p108 = scmp.ne.s32.totalorder %s91, %s107
    %p109 = scmp.eq.s32.totalorder %s15, 0
    %p110 = por %p108, %p109
    %p111 = scmp.le.s32.totalorder 1, %s9
    %p112 = scmp.lt.s32.totalorder %s9, 3
    %p113 = pnand %p111, %p112
    %p114 = pneg %p113
    // Predicated region
    $region9: #{decoder_forward.7} parent=5 // pred_check
      _
    $region10: #{decoder_forward.7} parent=5 // pred_check_branch
      %116 = sbr.rel (%p113) target = $region12
    $region11: #{decoder_forward.7} parent=5 // pred_region
      %s117 = ssub.s32 %s9, 1
      // Predicated region
      $region13: #{decoder_forward.7} parent=11 // pred_check
        %p118 = pneg %p56
      $region14: #{decoder_forward.7} parent=11 // pred_check_branch
        %120 = sbr.rel (%p118) target = $region16
      $region15: #{decoder_forward.7} parent=11 // pred_region
        _
      $region16: #{decoder_forward.7} parent=11 // pred_fallthru
        _
      // Predicated region
      $region17: #{decoder_forward.7} parent=11 // pred_check
        %p121 = pneg %p77
      $region18: #{decoder_forward.7} parent=11 // pred_check_branch
        %123 = sbr.rel (%p121) target = $region20
      $region19: #{decoder_forward.7} parent=11 // pred_region
        _
      $region20: #{decoder_forward.7} parent=11 // pred_fallthru
        _
    $region12: #{decoder_forward.7} parent=5 // pred_fallthru
      _
    %p124 = scmp.lt.s32.totalorder %s9, 2
    // Predicated region
    $region21: #{decoder_forward.7} parent=5 // pred_check
      %p125 = pneg %p124
    $region22: #{decoder_forward.7} parent=5 // pred_check_branch
      %127 = sbr.rel (%p125) target = $region24
    $region23: #{decoder_forward.7} parent=5 // pred_region
      // Predicated region
      $region25: #{decoder_forward.7} parent=23 // pred_check
        %p128 = pneg %p29
      $region26: #{decoder_forward.7} parent=23 // pred_check_branch
        %130 = sbr.rel (%p128) target = $region28
      $region27: #{decoder_forward.7} parent=23 // pred_region
        %s131 = smul.u32 8, %s9
        %p132 = scmp.lt.s32.totalorder %s131, 15
        %s133 = scalar_select %p132, %s131, 15
        %s134 = smul.addr %s133, 4
        %s135 = smul.addr %s134, 4
        %s136 = scalar_lea.vmem %s0, %s135
        %s137 = smul.u32 8, %s9
      $region28: #{decoder_forward.7} parent=23 // pred_fallthru
        _
    $region24: #{decoder_forward.7} parent=5 // pred_fallthru
      _
    %p138 = scmp.le.s32.totalorder 1, %s9
    %p139 = scmp.lt.s32.totalorder %s9, 3
    %p140 = pnand %p138, %p139
    %p141 = pneg %p140
    // Predicated region
    $region29: #{decoder_forward.7} parent=5 // pred_check
      _
    $region30: #{decoder_forward.7} parent=5 // pred_check_branch
      %143 = sbr.rel (%p140) target = $region32
    $region31: #{decoder_forward.7} parent=5 // pred_region
      %s144 = ssub.s32 %s9, 1
      %s145 = smul.u32 8, %s14
      %p146 = scmp.lt.s32.totalorder %s145, 15
      %s147 = scalar_select %p146, %s145, 15
      %s148 = smul.addr %s147, 4
      %s149 = smul.addr %s148, 4
      %s150 = scalar_lea.vmem %s0, %s149
      %p151 = pneg %p35
      %p152 = pneg %p32
      %p153 = pneg %p56
      %p154 = pneg %p53
      %p155 = pneg %p77
      %p156 = pneg %p74
      %p157 = pneg %p103
      %p158 = pneg %p100
      %s159 = smul.u32 8, %s14
      %p160 = scmp.lt.s32.totalorder %s159, 15
      %s161 = scalar_select %p160, %s159, 15
      %s162 = smul.addr %s161, 2
      %s163 = smul.addr %s162, 4
      %s164 = scalar_lea.vmem %s3, %s163
      %s165 = smul.u32 8, %s14
      %p166 = scmp.lt.s32.totalorder %s165, 15
      %s167 = scalar_select %p166, %s165, 15
      %s168 = smul.addr %s167, 4
      %s169 = smul.addr %s168, 4
      %s170 = scalar_lea.vmem %s0, %s169
      %s171 = smul.u32 8, %s14
      %s172 = smul.u32 8, %s14
      %p173 = scmp.lt.s32.totalorder %s172, 15
      %s174 = scalar_select %p173, %s172, 15
      %s175 = smul.addr %s174, 2
      %s176 = smul.addr %s175, 4
      %s177 = scalar_lea.vmem %s3, %s176
      %s178 = smul.u32 8, %s14
      %v179 = vld [vmem:[%s170] sm:$0xff]
      %v180 = vld [vmem:[%s170 + $0x8] sm:$0xff]
      %v181 = vld [vmem:[%s170 + $0x10] sm:$0xff]
      %v182 = vld [vmem:[%s170 + $0x18] sm:$0xff]
      %v183 = vld [vmem:[%s170 + $0x20] sm:$0xff]
      %v184 = vld [vmem:[%s170 + $0x28] sm:$0xff]
      %v185 = vld [vmem:[%s170 + $0x30] sm:$0xff]
      %v186 = vld [vmem:[%s170 + $0x38] sm:$0xff]
      %v187 = vld [vmem:[%s170 + $0x40] sm:$0xff]
      %v188 = vld [vmem:[%s170 + $0x48] sm:$0xff]
      %v189 = vld [vmem:[%s170 + $0x50] sm:$0xff]
      %v190 = vld [vmem:[%s170 + $0x58] sm:$0xff]
      %v191 = vld [vmem:[%s170 + $0x60] sm:$0xff]
      %v192 = vld [vmem:[%s170 + $0x68] sm:$0xff]
      %v193 = vld [vmem:[%s170 + $0x70] sm:$0xff]
      %v194 = vld [vmem:[%s170 + $0x78] sm:$0xff]
      %v195 = vld [vmem:[%s1] sm:$0xff]
      %v196 = vld [vmem:[%s1 + $0x8] sm:$0xff]
      %v197 = vld [vmem:[%s1 + $0x10] sm:$0xff]
      %v198 = vld [vmem:[%s1 + $0x18] sm:$0xff]
      %v199 = vld [vmem:[%s1 + $0x20] sm:$0xff]
      %v200 = vld [vmem:[%s1 + $0x28] sm:$0xff]
      %v201 = vld [vmem:[%s1 + $0x30] sm:$0xff]
      %v202 = vld [vmem:[%s1 + $0x38] sm:$0xff]
      %v203 = vld [vmem:[%s1 + $0x40] sm:$0xff]
      %v204 = vld [vmem:[%s1 + $0x48] sm:$0xff]
      %v205 = vld [vmem:[%s1 + $0x50] sm:$0xff]
      %v206 = vld [vmem:[%s1 + $0x58] sm:$0xff]
      %v207 = vld [vmem:[%s1 + $0x60] sm:$0xff]
      %v208 = vld [vmem:[%s1 + $0x68] sm:$0xff]
      %v209 = vld [vmem:[%s1 + $0x70] sm:$0xff]
      %v210 = vld [vmem:[%s1 + $0x78] sm:$0xff]
      %v211 = vld [vmem:[%s1 + $0x80] sm:$0xff]
      %v212 = vld [vmem:[%s1 + $0x88] sm:$0xff]
      %v213 = vld [vmem:[%s1 + $0x90] sm:$0xff]
      %v214 = vld [vmem:[%s1 + $0x98] sm:$0xff]
      %v215 = vld [vmem:[%s1 + $0xa0] sm:$0xff]
      %v216 = vld [vmem:[%s1 + $0xa8] sm:$0xff]
      %v217 = vld [vmem:[%s1 + $0xb0] sm:$0xff]
      %v218 = vld [vmem:[%s1 + $0xb8] sm:$0xff]
      %v219 = vld [vmem:[%s1 + $0xc0] sm:$0xff]
      %v220 = vld [vmem:[%s1 + $0xc8] sm:$0xff]
      %v221 = vld [vmem:[%s1 + $0xd0] sm:$0xff]
      %v222 = vld [vmem:[%s1 + $0xd8] sm:$0xff]
      %v223 = vld [vmem:[%s1 + $0xe0] sm:$0xff]
      %v224 = vld [vmem:[%s1 + $0xe8] sm:$0xff]
      %v225 = vld [vmem:[%s1 + $0xf0] sm:$0xff]
      %v226 = vld [vmem:[%s1 + $0xf8] sm:$0xff]
      %v227 = vld [vmem:[%s1 + $0x100] sm:$0xff]
      %v228 = vld [vmem:[%s1 + $0x108] sm:$0xff]
      %v229 = vld [vmem:[%s1 + $0x110] sm:$0xff]
      %v230 = vld [vmem:[%s1 + $0x118] sm:$0xff]
      %v231 = vld [vmem:[%s1 + $0x120] sm:$0xff]
      %v232 = vld [vmem:[%s1 + $0x128] sm:$0xff]
      %v233 = vld [vmem:[%s1 + $0x130] sm:$0xff]
      %v234 = vld [vmem:[%s1 + $0x138] sm:$0xff]
      %v235 = vld [vmem:[%s1 + $0x140] sm:$0xff]
      %v236 = vld [vmem:[%s1 + $0x148] sm:$0xff]
      %v237 = vld [vmem:[%s1 + $0x150] sm:$0xff]
      %v238 = vld [vmem:[%s1 + $0x158] sm:$0xff]
      %v239 = vld [vmem:[%s1 + $0x160] sm:$0xff]
      %v240 = vld [vmem:[%s1 + $0x168] sm:$0xff]
      %v241 = vld [vmem:[%s1 + $0x170] sm:$0xff]
      %v242 = vld [vmem:[%s1 + $0x178] sm:$0xff]
      %v243 = vld [vmem:[%s1 + $0x180] sm:$0xff]
      %v244 = vld [vmem:[%s1 + $0x188] sm:$0xff]
      %v245 = vld [vmem:[%s1 + $0x190] sm:$0xff]
      %v246 = vld [vmem:[%s1 + $0x198] sm:$0xff]
      %v247 = vld [vmem:[%s1 + $0x1a0] sm:$0xff]
      %v248 = vld [vmem:[%s1 + $0x1a8] sm:$0xff]
      %v249 = vld [vmem:[%s1 + $0x1b0] sm:$0xff]
      %v250 = vld [vmem:[%s1 + $0x1b8] sm:$0xff]
      %v251 = vld [vmem:[%s1 + $0x1c0] sm:$0xff]
      %v252 = vld [vmem:[%s1 + $0x1c8] sm:$0xff]
      %v253 = vld [vmem:[%s1 + $0x1d0] sm:$0xff]
      %v254 = vld [vmem:[%s1 + $0x1d8] sm:$0xff]
      %v255 = vld [vmem:[%s1 + $0x1e0] sm:$0xff]
      %v256 = vld [vmem:[%s1 + $0x1e8] sm:$0xff]
      %v257 = vld [vmem:[%s1 + $0x1f0] sm:$0xff]
      %v258 = vld [vmem:[%s1 + $0x1f8] sm:$0xff]
      %v259 = vld [vmem:[%s2] sm:$0x3]
      %v261 = vlaneseq
      %v262 = vshrl.u32 %v261, 7
      %v263 = vsub.s32 0, %v262
      %v264 = vrot.slane %v259, %v263
      %v265 = vlaneseq
      %v266 = vshrl.u32 %v265, 7
      %v267 = vsub.s32 1, %v266
      %v268 = vrot.slane %v259, %v267
      %v287 = vunpack.c.l.b16 %v179
      %v288 = vunpack.c.h.b16 %v179
      %v289 = vunpack.c.l.b16 %v180
      %v290 = vunpack.c.h.b16 %v180
      %v291 = vunpack.c.l.b16 %v181
      %v292 = vunpack.c.h.b16 %v181
      %v293 = vunpack.c.l.b16 %v182
      %v294 = vunpack.c.h.b16 %v182
      %v295 = vunpack.c.l.b16 %v183
      %v296 = vunpack.c.h.b16 %v183
      %v297 = vunpack.c.l.b16 %v184
      %v298 = vunpack.c.h.b16 %v184
      %v299 = vunpack.c.l.b16 %v185
      %v300 = vunpack.c.h.b16 %v185
      %v301 = vunpack.c.l.b16 %v186
      %v302 = vunpack.c.h.b16 %v186
      %v303 = vunpack.c.l.b16 %v187
      %v304 = vunpack.c.h.b16 %v187
      %v305 = vunpack.c.l.b16 %v188
      %v306 = vunpack.c.h.b16 %v188
      %v307 = vunpack.c.l.b16 %v189
      %v308 = vunpack.c.h.b16 %v189
      %v309 = vunpack.c.l.b16 %v190
      %v310 = vunpack.c.h.b16 %v190
      %v311 = vunpack.c.l.b16 %v191
      %v312 = vunpack.c.h.b16 %v191
      %v313 = vunpack.c.l.b16 %v192
      %v314 = vunpack.c.h.b16 %v192
      %v315 = vunpack.c.l.b16 %v193
      %v316 = vunpack.c.h.b16 %v193
      %v317 = vunpack.c.l.b16 %v194
      %v318 = vunpack.c.h.b16 %v194
      %v319 = vpack.c.b16 %v291, %v287
      %v320 = vpack.c.b16 %v292, %v288
      %v321 = vpack.c.b16 %v293, %v289
      %v322 = vpack.c.b16 %v294, %v290
      %v323 = vpack.c.b16 %v299, %v295
      %v324 = vpack.c.b16 %v300, %v296
      %v325 = vpack.c.b16 %v301, %v297
      %v326 = vpack.c.b16 %v302, %v298
      %v327 = vpack.c.b16 %v307, %v303
      %v328 = vpack.c.b16 %v308, %v304
      %v329 = vpack.c.b16 %v309, %v305
      %v330 = vpack.c.b16 %v310, %v306
      %v331 = vpack.c.b16 %v315, %v311
      %v332 = vpack.c.b16 %v316, %v312
      %v333 = vpack.c.b16 %v317, %v313
      %v334 = vpack.c.b16 %v318, %v314
      %v415 = vunpack.c.l.b16 %v195
      %v416 = vunpack.c.h.b16 %v195
      %v417 = vunpack.c.l.b16 %v196
      %v418 = vunpack.c.h.b16 %v196
      %v419 = vunpack.c.l.b16 %v197
      %v420 = vunpack.c.h.b16 %v197
      %v421 = vunpack.c.l.b16 %v198
      %v422 = vunpack.c.h.b16 %v198
      %v423 = vunpack.c.l.b16 %v199
      %v424 = vunpack.c.h.b16 %v199
      %v425 = vunpack.c.l.b16 %v200
      %v426 = vunpack.c.h.b16 %v200
      %v427 = vunpack.c.l.b16 %v201
      %v428 = vunpack.c.h.b16 %v201
      %v429 = vunpack.c.l.b16 %v202
      %v430 = vunpack.c.h.b16 %v202
      %v431 = vunpack.c.l.b16 %v203
      %v432 = vunpack.c.h.b16 %v203
      %v433 = vunpack.c.l.b16 %v204
      %v434 = vunpack.c.h.b16 %v204
      %v435 = vunpack.c.l.b16 %v205
      %v436 = vunpack.c.h.b16 %v205
      %v437 = vunpack.c.l.b16 %v206
      %v438 = vunpack.c.h.b16 %v206
      %v439 = vunpack.c.l.b16 %v207
      %v440 = vunpack.c.h.b16 %v207
      %v441 = vunpack.c.l.b16 %v208
      %v442 = vunpack.c.h.b16 %v208
      %v443 = vunpack.c.l.b16 %v209
      %v444 = vunpack.c.h.b16 %v209
      %v445 = vunpack.c.l.b16 %v210
      %v446 = vunpack.c.h.b16 %v210
      %v447 = vunpack.c.l.b16 %v211
      %v448 = vunpack.c.h.b16 %v211
      %v449 = vunpack.c.l.b16 %v212
      %v450 = vunpack.c.h.b16 %v212
      %v451 = vunpack.c.l.b16 %v213
      %v452 = vunpack.c.h.b16 %v213
      %v453 = vunpack.c.l.b16 %v214
      %v454 = vunpack.c.h.b16 %v214
      %v455 = vunpack.c.l.b16 %v215
      %v456 = vunpack.c.h.b16 %v215
      %v457 = vunpack.c.l.b16 %v216
      %v458 = vunpack.c.h.b16 %v216
      %v459 = vunpack.c.l.b16 %v217
      %v460 = vunpack.c.h.b16 %v217
      %v461 = vunpack.c.l.b16 %v218
      %v462 = vunpack.c.h.b16 %v218
      %v463 = vunpack.c.l.b16 %v219
      %v464 = vunpack.c.h.b16 %v219
      %v465 = vunpack.c.l.b16 %v220
      %v466 = vunpack.c.h.b16 %v220
      %v467 = vunpack.c.l.b16 %v221
      %v468 = vunpack.c.h.b16 %v221
      %v469 = vunpack.c.l.b16 %v222
      %v470 = vunpack.c.h.b16 %v222
      %v471 = vunpack.c.l.b16 %v223
      %v472 = vunpack.c.h.b16 %v223
      %v473 = vunpack.c.l.b16 %v224
      %v474 = vunpack.c.h.b16 %v224
      %v475 = vunpack.c.l.b16 %v225
      %v476 = vunpack.c.h.b16 %v225
      %v477 = vunpack.c.l.b16 %v226
      %v478 = vunpack.c.h.b16 %v226
      %v479 = vunpack.c.l.b16 %v227
      %v480 = vunpack.c.h.b16 %v227
      %v481 = vunpack.c.l.b16 %v228
      %v482 = vunpack.c.h.b16 %v228
      %v483 = vunpack.c.l.b16 %v229
      %v484 = vunpack.c.h.b16 %v229
      %v485 = vunpack.c.l.b16 %v230
      %v486 = vunpack.c.h.b16 %v230
      %v487 = vunpack.c.l.b16 %v231
      %v488 = vunpack.c.h.b16 %v231
      %v489 = vunpack.c.l.b16 %v232
      %v490 = vunpack.c.h.b16 %v232
      %v491 = vunpack.c.l.b16 %v233
      %v492 = vunpack.c.h.b16 %v233
      %v493 = vunpack.c.l.b16 %v234
      %v494 = vunpack.c.h.b16 %v234
      %v495 = vunpack.c.l.b16 %v235
      %v496 = vunpack.c.h.b16 %v235
      %v497 = vunpack.c.l.b16 %v236
      %v498 = vunpack.c.h.b16 %v236
      %v499 = vunpack.c.l.b16 %v237
      %v500 = vunpack.c.h.b16 %v237
      %v501 = vunpack.c.l.b16 %v238
      %v502 = vunpack.c.h.b16 %v238
      %v503 = vunpack.c.l.b16 %v239
      %v504 = vunpack.c.h.b16 %v239
      %v505 = vunpack.c.l.b16 %v240
      %v506 = vunpack.c.h.b16 %v240
      %v507 = vunpack.c.l.b16 %v241
      %v508 = vunpack.c.h.b16 %v241
      %v509 = vunpack.c.l.b16 %v242
      %v510 = vunpack.c.h.b16 %v242
      %v511 = vunpack.c.l.b16 %v243
      %v512 = vunpack.c.h.b16 %v243
      %v513 = vunpack.c.l.b16 %v244
      %v514 = vunpack.c.h.b16 %v244
      %v515 = vunpack.c.l.b16 %v245
      %v516 = vunpack.c.h.b16 %v245
      %v517 = vunpack.c.l.b16 %v246
      %v518 = vunpack.c.h.b16 %v246
      %v519 = vunpack.c.l.b16 %v247
      %v520 = vunpack.c.h.b16 %v247
      %v521 = vunpack.c.l.b16 %v248
      %v522 = vunpack.c.h.b16 %v248
      %v523 = vunpack.c.l.b16 %v249
      %v524 = vunpack.c.h.b16 %v249
      %v525 = vunpack.c.l.b16 %v250
      %v526 = vunpack.c.h.b16 %v250
      %v527 = vunpack.c.l.b16 %v251
      %v528 = vunpack.c.h.b16 %v251
      %v529 = vunpack.c.l.b16 %v252
      %v530 = vunpack.c.h.b16 %v252
      %v531 = vunpack.c.l.b16 %v253
      %v532 = vunpack.c.h.b16 %v253
      %v533 = vunpack.c.l.b16 %v254
      %v534 = vunpack.c.h.b16 %v254
      %v535 = vunpack.c.l.b16 %v255
      %v536 = vunpack.c.h.b16 %v255
      %v537 = vunpack.c.l.b16 %v256
      %v538 = vunpack.c.h.b16 %v256
      %v539 = vunpack.c.l.b16 %v257
      %v540 = vunpack.c.h.b16 %v257
      %v541 = vunpack.c.l.b16 %v258
      %v542 = vunpack.c.h.b16 %v258
      %v543 = vpack.c.b16 %v417, %v415
      %v544 = vpack.c.b16 %v418, %v416
      %v545 = vpack.c.b16 %v421, %v419
      %v546 = vpack.c.b16 %v422, %v420
      %v547 = vpack.c.b16 %v425, %v423
      %v548 = vpack.c.b16 %v426, %v424
      %v549 = vpack.c.b16 %v429, %v427
      %v550 = vpack.c.b16 %v430, %v428
      %v551 = vpack.c.b16 %v433, %v431
      %v552 = vpack.c.b16 %v434, %v432
      %v553 = vpack.c.b16 %v437, %v435
      %v554 = vpack.c.b16 %v438, %v436
      %v555 = vpack.c.b16 %v441, %v439
      %v556 = vpack.c.b16 %v442, %v440
      %v557 = vpack.c.b16 %v445, %v443
      %v558 = vpack.c.b16 %v446, %v444
      %v559 = vpack.c.b16 %v449, %v447
      %v560 = vpack.c.b16 %v450, %v448
      %v561 = vpack.c.b16 %v453, %v451
      %v562 = vpack.c.b16 %v454, %v452
      %v563 = vpack.c.b16 %v457, %v455
      %v564 = vpack.c.b16 %v458, %v456
      %v565 = vpack.c.b16 %v461, %v459
      %v566 = vpack.c.b16 %v462, %v460
      %v567 = vpack.c.b16 %v465, %v463
      %v568 = vpack.c.b16 %v466, %v464
      %v569 = vpack.c.b16 %v469, %v467
      %v570 = vpack.c.b16 %v470, %v468
      %v571 = vpack.c.b16 %v473, %v471
      %v572 = vpack.c.b16 %v474, %v472
      %v573 = vpack.c.b16 %v477, %v475
      %v574 = vpack.c.b16 %v478, %v476
      %v575 = vpack.c.b16 %v481, %v479
      %v576 = vpack.c.b16 %v482, %v480
      %v577 = vpack.c.b16 %v485, %v483
      %v578 = vpack.c.b16 %v486, %v484
      %v579 = vpack.c.b16 %v489, %v487
      %v580 = vpack.c.b16 %v490, %v488
      %v581 = vpack.c.b16 %v493, %v491
      %v582 = vpack.c.b16 %v494, %v492
      %v583 = vpack.c.b16 %v497, %v495
      %v584 = vpack.c.b16 %v498, %v496
      %v585 = vpack.c.b16 %v501, %v499
      %v586 = vpack.c.b16 %v502, %v500
      %v587 = vpack.c.b16 %v505, %v503
      %v588 = vpack.c.b16 %v506, %v504
      %v589 = vpack.c.b16 %v509, %v507
      %v590 = vpack.c.b16 %v510, %v508
      %v591 = vpack.c.b16 %v513, %v511
      %v592 = vpack.c.b16 %v514, %v512
      %v593 = vpack.c.b16 %v517, %v515
      %v594 = vpack.c.b16 %v518, %v516
      %v595 = vpack.c.b16 %v521, %v519
      %v596 = vpack.c.b16 %v522, %v520
      %v597 = vpack.c.b16 %v525, %v523
      %v598 = vpack.c.b16 %v526, %v524
      %v599 = vpack.c.b16 %v529, %v527
      %v600 = vpack.c.b16 %v530, %v528
      %v601 = vpack.c.b16 %v533, %v531
      %v602 = vpack.c.b16 %v534, %v532
      %v603 = vpack.c.b16 %v537, %v535
      %v604 = vpack.c.b16 %v538, %v536
      %v605 = vpack.c.b16 %v541, %v539
      %v606 = vpack.c.b16 %v542, %v540
      %671 = vmatprep.subr.bf16.mxu0 %v558
      %672 = vmatpush1.bf16.msra.mxu0 %v557
      %673 = vmatprep.subr.bf16.mxu0 %v556
      %674 = vmatpush1.bf16.msra.mxu0 %v555
      %675 = vmatprep.subr.bf16.mxu0 %v554
      %676 = vmatpush1.bf16.msra.mxu0 %v553
      %677 = vmatprep.subr.bf16.mxu0 %v552
      %678 = vmatpush1.bf16.msra.mxu0 %v551
      %679 = vmatprep.subr.bf16.mxu0 %v550
      %680 = vmatpush1.bf16.msra.mxu0 %v549
      %681 = vmatprep.subr.bf16.mxu0 %v548
      %682 = vmatpush1.bf16.msra.mxu0 %v547
      %683 = vmatprep.subr.bf16.mxu0 %v546
      %684 = vmatpush1.bf16.msra.mxu0 %v545
      %685 = vmatprep.subr.bf16.mxu0 %v544
      %686 = vmatpush1.bf16.msra.mxu0 %v543
      %687 = vmatprep.subr.bf16.mxu0 %v574
      %688 = vmatpush2.bf16.msra.mxu0 %v573
      %689 = vmatprep.subr.bf16.mxu0 %v572
      %690 = vmatpush2.bf16.msra.mxu0 %v571
      %691 = vmatprep.subr.bf16.mxu0 %v570
      %692 = vmatpush2.bf16.msra.mxu0 %v569
      %693 = vmatprep.subr.bf16.mxu0 %v568
      %694 = vmatpush2.bf16.msra.mxu0 %v567
      %695 = vmatprep.subr.bf16.mxu0 %v566
      %696 = vmatpush2.bf16.msra.mxu0 %v565
      %697 = vmatprep.subr.bf16.mxu0 %v564
      %698 = vmatpush2.bf16.msra.mxu0 %v563
      %699 = vmatprep.subr.bf16.mxu0 %v562
      %700 = vmatpush2.bf16.msra.mxu0 %v561
      %701 = vmatprep.subr.bf16.mxu0 %v560
      %702 = vmatpush2.bf16.msra.mxu0 %v559
      %703 = vmatprep.mubr.bf16.mxu0 %v320
      %704 = vmatmul.mubr.bf16.gmra.mxu0 %v319
      %v705 = vpop.f32.mrf.mxu0
      %v706 = vadd.f32 %v264, %v705
      %v707 = vpop.f32.mrf.mxu0
      %v708 = vadd.f32 %v268, %v707
      %v709 = vpop.f32.mrf.mxu0
      %v710 = vadd.f32 %v264, %v709
      %v711 = vpop.f32.mrf.mxu0
      %v712 = vadd.f32 %v268, %v711
      %713 = vmatprep.mubr.bf16.mxu0 %v324
      %714 = vmatmul.mubr.bf16.gmra.mxu0 %v323
      %v715 = vpop.f32.mrf.mxu0
      %v716 = vadd.f32 %v264, %v715
      %v717 = vpop.f32.mrf.mxu0
      %v718 = vadd.f32 %v268, %v717
      %v719 = vpop.f32.mrf.mxu0
      %v720 = vadd.f32 %v264, %v719
      %v721 = vpop.f32.mrf.mxu0
      %v722 = vadd.f32 %v268, %v721
      %723 = vmatprep.mubr.bf16.mxu0 %v328
      %724 = vmatmul.mubr.bf16.gmra.mxu0 %v327
      %v725 = vpop.f32.mrf.mxu0
      %v726 = vadd.f32 %v264, %v725
      %v727 = vpop.f32.mrf.mxu0
      %v728 = vadd.f32 %v268, %v727
      %v729 = vpop.f32.mrf.mxu0
      %v730 = vadd.f32 %v264, %v729
      %v731 = vpop.f32.mrf.mxu0
      %v732 = vadd.f32 %v268, %v731
      %733 = vmatprep.mubr.bf16.mxu0 %v332
      %734 = vmatmul.mubr.bf16.gmra.mxu0 %v331
      %v735 = vpop.f32.mrf.mxu0
      %v736 = vadd.f32 %v264, %v735
      %v737 = vpop.f32.mrf.mxu0
      %v738 = vadd.f32 %v268, %v737
      %v739 = vpop.f32.mrf.mxu0
      %v740 = vadd.f32 %v264, %v739
      %v741 = vpop.f32.mrf.mxu0
      %v742 = vadd.f32 %v268, %v741
      %743 = vdwg.mxu0
      %744 = vmatprep.subr.bf16.mxu0 %v590
      %745 = vmatpush1.bf16.msra.mxu0 %v589
      %746 = vmatprep.subr.bf16.mxu0 %v588
      %747 = vmatpush1.bf16.msra.mxu0 %v587
      %748 = vmatprep.subr.bf16.mxu0 %v586
      %749 = vmatpush1.bf16.msra.mxu0 %v585
      %750 = vmatprep.subr.bf16.mxu0 %v584
      %751 = vmatpush1.bf16.msra.mxu0 %v583
      %752 = vmatprep.subr.bf16.mxu0 %v582
      %753 = vmatpush1.bf16.msra.mxu0 %v581
      %754 = vmatprep.subr.bf16.mxu0 %v580
      %755 = vmatpush1.bf16.msra.mxu0 %v579
      %756 = vmatprep.subr.bf16.mxu0 %v578
      %757 = vmatpush1.bf16.msra.mxu0 %v577
      %758 = vmatprep.subr.bf16.mxu0 %v576
      %759 = vmatpush1.bf16.msra.mxu0 %v575
      %760 = vmatprep.subr.bf16.mxu0 %v606
      %761 = vmatpush2.bf16.msra.mxu0 %v605
      %762 = vmatprep.subr.bf16.mxu0 %v604
      %763 = vmatpush2.bf16.msra.mxu0 %v603
      %764 = vmatprep.subr.bf16.mxu0 %v602
      %765 = vmatpush2.bf16.msra.mxu0 %v601
      %766 = vmatprep.subr.bf16.mxu0 %v600
      %767 = vmatpush2.bf16.msra.mxu0 %v599
      %768 = vmatprep.subr.bf16.mxu0 %v598
      %769 = vmatpush2.bf16.msra.mxu0 %v597
      %770 = vmatprep.subr.bf16.mxu0 %v596
      %771 = vmatpush2.bf16.msra.mxu0 %v595
      %772 = vmatprep.subr.bf16.mxu0 %v594
      %773 = vmatpush2.bf16.msra.mxu0 %v593
      %774 = vmatprep.subr.bf16.mxu0 %v592
      %775 = vmatpush2.bf16.msra.mxu0 %v591
      %776 = vmatprep.mubr.bf16.mxu0 %v322
      %777 = vmatmul.mubr.bf16.gmra.mxu0 %v321
      %v778 = vpop.f32.mrf.mxu0
      %v779 = vadd.f32 %v706, %v778
      %v780 = vpop.f32.mrf.mxu0
      %v781 = vadd.f32 %v708, %v780
      %v782 = vpop.f32.mrf.mxu0
      %v783 = vadd.f32 %v710, %v782
      %v784 = vpop.f32.mrf.mxu0
      %v785 = vadd.f32 %v712, %v784
      %786 = vmatprep.mubr.bf16.mxu0 %v326
      %787 = vmatmul.mubr.bf16.gmra.mxu0 %v325
      %v788 = vpop.f32.mrf.mxu0
      %v789 = vadd.f32 %v716, %v788
      %v790 = vpop.f32.mrf.mxu0
      %v791 = vadd.f32 %v718, %v790
      %v792 = vpop.f32.mrf.mxu0
      %v793 = vadd.f32 %v720, %v792
      %v794 = vpop.f32.mrf.mxu0
      %v795 = vadd.f32 %v722, %v794
      %796 = vmatprep.mubr.bf16.mxu0 %v330
      %797 = vmatmul.mubr.bf16.gmra.mxu0 %v329
      %v798 = vpop.f32.mrf.mxu0
      %v799 = vadd.f32 %v726, %v798
      %v800 = vpop.f32.mrf.mxu0
      %v801 = vadd.f32 %v728, %v800
      %v802 = vpop.f32.mrf.mxu0
      %v803 = vadd.f32 %v730, %v802
      %v804 = vpop.f32.mrf.mxu0
      %v805 = vadd.f32 %v732, %v804
      %806 = vmatprep.mubr.bf16.mxu0 %v334
      %807 = vmatmul.mubr.bf16.gmra.mxu0 %v333
      %v808 = vpop.f32.mrf.mxu0
      %v809 = vadd.f32 %v736, %v808
      %v810 = vpop.f32.mrf.mxu0
      %v811 = vadd.f32 %v738, %v810
      %v812 = vpop.f32.mrf.mxu0
      %v813 = vadd.f32 %v740, %v812
      %v814 = vpop.f32.mrf.mxu0
      %v815 = vadd.f32 %v742, %v814
      %816 = vdwg.mxu0
      %v817 = vmax.f32 %v779, 0.0
      %v818 = vmax.f32 %v781, 0.0
      %v819 = vmax.f32 %v783, 0.0
      %v820 = vmax.f32 %v785, 0.0
      %v821 = vmax.f32 %v789, 0.0
      %v822 = vmax.f32 %v791, 0.0
      %v823 = vmax.f32 %v793, 0.0
      %v824 = vmax.f32 %v795, 0.0
      %v825 = vmax.f32 %v799, 0.0
      %v826 = vmax.f32 %v801, 0.0
      %v827 = vmax.f32 %v803, 0.0
      %v828 = vmax.f32 %v805, 0.0
      %v829 = vmax.f32 %v809, 0.0
      %v830 = vmax.f32 %v811, 0.0
      %v831 = vmax.f32 %v813, 0.0
      %v832 = vmax.f32 %v815, 0.0
      %v833 = vpack.c.bf16 %v819, %v817
      %v834 = vpack.c.bf16 %v820, %v818
      %v835 = vpack.c.bf16 %v823, %v821
      %v836 = vpack.c.bf16 %v824, %v822
      %v837 = vpack.c.bf16 %v827, %v825
      %v838 = vpack.c.bf16 %v828, %v826
      %v839 = vpack.c.bf16 %v831, %v829
      %v840 = vpack.c.bf16 %v832, %v830
      %v849 = vunpack.c.l.b16 %v833
      %v850 = vunpack.c.l.b16 %v834
      %v851 = vunpack.c.h.b16 %v833
      %v852 = vunpack.c.h.b16 %v834
      %v853 = vunpack.c.l.b16 %v835
      %v854 = vunpack.c.l.b16 %v836
      %v855 = vunpack.c.h.b16 %v835
      %v856 = vunpack.c.h.b16 %v836
      %v857 = vunpack.c.l.b16 %v837
      %v858 = vunpack.c.l.b16 %v838
      %v859 = vunpack.c.h.b16 %v837
      %v860 = vunpack.c.h.b16 %v838
      %v861 = vunpack.c.l.b16 %v839
      %v862 = vunpack.c.l.b16 %v840
      %v863 = vunpack.c.h.b16 %v839
      %v864 = vunpack.c.h.b16 %v840
      %v865 = vpack.c.b16 %v850, %v849
      %v866 = vpack.c.b16 %v852, %v851
      %v867 = vpack.c.b16 %v854, %v853
      %v868 = vpack.c.b16 %v856, %v855
      %v869 = vpack.c.b16 %v858, %v857
      %v870 = vpack.c.b16 %v860, %v859
      %v871 = vpack.c.b16 %v862, %v861
      %v872 = vpack.c.b16 %v864, %v863
      %881 = vst [vmem:[%s177] sm:$0xff] %v865
      %882 = vst [vmem:[%s177 + $0x8] sm:$0xff] %v866
      %883 = vst [vmem:[%s177 + $0x10] sm:$0xff] %v867
      %884 = vst [vmem:[%s177 + $0x18] sm:$0xff] %v868
      %885 = vst [vmem:[%s177 + $0x20] sm:$0xff] %v869
      %886 = vst [vmem:[%s177 + $0x28] sm:$0xff] %v870
      %887 = vst [vmem:[%s177 + $0x30] sm:$0xff] %v871
      %888 = vst [vmem:[%s177 + $0x38] sm:$0xff] %v872
      %s889 = smul.u32 8, %s14
      %p890 = scmp.lt.s32.totalorder %s889, 15
      %s891 = scalar_select %p890, %s889, 15
      %s892 = smul.addr %s891, 2
      %s893 = smul.addr %s892, 4
      %s894 = scalar_lea.vmem %s3, %s893
      // Predicated region
      $region33: #{decoder_forward.7} parent=31 // pred_check
        %p895 = pneg %p100
      $region34: #{decoder_forward.7} parent=31 // pred_check_branch
        %897 = sbr.rel (%p895) target = $region36
      $region35: #{decoder_forward.7} parent=31 // pred_region
        %s898 = smul.u32 8, %s14
      $region36: #{decoder_forward.7} parent=31 // pred_fallthru
        _
    $region32: #{decoder_forward.7} parent=5 // pred_fallthru
      _
    %p899 = scmp.le.s32.totalorder 2, %s9
    // Predicated region
    $region37: #{decoder_forward.7} parent=5 // pred_check
      %p900 = pneg %p899
    $region38: #{decoder_forward.7} parent=5 // pred_check_branch
      %902 = sbr.rel (%p900) target = $region40
    $region39: #{decoder_forward.7} parent=5 // pred_region
      %s903 = ssub.s32 %s9, 2
      // Predicated region
      $region41: #{decoder_forward.7} parent=39 // pred_check
        %p904 = pneg %p106
      $region42: #{decoder_forward.7} parent=39 // pred_check_branch
        %906 = sbr.rel (%p904) target = $region44
      $region43: #{decoder_forward.7} parent=39 // pred_region
        %s907 = smul.u32 8, %s15
        %p908 = scmp.lt.s32.totalorder %s907, 15
        %s909 = scalar_select %p908, %s907, 15
        %s910 = smul.addr %s909, 2
        %s911 = smul.addr %s910, 4
        %s912 = scalar_lea.vmem %s3, %s911
      $region44: #{decoder_forward.7} parent=39 // pred_fallthru
        _
    $region40: #{decoder_forward.7} parent=5 // pred_fallthru
      _
  $region6: #{decoder_forward.7} parent=0 // loop_footer
    %s13 = sadd.s32 1, %s9
  $region7: #{decoder_forward.7} parent=0 // loop_footer_branch
    %8 = sbr.rel target = $region3
  $region8: #{decoder_forward.7} parent=0 // loop_exit
    _

// kernel: decoder_forward.6
$region0: #{decoder_forward.6}
  #allocation0 [shape = 'u32[]', space=smem, size = 0x4, offset = 0x4, fixed_abs, tag = 'smem constant byte address 0x4 - core index']
  #allocation1 [shape = 'u32[144,128]{1,0:T(1,128)}', space=vmem, size = 0x12000, scoped, tag = 'internal scratch']
  %s0 = inlined_call_operand.vmem [shape: bf16[32,1024], index: 0, kind: input, shape index: {}]
  %s1 = inlined_call_operand.hbm [shape: bf16[1024,512], index: 1, kind: input, shape index: {}]
  %s2 = inlined_call_operand.hbm [shape: f32[1,512], index: 2, kind: input, shape index: {}]
  %s3 = inlined_call_operand.vmem [shape: bf16[32,512], index: 3, kind: output, shape index: {}]
  %s4 = sld [smem:[#allocation0]]
  $region30: #{decoder_forward.6} parent=0
    _
  %s6 = ssub.s32 1, %s4
  %s7 = scalar_select 0, %s6, %s4
  $region1: #{decoder_forward.6} parent=0
    #allocation2 [shape = 'u8[1048576]{0}', space=vmem, size = 0x100000, scoped, tag = 'input window, operand 1, single buffered']
    #allocation3 [shape = 's32[1]{0}', space=sflag, size = 0x4, scoped, tag = 'scoped memory for decoder_forward.6']
    #allocation4 [shape = 'u8[2048]{0}', space=vmem, size = 0x800, scoped, tag = 'input window, operand 2, single buffered']
    #allocation5 [shape = 's32[1]{0}', space=sflag, size = 0x4, scoped, tag = 'scoped memory for decoder_forward.6']
    %8 = vsyncpa [#allocation3], 0
    %9 = vsyncpa [#allocation5], 0
    // Predicated region
    $region2: #{decoder_forward.6} parent=1 // pred_check
      _
    $region3: #{decoder_forward.6} parent=1 // pred_check_branch
      %11 = sbr.rel (0) target = $region5
    $region4: #{decoder_forward.6} parent=1 // pred_region
      _
    $region5: #{decoder_forward.6} parent=1 // pred_fallthru
      _
    // Predicated region
    $region6: #{decoder_forward.6} parent=1 // pred_check
      _
    $region7: #{decoder_forward.6} parent=1 // pred_check_branch
      %13 = sbr.rel (0) target = $region9
    $region8: #{decoder_forward.6} parent=1 // pred_region
      %s15 = ssub.s32 32768, 32768
      %16 = vsyncadd [#allocation3], %s15
      %s17 = sshll.u32 [#allocation2], 4
      %s18 = int_to_ptr.vmem [resolvable:$true] %s17
      %23 = dma.hbm_to_vmem [thread:$0]  %s1, 32768, %s18, [#allocation3], 256, 256, 16
    $region9: #{decoder_forward.6} parent=1 // pred_fallthru
      _
    // Predicated region
    $region10: #{decoder_forward.6} parent=1 // pred_check
      _
    $region11: #{decoder_forward.6} parent=1 // pred_check_branch
      %25 = sbr.rel (0) target = $region13
    $region12: #{decoder_forward.6} parent=1 // pred_region
      %s27 = ssub.s32 64, 64
      %28 = vsyncadd [#allocation5], %s27
      %s30 = sshll.u32 [#allocation4], 4
      %s31 = int_to_ptr.vmem [resolvable:$true] %s30
      %33 = dma.hbm_to_vmem [thread:$0]  %s2, 64, %s31, [#allocation5]
    $region13: #{decoder_forward.6} parent=1 // pred_fallthru
      _
    // Predicated region
    $region14: #{decoder_forward.6} parent=1 // pred_check
      _
    $region15: #{decoder_forward.6} parent=1 // pred_check_branch
      %35 = sbr.rel (0) target = $region17
    $region16: #{decoder_forward.6} parent=1 // pred_region
      %36 = dma.done [#allocation3], 32768
    $region17: #{decoder_forward.6} parent=1 // pred_fallthru
      _
    // Predicated region
    $region18: #{decoder_forward.6} parent=1 // pred_check
      _
    $region19: #{decoder_forward.6} parent=1 // pred_check_branch
      %38 = sbr.rel (0) target = $region21
    $region20: #{decoder_forward.6} parent=1 // pred_region
      %39 = dma.done [#allocation5], 64
    $region21: #{decoder_forward.6} parent=1 // pred_fallthru
      _
    %v40 = vld [vmem:[%s0] sm:$0xff]
    %v41 = vld [vmem:[%s0 + $0x8] sm:$0xff]
    %v42 = vld [vmem:[%s0 + $0x10] sm:$0xff]
    %v43 = vld [vmem:[%s0 + $0x18] sm:$0xff]
    %v44 = vld [vmem:[%s0 + $0x20] sm:$0xff]
    %v45 = vld [vmem:[%s0 + $0x28] sm:$0xff]
    %v46 = vld [vmem:[%s0 + $0x30] sm:$0xff]
    %v47 = vld [vmem:[%s0 + $0x38] sm:$0xff]
    %v48 = vld [vmem:[%s0 + $0x40] sm:$0xff]
    %v49 = vld [vmem:[%s0 + $0x48] sm:$0xff]
    %v50 = vld [vmem:[%s0 + $0x50] sm:$0xff]
    %v51 = vld [vmem:[%s0 + $0x58] sm:$0xff]
    %v52 = vld [vmem:[%s0 + $0x60] sm:$0xff]
    %v53 = vld [vmem:[%s0 + $0x68] sm:$0xff]
    %v54 = vld [vmem:[%s0 + $0x70] sm:$0xff]
    %v55 = vld [vmem:[%s0 + $0x78] sm:$0xff]
    %v56 = vld [vmem:[#allocation2] sm:$0xff]
    %v57 = vld [vmem:[#allocation2 + $0x8] sm:$0xff]
    %v58 = vld [vmem:[#allocation2 + $0x10] sm:$0xff]
    %v59 = vld [vmem:[#allocation2 + $0x18] sm:$0xff]
    %v60 = vld [vmem:[#allocation2 + $0x20] sm:$0xff]
    %v61 = vld [vmem:[#allocation2 + $0x28] sm:$0xff]
    %v62 = vld [vmem:[#allocation2 + $0x30] sm:$0xff]
    %v63 = vld [vmem:[#allocation2 + $0x38] sm:$0xff]
    %v64 = vld [vmem:[#allocation2 + $0x40] sm:$0xff]
    %v65 = vld [vmem:[#allocation2 + $0x48] sm:$0xff]
    %v66 = vld [vmem:[#allocation2 + $0x50] sm:$0xff]
    %v67 = vld [vmem:[#allocation2 + $0x58] sm:$0xff]
    %v68 = vld [vmem:[#allocation2 + $0x60] sm:$0xff]
    %v69 = vld [vmem:[#allocation2 + $0x68] sm:$0xff]
    %v70 = vld [vmem:[#allocation2 + $0x70] sm:$0xff]
    %v71 = vld [vmem:[#allocation2 + $0x78] sm:$0xff]
    %v72 = vld [vmem:[#allocation2 + $0x80] sm:$0xff]
    %v73 = vld [vmem:[#allocation2 + $0x88] sm:$0xff]
    %v74 = vld [vmem:[#allocation2 + $0x90] sm:$0xff]
    %v75 = vld [vmem:[#allocation2 + $0x98] sm:$0xff]
    %v76 = vld [vmem:[#allocation2 + $0xa0] sm:$0xff]
    %v77 = vld [vmem:[#allocation2 + $0xa8] sm:$0xff]
    %v78 = vld [vmem:[#allocation2 + $0xb0] sm:$0xff]
    %v79 = vld [vmem:[#allocation2 + $0xb8] sm:$0xff]
    %v80 = vld [vmem:[#allocation2 + $0xc0] sm:$0xff]
    %v81 = vld [vmem:[#allocation2 + $0xc8] sm:$0xff]
    %v82 = vld [vmem:[#allocation2 + $0xd0] sm:$0xff]
    %v83 = vld [vmem:[#allocation2 + $0xd8] sm:$0xff]
    %v84 = vld [vmem:[#allocation2 + $0xe0] sm:$0xff]
    %v85 = vld [vmem:[#allocation2 + $0xe8] sm:$0xff]
    %v86 = vld [vmem:[#allocation2 + $0xf0] sm:$0xff]
    %v87 = vld [vmem:[#allocation2 + $0xf8] sm:$0xff]
    %v88 = vld [vmem:[#allocation2 + $0x100] sm:$0xff]
    %v89 = vld [vmem:[#allocation2 + $0x108] sm:$0xff]
    %v90 = vld [vmem:[#allocation2 + $0x110] sm:$0xff]
    %v91 = vld [vmem:[#allocation2 + $0x118] sm:$0xff]
    %v92 = vld [vmem:[#allocation2 + $0x120] sm:$0xff]
    %v93 = vld [vmem:[#allocation2 + $0x128] sm:$0xff]
    %v94 = vld [vmem:[#allocation2 + $0x130] sm:$0xff]
    %v95 = vld [vmem:[#allocation2 + $0x138] sm:$0xff]
    %v96 = vld [vmem:[#allocation2 + $0x140] sm:$0xff]
    %v97 = vld [vmem:[#allocation2 + $0x148] sm:$0xff]
    %v98 = vld [vmem:[#allocation2 + $0x150] sm:$0xff]
    %v99 = vld [vmem:[#allocation2 + $0x158] sm:$0xff]
    %v100 = vld [vmem:[#allocation2 + $0x160] sm:$0xff]
    %v101 = vld [vmem:[#allocation2 + $0x168] sm:$0xff]
    %v102 = vld [vmem:[#allocation2 + $0x170] sm:$0xff]
    %v103 = vld [vmem:[#allocation2 + $0x178] sm:$0xff]
    %v104 = vld [vmem:[#allocation2 + $0x180] sm:$0xff]
    %v105 = vld [vmem:[#allocation2 + $0x188] sm:$0xff]
    %v106 = vld [vmem:[#allocation2 + $0x190] sm:$0xff]
    %v107 = vld [vmem:[#allocation2 + $0x198] sm:$0xff]
    %v108 = vld [vmem:[#allocation2 + $0x1a0] sm:$0xff]
    %v109 = vld [vmem:[#allocation2 + $0x1a8] sm:$0xff]
    %v110 = vld [vmem:[#allocation2 + $0x1b0] sm:$0xff]
    %v111 = vld [vmem:[#allocation2 + $0x1b8] sm:$0xff]
    %v112 = vld [vmem:[#allocation2 + $0x1c0] sm:$0xff]
    %v113 = vld [vmem:[#allocation2 + $0x1c8] sm:$0xff]
    %v114 = vld [vmem:[#allocation2 + $0x1d0] sm:$0xff]
    %v115 = vld [vmem:[#allocation2 + $0x1d8] sm:$0xff]
    %v116 = vld [vmem:[#allocation2 + $0x1e0] sm:$0xff]
    %v117 = vld [vmem:[#allocation2 + $0x1e8] sm:$0xff]
    %v118 = vld [vmem:[#allocation2 + $0x1f0] sm:$0xff]
    %v119 = vld [vmem:[#allocation2 + $0x1f8] sm:$0xff]
    %v120 = vld [vmem:[#allocation2 + $0x200] sm:$0xff]
    %v121 = vld [vmem:[#allocation2 + $0x208] sm:$0xff]
    %v122 = vld [vmem:[#allocation2 + $0x210] sm:$0xff]
    %v123 = vld [vmem:[#allocation2 + $0x218] sm:$0xff]
    %v124 = vld [vmem:[#allocation2 + $0x220] sm:$0xff]
    %v125 = vld [vmem:[#allocation2 + $0x228] sm:$0xff]
    %v126 = vld [vmem:[#allocation2 + $0x230] sm:$0xff]
    %v127 = vld [vmem:[#allocation2 + $0x238] sm:$0xff]
    %v128 = vld [vmem:[#allocation2 + $0x240] sm:$0xff]
    %v129 = vld [vmem:[#allocation2 + $0x248] sm:$0xff]
    %v130 = vld [vmem:[#allocation2 + $0x250] sm:$0xff]
    %v131 = vld [vmem:[#allocation2 + $0x258] sm:$0xff]
    %v132 = vld [vmem:[#allocation2 + $0x260] sm:$0xff]
    %v133 = vld [vmem:[#allocation2 + $0x268] sm:$0xff]
    %v134 = vld [vmem:[#allocation2 + $0x270] sm:$0xff]
    %v135 = vld [vmem:[#allocation2 + $0x278] sm:$0xff]
    %v136 = vld [vmem:[#allocation2 + $0x280] sm:$0xff]
    %v137 = vld [vmem:[#allocation2 + $0x288] sm:$0xff]
    %v138 = vld [vmem:[#allocation2 + $0x290] sm:$0xff]
    %v139 = vld [vmem:[#allocation2 + $0x298] sm:$0xff]
    %v140 = vld [vmem:[#allocation2 + $0x2a0] sm:$0xff]
    %v141 = vld [vmem:[#allocation2 + $0x2a8] sm:$0xff]
    %v142 = vld [vmem:[#allocation2 + $0x2b0] sm:$0xff]
    %v143 = vld [vmem:[#allocation2 + $0x2b8] sm:$0xff]
    %v144 = vld [vmem:[#allocation2 + $0x2c0] sm:$0xff]
    %v145 = vld [vmem:[#allocation2 + $0x2c8] sm:$0xff]
    %v146 = vld [vmem:[#allocation2 + $0x2d0] sm:$0xff]
    %v147 = vld [vmem:[#allocation2 + $0x2d8] sm:$0xff]
    %v148 = vld [vmem:[#allocation2 + $0x2e0] sm:$0xff]
    %v149 = vld [vmem:[#allocation2 + $0x2e8] sm:$0xff]
    %v150 = vld [vmem:[#allocation2 + $0x2f0] sm:$0xff]
    %v151 = vld [vmem:[#allocation2 + $0x2f8] sm:$0xff]
    %v152 = vld [vmem:[#allocation2 + $0x300] sm:$0xff]
    %v153 = vld [vmem:[#allocation2 + $0x308] sm:$0xff]
    %v154 = vld [vmem:[#allocation2 + $0x310] sm:$0xff]
    %v155 = vld [vmem:[#allocation2 + $0x318] sm:$0xff]
    %v156 = vld [vmem:[#allocation2 + $0x320] sm:$0xff]
    %v157 = vld [vmem:[#allocation2 + $0x328] sm:$0xff]
    %v158 = vld [vmem:[#allocation2 + $0x330] sm:$0xff]
    %v159 = vld [vmem:[#allocation2 + $0x338] sm:$0xff]
    %v160 = vld [vmem:[#allocation2 + $0x340] sm:$0xff]
    %v161 = vld [vmem:[#allocation2 + $0x348] sm:$0xff]
    %v162 = vld [vmem:[#allocation2 + $0x350] sm:$0xff]
    %v163 = vld [vmem:[#allocation2 + $0x358] sm:$0xff]
    %v164 = vld [vmem:[#allocation2 + $0x360] sm:$0xff]
    %v165 = vld [vmem:[#allocation2 + $0x368] sm:$0xff]
    %v166 = vld [vmem:[#allocation2 + $0x370] sm:$0xff]
    %v167 = vld [vmem:[#allocation2 + $0x378] sm:$0xff]
    %v168 = vld [vmem:[#allocation2 + $0x380] sm:$0xff]
    %v169 = vld [vmem:[#allocation2 + $0x388] sm:$0xff]
    %v170 = vld [vmem:[#allocation2 + $0x390] sm:$0xff]
    %v171 = vld [vmem:[#allocation2 + $0x398] sm:$0xff]
    %v172 = vld [vmem:[#allocation2 + $0x3a0] sm:$0xff]
    %v173 = vld [vmem:[#allocation2 + $0x3a8] sm:$0xff]
    %v174 = vld [vmem:[#allocation2 + $0x3b0] sm:$0xff]
    %v175 = vld [vmem:[#allocation2 + $0x3b8] sm:$0xff]
    %v176 = vld [vmem:[#allocation2 + $0x3c0] sm:$0xff]
    %v177 = vld [vmem:[#allocation2 + $0x3c8] sm:$0xff]
    %v178 = vld [vmem:[#allocation2 + $0x3d0] sm:$0xff]
    %v179 = vld [vmem:[#allocation2 + $0x3d8] sm:$0xff]
    %v180 = vld [vmem:[#allocation2 + $0x3e0] sm:$0xff]
    %v181 = vld [vmem:[#allocation2 + $0x3e8] sm:$0xff]
    %v182 = vld [vmem:[#allocation2 + $0x3f0] sm:$0xff]
    %v183 = vld [vmem:[#allocation2 + $0x3f8] sm:$0xff]
    %v184 = vld [vmem:[#allocation2 + $0x400] sm:$0xff]
    %v185 = vld [vmem:[#allocation2 + $0x408] sm:$0xff]
    %v186 = vld [vmem:[#allocation2 + $0x410] sm:$0xff]
    %v187 = vld [vmem:[#allocation2 + $0x418] sm:$0xff]
    %v188 = vld [vmem:[#allocation2 + $0x420] sm:$0xff]
    %v189 = vld [vmem:[#allocation2 + $0x428] sm:$0xff]
    %v190 = vld [vmem:[#allocation2 + $0x430] sm:$0xff]
    %v191 = vld [vmem:[#allocation2 + $0x438] sm:$0xff]
    %v192 = vld [vmem:[#allocation2 + $0x440] sm:$0xff]
    %v193 = vld [vmem:[#allocation2 + $0x448] sm:$0xff]
    %v194 = vld [vmem:[#allocation2 + $0x450] sm:$0xff]
    %v195 = vld [vmem:[#allocation2 + $0x458] sm:$0xff]
    %v196 = vld [vmem:[#allocation2 + $0x460] sm:$0xff]
    %v197 = vld [vmem:[#allocation2 + $0x468] sm:$0xff]
    %v198 = vld [vmem:[#allocation2 + $0x470] sm:$0xff]
    %v199 = vld [vmem:[#allocation2 + $0x478] sm:$0xff]
    %v200 = vld [vmem:[#allocation2 + $0x480] sm:$0xff]
    %v201 = vld [vmem:[#allocation2 + $0x488] sm:$0xff]
    %v202 = vld [vmem:[#allocation2 + $0x490] sm:$0xff]
    %v203 = vld [vmem:[#allocation2 + $0x498] sm:$0xff]
    %v204 = vld [vmem:[#allocation2 + $0x4a0] sm:$0xff]
    %v205 = vld [vmem:[#allocation2 + $0x4a8] sm:$0xff]
    %v206 = vld [vmem:[#allocation2 + $0x4b0] sm:$0xff]
    %v207 = vld [vmem:[#allocation2 + $0x4b8] sm:$0xff]
    %v208 = vld [vmem:[#allocation2 + $0x4c0] sm:$0xff]
    %v209 = vld [vmem:[#allocation2 + $0x4c8] sm:$0xff]
    %v210 = vld [vmem:[#allocation2 + $0x4d0] sm:$0xff]
    %v211 = vld [vmem:[#allocation2 + $0x4d8] sm:$0xff]
    %v212 = vld [vmem:[#allocation2 + $0x4e0] sm:$0xff]
    %v213 = vld [vmem:[#allocation2 + $0x4e8] sm:$0xff]
    %v214 = vld [vmem:[#allocation2 + $0x4f0] sm:$0xff]
    %v215 = vld [vmem:[#allocation2 + $0x4f8] sm:$0xff]
    %v216 = vld [vmem:[#allocation2 + $0x500] sm:$0xff]
    %v217 = vld [vmem:[#allocation2 + $0x508] sm:$0xff]
    %v218 = vld [vmem:[#allocation2 + $0x510] sm:$0xff]
    %v219 = vld [vmem:[#allocation2 + $0x518] sm:$0xff]
    %v220 = vld [vmem:[#allocation2 + $0x520] sm:$0xff]
    %v221 = vld [vmem:[#allocation2 + $0x528] sm:$0xff]
    %v222 = vld [vmem:[#allocation2 + $0x530] sm:$0xff]
    %v223 = vld [vmem:[#allocation2 + $0x538] sm:$0xff]
    %v224 = vld [vmem:[#allocation2 + $0x540] sm:$0xff]
    %v225 = vld [vmem:[#allocation2 + $0x548] sm:$0xff]
    %v226 = vld [vmem:[#allocation2 + $0x550] sm:$0xff]
    %v227 = vld [vmem:[#allocation2 + $0x558] sm:$0xff]
    %v228 = vld [vmem:[#allocation2 + $0x560] sm:$0xff]
    %v229 = vld [vmem:[#allocation2 + $0x568] sm:$0xff]
    %v230 = vld [vmem:[#allocation2 + $0x570] sm:$0xff]
    %v231 = vld [vmem:[#allocation2 + $0x578] sm:$0xff]
    %v232 = vld [vmem:[#allocation2 + $0x580] sm:$0xff]
    %v233 = vld [vmem:[#allocation2 + $0x588] sm:$0xff]
    %v234 = vld [vmem:[#allocation2 + $0x590] sm:$0xff]
    %v235 = vld [vmem:[#allocation2 + $0x598] sm:$0xff]
    %v236 = vld [vmem:[#allocation2 + $0x5a0] sm:$0xff]
    %v237 = vld [vmem:[#allocation2 + $0x5a8] sm:$0xff]
    %v238 = vld [vmem:[#allocation2 + $0x5b0] sm:$0xff]
    %v239 = vld [vmem:[#allocation2 + $0x5b8] sm:$0xff]
    %v240 = vld [vmem:[#allocation2 + $0x5c0] sm:$0xff]
    %v241 = vld [vmem:[#allocation2 + $0x5c8] sm:$0xff]
    %v242 = vld [vmem:[#allocation2 + $0x5d0] sm:$0xff]
    %v243 = vld [vmem:[#allocation2 + $0x5d8] sm:$0xff]
    %v244 = vld [vmem:[#allocation2 + $0x5e0] sm:$0xff]
    %v245 = vld [vmem:[#allocation2 + $0x5e8] sm:$0xff]
    %v246 = vld [vmem:[#allocation2 + $0x5f0] sm:$0xff]
    %v247 = vld [vmem:[#allocation2 + $0x5f8] sm:$0xff]
    %v248 = vld [vmem:[#allocation2 + $0x600] sm:$0xff]
    %v249 = vld [vmem:[#allocation2 + $0x608] sm:$0xff]
    %v250 = vld [vmem:[#allocation2 + $0x610] sm:$0xff]
    %v251 = vld [vmem:[#allocation2 + $0x618] sm:$0xff]
    %v252 = vld [vmem:[#allocation2 + $0x620] sm:$0xff]
    %v253 = vld [vmem:[#allocation2 + $0x628] sm:$0xff]
    %v254 = vld [vmem:[#allocation2 + $0x630] sm:$0xff]
    %v255 = vld [vmem:[#allocation2 + $0x638] sm:$0xff]
    %v256 = vld [vmem:[#allocation2 + $0x640] sm:$0xff]
    %v257 = vld [vmem:[#allocation2 + $0x648] sm:$0xff]
    %v258 = vld [vmem:[#allocation2 + $0x650] sm:$0xff]
    %v259 = vld [vmem:[#allocation2 + $0x658] sm:$0xff]
    %v260 = vld [vmem:[#allocation2 + $0x660] sm:$0xff]
    %v261 = vld [vmem:[#allocation2 + $0x668] sm:$0xff]
    %v262 = vld [vmem:[#allocation2 + $0x670] sm:$0xff]
    %v263 = vld [vmem:[#allocation2 + $0x678] sm:$0xff]
    %v264 = vld [vmem:[#allocation2 + $0x680] sm:$0xff]
    %v265 = vld [vmem:[#allocation2 + $0x688] sm:$0xff]
    %v266 = vld [vmem:[#allocation2 + $0x690] sm:$0xff]
    %v267 = vld [vmem:[#allocation2 + $0x698] sm:$0xff]
    %v268 = vld [vmem:[#allocation2 + $0x6a0] sm:$0xff]
    %v269 = vld [vmem:[#allocation2 + $0x6a8] sm:$0xff]
    %v270 = vld [vmem:[#allocation2 + $0x6b0] sm:$0xff]
    %v271 = vld [vmem:[#allocation2 + $0x6b8] sm:$0xff]
    %v272 = vld [vmem:[#allocation2 + $0x6c0] sm:$0xff]
    %v273 = vld [vmem:[#allocation2 + $0x6c8] sm:$0xff]
    %v274 = vld [vmem:[#allocation2 + $0x6d0] sm:$0xff]
    %v275 = vld [vmem:[#allocation2 + $0x6d8] sm:$0xff]
    %v276 = vld [vmem:[#allocation2 + $0x6e0] sm:$0xff]
    %v277 = vld [vmem:[#allocation2 + $0x6e8] sm:$0xff]
    %v278 = vld [vmem:[#allocation2 + $0x6f0] sm:$0xff]
    %v279 = vld [vmem:[#allocation2 + $0x6f8] sm:$0xff]
    %v280 = vld [vmem:[#allocation2 + $0x700] sm:$0xff]
    %v281 = vld [vmem:[#allocation2 + $0x708] sm:$0xff]
    %v282 = vld [vmem:[#allocation2 + $0x710] sm:$0xff]
    %v283 = vld [vmem:[#allocation2 + $0x718] sm:$0xff]
    %v284 = vld [vmem:[#allocation2 + $0x720] sm:$0xff]
    %v285 = vld [vmem:[#allocation2 + $0x728] sm:$0xff]
    %v286 = vld [vmem:[#allocation2 + $0x730] sm:$0xff]
    %v287 = vld [vmem:[#allocation2 + $0x738] sm:$0xff]
    %v288 = vld [vmem:[#allocation2 + $0x740] sm:$0xff]
    %v289 = vld [vmem:[#allocation2 + $0x748] sm:$0xff]
    %v290 = vld [vmem:[#allocation2 + $0x750] sm:$0xff]
    %v291 = vld [vmem:[#allocation2 + $0x758] sm:$0xff]
    %v292 = vld [vmem:[#allocation2 + $0x760] sm:$0xff]
    %v293 = vld [vmem:[#allocation2 + $0x768] sm:$0xff]
    %v294 = vld [vmem:[#allocation2 + $0x770] sm:$0xff]
    %v295 = vld [vmem:[#allocation2 + $0x778] sm:$0xff]
    %v296 = vld [vmem:[#allocation2 + $0x780] sm:$0xff]
    %v297 = vld [vmem:[#allocation2 + $0x788] sm:$0xff]
    %v298 = vld [vmem:[#allocation2 + $0x790] sm:$0xff]
    %v299 = vld [vmem:[#allocation2 + $0x798] sm:$0xff]
    %v300 = vld [vmem:[#allocation2 + $0x7a0] sm:$0xff]
    %v301 = vld [vmem:[#allocation2 + $0x7a8] sm:$0xff]
    %v302 = vld [vmem:[#allocation2 + $0x7b0] sm:$0xff]
    %v303 = vld [vmem:[#allocation2 + $0x7b8] sm:$0xff]
    %v304 = vld [vmem:[#allocation2 + $0x7c0] sm:$0xff]
    %v305 = vld [vmem:[#allocation2 + $0x7c8] sm:$0xff]
    %v306 = vld [vmem:[#allocation2 + $0x7d0] sm:$0xff]
    %v307 = vld [vmem:[#allocation2 + $0x7d8] sm:$0xff]
    %v308 = vld [vmem:[#allocation2 + $0x7e0] sm:$0xff]
    %v309 = vld [vmem:[#allocation2 + $0x7e8] sm:$0xff]
    %v310 = vld [vmem:[#allocation2 + $0x7f0] sm:$0xff]
    %v311 = vld [vmem:[#allocation2 + $0x7f8] sm:$0xff]
    %v312 = vld [vmem:[#allocation4] sm:$0xf]
    %v314 = vlaneseq
    %v315 = vshrl.u32 %v314, 7
    %v316 = vsub.s32 0, %v315
    %v317 = vrot.slane %v312, %v316
    %v318 = vlaneseq
    %v319 = vshrl.u32 %v318, 7
    %v320 = vsub.s32 1, %v319
    %v321 = vrot.slane %v312, %v320
    %v322 = vlaneseq
    %v323 = vshrl.u32 %v322, 7
    %v324 = vsub.s32 2, %v323
    %v325 = vrot.slane %v312, %v324
    %v326 = vlaneseq
    %v327 = vshrl.u32 %v326, 7
    %v328 = vsub.s32 3, %v327
    %v329 = vrot.slane %v312, %v328
    %v350 = vunpack.c.l.b16 %v40
    %v351 = vunpack.c.h.b16 %v40
    %v352 = vunpack.c.l.b16 %v41
    %v353 = vunpack.c.h.b16 %v41
    %v354 = vunpack.c.l.b16 %v42
    %v355 = vunpack.c.h.b16 %v42
    %v356 = vunpack.c.l.b16 %v43
    %v357 = vunpack.c.h.b16 %v43
    %v358 = vunpack.c.l.b16 %v44
    %v359 = vunpack.c.h.b16 %v44
    %v360 = vunpack.c.l.b16 %v45
    %v361 = vunpack.c.h.b16 %v45
    %v362 = vunpack.c.l.b16 %v46
    %v363 = vunpack.c.h.b16 %v46
    %v364 = vunpack.c.l.b16 %v47
    %v365 = vunpack.c.h.b16 %v47
    %v366 = vunpack.c.l.b16 %v48
    %v367 = vunpack.c.h.b16 %v48
    %v368 = vunpack.c.l.b16 %v49
    %v369 = vunpack.c.h.b16 %v49
    %v370 = vunpack.c.l.b16 %v50
    %v371 = vunpack.c.h.b16 %v50
    %v372 = vunpack.c.l.b16 %v51
    %v373 = vunpack.c.h.b16 %v51
    %v374 = vunpack.c.l.b16 %v52
    %v375 = vunpack.c.h.b16 %v52
    %v376 = vunpack.c.l.b16 %v53
    %v377 = vunpack.c.h.b16 %v53
    %v378 = vunpack.c.l.b16 %v54
    %v379 = vunpack.c.h.b16 %v54
    %v380 = vunpack.c.l.b16 %v55
    %v381 = vunpack.c.h.b16 %v55
    %v382 = vpack.c.b16 %v358, %v350
    %v383 = vpack.c.b16 %v359, %v351
    %v384 = vpack.c.b16 %v360, %v352
    %v385 = vpack.c.b16 %v361, %v353
    %v386 = vpack.c.b16 %v362, %v354
    %v387 = vpack.c.b16 %v363, %v355
    %v388 = vpack.c.b16 %v364, %v356
    %v389 = vpack.c.b16 %v365, %v357
    %v390 = vpack.c.b16 %v374, %v366
    %v391 = vpack.c.b16 %v375, %v367
    %v392 = vpack.c.b16 %v376, %v368
    %v393 = vpack.c.b16 %v377, %v369
    %v394 = vpack.c.b16 %v378, %v370
    %v395 = vpack.c.b16 %v379, %v371
    %v396 = vpack.c.b16 %v380, %v372
    %v397 = vpack.c.b16 %v381, %v373
    %v670 = vunpack.c.l.b16 %v56
    %v671 = vunpack.c.h.b16 %v56
    %v672 = vunpack.c.l.b16 %v57
    %v673 = vunpack.c.h.b16 %v57
    %v674 = vunpack.c.l.b16 %v58
    %v675 = vunpack.c.h.b16 %v58
    %v676 = vunpack.c.l.b16 %v59
    %v677 = vunpack.c.h.b16 %v59
    %v678 = vunpack.c.l.b16 %v60
    %v679 = vunpack.c.h.b16 %v60
    %v680 = vunpack.c.l.b16 %v61
    %v681 = vunpack.c.h.b16 %v61
    %v682 = vunpack.c.l.b16 %v62
    %v683 = vunpack.c.h.b16 %v62
    %v684 = vunpack.c.l.b16 %v63
    %v685 = vunpack.c.h.b16 %v63
    %v686 = vunpack.c.l.b16 %v64
    %v687 = vunpack.c.h.b16 %v64
    %v688 = vunpack.c.l.b16 %v65
    %v689 = vunpack.c.h.b16 %v65
    %v690 = vunpack.c.l.b16 %v66
    %v691 = vunpack.c.h.b16 %v66
    %v692 = vunpack.c.l.b16 %v67
    %v693 = vunpack.c.h.b16 %v67
    %v694 = vunpack.c.l.b16 %v68
    %v695 = vunpack.c.h.b16 %v68
    %v696 = vunpack.c.l.b16 %v69
    %v697 = vunpack.c.h.b16 %v69
    %v698 = vunpack.c.l.b16 %v70
    %v699 = vunpack.c.h.b16 %v70
    %v700 = vunpack.c.l.b16 %v71
    %v701 = vunpack.c.h.b16 %v71
    %v702 = vunpack.c.l.b16 %v72
    %v703 = vunpack.c.h.b16 %v72
    %v704 = vunpack.c.l.b16 %v73
    %v705 = vunpack.c.h.b16 %v73
    %v706 = vunpack.c.l.b16 %v74
    %v707 = vunpack.c.h.b16 %v74
    %v708 = vunpack.c.l.b16 %v75
    %v709 = vunpack.c.h.b16 %v75
    %v710 = vunpack.c.l.b16 %v76
    %v711 = vunpack.c.h.b16 %v76
    %v712 = vunpack.c.l.b16 %v77
    %v713 = vunpack.c.h.b16 %v77
    %v714 = vunpack.c.l.b16 %v78
    %v715 = vunpack.c.h.b16 %v78
    %v716 = vunpack.c.l.b16 %v79
    %v717 = vunpack.c.h.b16 %v79
    %v718 = vunpack.c.l.b16 %v80
    %v719 = vunpack.c.h.b16 %v80
    %v720 = vunpack.c.l.b16 %v81
    %v721 = vunpack.c.h.b16 %v81
    %v722 = vunpack.c.l.b16 %v82
    %v723 = vunpack.c.h.b16 %v82
    %v724 = vunpack.c.l.b16 %v83
    %v725 = vunpack.c.h.b16 %v83
    %v726 = vunpack.c.l.b16 %v84
    %v727 = vunpack.c.h.b16 %v84
    %v728 = vunpack.c.l.b16 %v85
    %v729 = vunpack.c.h.b16 %v85
    %v730 = vunpack.c.l.b16 %v86
    %v731 = vunpack.c.h.b16 %v86
    %v732 = vunpack.c.l.b16 %v87
    %v733 = vunpack.c.h.b16 %v87
    %v734 = vunpack.c.l.b16 %v88
    %v735 = vunpack.c.h.b16 %v88
    %v736 = vunpack.c.l.b16 %v89
    %v737 = vunpack.c.h.b16 %v89
    %v738 = vunpack.c.l.b16 %v90
    %v739 = vunpack.c.h.b16 %v90
    %v740 = vunpack.c.l.b16 %v91
    %v741 = vunpack.c.h.b16 %v91
    %v742 = vunpack.c.l.b16 %v92
    %v743 = vunpack.c.h.b16 %v92
    %v744 = vunpack.c.l.b16 %v93
    %v745 = vunpack.c.h.b16 %v93
    %v746 = vunpack.c.l.b16 %v94
    %v747 = vunpack.c.h.b16 %v94
    %v748 = vunpack.c.l.b16 %v95
    %v749 = vunpack.c.h.b16 %v95
    %v750 = vunpack.c.l.b16 %v96
    %v751 = vunpack.c.h.b16 %v96
    %v752 = vunpack.c.l.b16 %v97
    %v753 = vunpack.c.h.b16 %v97
    %v754 = vunpack.c.l.b16 %v98
    %v755 = vunpack.c.h.b16 %v98
    %v756 = vunpack.c.l.b16 %v99
    %v757 = vunpack.c.h.b16 %v99
    %v758 = vunpack.c.l.b16 %v100
    %v759 = vunpack.c.h.b16 %v100
    %v760 = vunpack.c.l.b16 %v101
    %v761 = vunpack.c.h.b16 %v101
    %v762 = vunpack.c.l.b16 %v102
    %v763 = vunpack.c.h.b16 %v102
    %v764 = vunpack.c.l.b16 %v103
    %v765 = vunpack.c.h.b16 %v103
    %v766 = vunpack.c.l.b16 %v104
    %v767 = vunpack.c.h.b16 %v104
    %v768 = vunpack.c.l.b16 %v105
    %v769 = vunpack.c.h.b16 %v105
    %v770 = vunpack.c.l.b16 %v106
    %v771 = vunpack.c.h.b16 %v106
    %v772 = vunpack.c.l.b16 %v107
    %v773 = vunpack.c.h.b16 %v107
    %v774 = vunpack.c.l.b16 %v108
    %v775 = vunpack.c.h.b16 %v108
    %v776 = vunpack.c.l.b16 %v109
    %v777 = vunpack.c.h.b16 %v109
    %v778 = vunpack.c.l.b16 %v110
    %v779 = vunpack.c.h.b16 %v110
    %v780 = vunpack.c.l.b16 %v111
    %v781 = vunpack.c.h.b16 %v111
    %v782 = vunpack.c.l.b16 %v112
    %v783 = vunpack.c.h.b16 %v112
    %v784 = vunpack.c.l.b16 %v113
    %v785 = vunpack.c.h.b16 %v113
    %v786 = vunpack.c.l.b16 %v114
    %v787 = vunpack.c.h.b16 %v114
    %v788 = vunpack.c.l.b16 %v115
    %v789 = vunpack.c.h.b16 %v115
    %v790 = vunpack.c.l.b16 %v116
    %v791 = vunpack.c.h.b16 %v116
    %v792 = vunpack.c.l.b16 %v117
    %v793 = vunpack.c.h.b16 %v117
    %v794 = vunpack.c.l.b16 %v118
    %v795 = vunpack.c.h.b16 %v118
    %v796 = vunpack.c.l.b16 %v119
    %v797 = vunpack.c.h.b16 %v119
    %v798 = vunpack.c.l.b16 %v120
    %v799 = vunpack.c.h.b16 %v120
    %v800 = vunpack.c.l.b16 %v121
    %v801 = vunpack.c.h.b16 %v121
    %v802 = vunpack.c.l.b16 %v122
    %v803 = vunpack.c.h.b16 %v122
    %v804 = vunpack.c.l.b16 %v123
    %v805 = vunpack.c.h.b16 %v123
    %v806 = vunpack.c.l.b16 %v124
    %v807 = vunpack.c.h.b16 %v124
    %v808 = vunpack.c.l.b16 %v125
    %v809 = vunpack.c.h.b16 %v125
    %v810 = vunpack.c.l.b16 %v126
    %v811 = vunpack.c.h.b16 %v126
    %v812 = vunpack.c.l.b16 %v127
    %v813 = vunpack.c.h.b16 %v127
    %v814 = vunpack.c.l.b16 %v128
    %v815 = vunpack.c.h.b16 %v128
    %v816 = vunpack.c.l.b16 %v129
    %v817 = vunpack.c.h.b16 %v129
    %v818 = vunpack.c.l.b16 %v130
    %v819 = vunpack.c.h.b16 %v130
    %v820 = vunpack.c.l.b16 %v131
    %v821 = vunpack.c.h.b16 %v131
    %v822 = vunpack.c.l.b16 %v132
    %v823 = vunpack.c.h.b16 %v132
    %v824 = vunpack.c.l.b16 %v133
    %v825 = vunpack.c.h.b16 %v133
    %v826 = vunpack.c.l.b16 %v134
    %v827 = vunpack.c.h.b16 %v134
    %v828 = vunpack.c.l.b16 %v135
    %v829 = vunpack.c.h.b16 %v135
    %v830 = vunpack.c.l.b16 %v136
    %v831 = vunpack.c.h.b16 %v136
    %v832 = vunpack.c.l.b16 %v137
    %v833 = vunpack.c.h.b16 %v137
    %v834 = vunpack.c.l.b16 %v138
    %v835 = vunpack.c.h.b16 %v138
    %v836 = vunpack.c.l.b16 %v139
    %v837 = vunpack.c.h.b16 %v139
    %v838 = vunpack.c.l.b16 %v140
    %v839 = vunpack.c.h.b16 %v140
    %v840 = vunpack.c.l.b16 %v141
    %v841 = vunpack.c.h.b16 %v141
    %v842 = vunpack.c.l.b16 %v142
    %v843 = vunpack.c.h.b16 %v142
    %v844 = vunpack.c.l.b16 %v143
    %v845 = vunpack.c.h.b16 %v143
    %v846 = vunpack.c.l.b16 %v144
    %v847 = vunpack.c.h.b16 %v144
    %v848 = vunpack.c.l.b16 %v145
    %v849 = vunpack.c.h.b16 %v145
    %v850 = vunpack.c.l.b16 %v146
    %v851 = vunpack.c.h.b16 %v146
    %v852 = vunpack.c.l.b16 %v147
    %v853 = vunpack.c.h.b16 %v147
    %v854 = vunpack.c.l.b16 %v148
    %v855 = vunpack.c.h.b16 %v148
    %v856 = vunpack.c.l.b16 %v149
    %v857 = vunpack.c.h.b16 %v149
    %v858 = vunpack.c.l.b16 %v150
    %v859 = vunpack.c.h.b16 %v150
    %v860 = vunpack.c.l.b16 %v151
    %v861 = vunpack.c.h.b16 %v151
    %v862 = vunpack.c.l.b16 %v152
    %v863 = vunpack.c.h.b16 %v152
    %v864 = vunpack.c.l.b16 %v153
    %v865 = vunpack.c.h.b16 %v153
    %v866 = vunpack.c.l.b16 %v154
    %v867 = vunpack.c.h.b16 %v154
    %v868 = vunpack.c.l.b16 %v155
    %v869 = vunpack.c.h.b16 %v155
    %v870 = vunpack.c.l.b16 %v156
    %v871 = vunpack.c.h.b16 %v156
    %v872 = vunpack.c.l.b16 %v157
    %v873 = vunpack.c.h.b16 %v157
    %v874 = vunpack.c.l.b16 %v158
    %v875 = vunpack.c.h.b16 %v158
    %v876 = vunpack.c.l.b16 %v159
    %v877 = vunpack.c.h.b16 %v159
    %v878 = vunpack.c.l.b16 %v160
    %v879 = vunpack.c.h.b16 %v160
    %v880 = vunpack.c.l.b16 %v161
    %v881 = vunpack.c.h.b16 %v161
    %v882 = vunpack.c.l.b16 %v162
    %v883 = vunpack.c.h.b16 %v162
    %v884 = vunpack.c.l.b16 %v163
    %v885 = vunpack.c.h.b16 %v163
    %v886 = vunpack.c.l.b16 %v164
    %v887 = vunpack.c.h.b16 %v164
    %v888 = vunpack.c.l.b16 %v165
    %v889 = vunpack.c.h.b16 %v165
    %v890 = vunpack.c.l.b16 %v166
    %v891 = vunpack.c.h.b16 %v166
    %v892 = vunpack.c.l.b16 %v167
    %v893 = vunpack.c.h.b16 %v167
    %v894 = vunpack.c.l.b16 %v168
    %v895 = vunpack.c.h.b16 %v168
    %v896 = vunpack.c.l.b16 %v169
    %v897 = vunpack.c.h.b16 %v169
    %v898 = vunpack.c.l.b16 %v170
    %v899 = vunpack.c.h.b16 %v170
    %v900 = vunpack.c.l.b16 %v171
    %v901 = vunpack.c.h.b16 %v171
    %v902 = vunpack.c.l.b16 %v172
    %v903 = vunpack.c.h.b16 %v172
    %v904 = vunpack.c.l.b16 %v173
    %v905 = vunpack.c.h.b16 %v173
    %v906 = vunpack.c.l.b16 %v174
    %v907 = vunpack.c.h.b16 %v174
    %v908 = vunpack.c.l.b16 %v175
    %v909 = vunpack.c.h.b16 %v175
    %v910 = vunpack.c.l.b16 %v176
    %v911 = vunpack.c.h.b16 %v176
    %v912 = vunpack.c.l.b16 %v177
    %v913 = vunpack.c.h.b16 %v177
    %v914 = vunpack.c.l.b16 %v178
    %v915 = vunpack.c.h.b16 %v178
    %v916 = vunpack.c.l.b16 %v179
    %v917 = vunpack.c.h.b16 %v179
    %v918 = vunpack.c.l.b16 %v180
    %v919 = vunpack.c.h.b16 %v180
    %v920 = vunpack.c.l.b16 %v181
    %v921 = vunpack.c.h.b16 %v181
    %v922 = vunpack.c.l.b16 %v182
    %v923 = vunpack.c.h.b16 %v182
    %v924 = vunpack.c.l.b16 %v183
    %v925 = vunpack.c.h.b16 %v183
    %v926 = vunpack.c.l.b16 %v184
    %v927 = vunpack.c.h.b16 %v184
    %v928 = vunpack.c.l.b16 %v185
    %v929 = vunpack.c.h.b16 %v185
    %v930 = vunpack.c.l.b16 %v186
    %v931 = vunpack.c.h.b16 %v186
    %v932 = vunpack.c.l.b16 %v187
    %v933 = vunpack.c.h.b16 %v187
    %v934 = vunpack.c.l.b16 %v188
    %v935 = vunpack.c.h.b16 %v188
    %v936 = vunpack.c.l.b16 %v189
    %v937 = vunpack.c.h.b16 %v189
    %v938 = vunpack.c.l.b16 %v190
    %v939 = vunpack.c.h.b16 %v190
    %v940 = vunpack.c.l.b16 %v191
    %v941 = vunpack.c.h.b16 %v191
    %v942 = vunpack.c.l.b16 %v192
    %v943 = vunpack.c.h.b16 %v192
    %v944 = vunpack.c.l.b16 %v193
    %v945 = vunpack.c.h.b16 %v193
    %v946 = vunpack.c.l.b16 %v194
    %v947 = vunpack.c.h.b16 %v194
    %v948 = vunpack.c.l.b16 %v195
    %v949 = vunpack.c.h.b16 %v195
    %v950 = vunpack.c.l.b16 %v196
    %v951 = vunpack.c.h.b16 %v196
    %v952 = vunpack.c.l.b16 %v197
    %v953 = vunpack.c.h.b16 %v197
    %v954 = vunpack.c.l.b16 %v198
    %v955 = vunpack.c.h.b16 %v198
    %v956 = vunpack.c.l.b16 %v199
    %v957 = vunpack.c.h.b16 %v199
    %v958 = vunpack.c.l.b16 %v200
    %v959 = vunpack.c.h.b16 %v200
    %v960 = vunpack.c.l.b16 %v201
    %v961 = vunpack.c.h.b16 %v201
    %v962 = vunpack.c.l.b16 %v202
    %v963 = vunpack.c.h.b16 %v202
    %v964 = vunpack.c.l.b16 %v203
    %v965 = vunpack.c.h.b16 %v203
    %v966 = vunpack.c.l.b16 %v204
    %v967 = vunpack.c.h.b16 %v204
    %v968 = vunpack.c.l.b16 %v205
    %v969 = vunpack.c.h.b16 %v205
    %v970 = vunpack.c.l.b16 %v206
    %v971 = vunpack.c.h.b16 %v206
    %v972 = vunpack.c.l.b16 %v207
    %v973 = vunpack.c.h.b16 %v207
    %v974 = vunpack.c.l.b16 %v208
    %v975 = vunpack.c.h.b16 %v208
    %v976 = vunpack.c.l.b16 %v209
    %v977 = vunpack.c.h.b16 %v209
    %v978 = vunpack.c.l.b16 %v210
    %v979 = vunpack.c.h.b16 %v210
    %v980 = vunpack.c.l.b16 %v211
    %v981 = vunpack.c.h.b16 %v211
    %v982 = vunpack.c.l.b16 %v212
    %v983 = vunpack.c.h.b16 %v212
    %v984 = vunpack.c.l.b16 %v213
    %v985 = vunpack.c.h.b16 %v213
    %v986 = vunpack.c.l.b16 %v214
    %v987 = vunpack.c.h.b16 %v214
    %v988 = vunpack.c.l.b16 %v215
    %v989 = vunpack.c.h.b16 %v215
    %v990 = vunpack.c.l.b16 %v216
    %v991 = vunpack.c.h.b16 %v216
    %v992 = vunpack.c.l.b16 %v217
    %v993 = vunpack.c.h.b16 %v217
    %v994 = vunpack.c.l.b16 %v218
    %v995 = vunpack.c.h.b16 %v218
    %v996 = vunpack.c.l.b16 %v219
    %v997 = vunpack.c.h.b16 %v219
    %v998 = vunpack.c.l.b16 %v220
    %v999 = vunpack.c.h.b16 %v220
    %v1000 = vunpack.c.l.b16 %v221
    %v1001 = vunpack.c.h.b16 %v221
    %v1002 = vunpack.c.l.b16 %v222
    %v1003 = vunpack.c.h.b16 %v222
    %v1004 = vunpack.c.l.b16 %v223
    %v1005 = vunpack.c.h.b16 %v223
    %v1006 = vunpack.c.l.b16 %v224
    %v1007 = vunpack.c.h.b16 %v224
    %v1008 = vunpack.c.l.b16 %v225
    %v1009 = vunpack.c.h.b16 %v225
    %v1010 = vunpack.c.l.b16 %v226
    %v1011 = vunpack.c.h.b16 %v226
    %v1012 = vunpack.c.l.b16 %v227
    %v1013 = vunpack.c.h.b16 %v227
    %v1014 = vunpack.c.l.b16 %v228
    %v1015 = vunpack.c.h.b16 %v228
    %v1016 = vunpack.c.l.b16 %v229
    %v1017 = vunpack.c.h.b16 %v229
    %v1018 = vunpack.c.l.b16 %v230
    %v1019 = vunpack.c.h.b16 %v230
    %v1020 = vunpack.c.l.b16 %v231
    %v1021 = vunpack.c.h.b16 %v231
    %v1022 = vunpack.c.l.b16 %v232
    %v1023 = vunpack.c.h.b16 %v232
    %v1024 = vunpack.c.l.b16 %v233
    %v1025 = vunpack.c.h.b16 %v233
    %v1026 = vunpack.c.l.b16 %v234
    %v1027 = vunpack.c.h.b16 %v234
    %v1028 = vunpack.c.l.b16 %v235
    %v1029 = vunpack.c.h.b16 %v235
    %v1030 = vunpack.c.l.b16 %v236
    %v1031 = vunpack.c.h.b16 %v236
    %v1032 = vunpack.c.l.b16 %v237
    %v1033 = vunpack.c.h.b16 %v237
    %v1034 = vunpack.c.l.b16 %v238
    %v1035 = vunpack.c.h.b16 %v238
    %v1036 = vunpack.c.l.b16 %v239
    %v1037 = vunpack.c.h.b16 %v239
    %v1038 = vunpack.c.l.b16 %v240
    %v1039 = vunpack.c.h.b16 %v240
    %v1040 = vunpack.c.l.b16 %v241
    %v1041 = vunpack.c.h.b16 %v241
    %v1042 = vunpack.c.l.b16 %v242
    %v1043 = vunpack.c.h.b16 %v242
    %v1044 = vunpack.c.l.b16 %v243
    %v1045 = vunpack.c.h.b16 %v243
    %v1046 = vunpack.c.l.b16 %v244
    %v1047 = vunpack.c.h.b16 %v244
    %v1048 = vunpack.c.l.b16 %v245
    %v1049 = vunpack.c.h.b16 %v245
    %v1050 = vunpack.c.l.b16 %v246
    %v1051 = vunpack.c.h.b16 %v246
    %v1052 = vunpack.c.l.b16 %v247
    %v1053 = vunpack.c.h.b16 %v247
    %v1054 = vunpack.c.l.b16 %v248
    %v1055 = vunpack.c.h.b16 %v248
    %v1056 = vunpack.c.l.b16 %v249
    %v1057 = vunpack.c.h.b16 %v249
    %v1058 = vunpack.c.l.b16 %v250
    %v1059 = vunpack.c.h.b16 %v250
    %v1060 = vunpack.c.l.b16 %v251
    %v1061 = vunpack.c.h.b16 %v251
    %v1062 = vunpack.c.l.b16 %v252
    %v1063 = vunpack.c.h.b16 %v252
    %v1064 = vunpack.c.l.b16 %v253
    %v1065 = vunpack.c.h.b16 %v253
    %v1066 = vunpack.c.l.b16 %v254
    %v1067 = vunpack.c.h.b16 %v254
    %v1068 = vunpack.c.l.b16 %v255
    %v1069 = vunpack.c.h.b16 %v255
    %v1070 = vunpack.c.l.b16 %v256
    %v1071 = vunpack.c.h.b16 %v256
    %v1072 = vunpack.c.l.b16 %v257
    %v1073 = vunpack.c.h.b16 %v257
    %v1074 = vunpack.c.l.b16 %v258
    %v1075 = vunpack.c.h.b16 %v258
    %v1076 = vunpack.c.l.b16 %v259
    %v1077 = vunpack.c.h.b16 %v259
    %v1078 = vunpack.c.l.b16 %v260
    %v1079 = vunpack.c.h.b16 %v260
    %v1080 = vunpack.c.l.b16 %v261
    %v1081 = vunpack.c.h.b16 %v261
    %v1082 = vunpack.c.l.b16 %v262
    %v1083 = vunpack.c.h.b16 %v262
    %v1084 = vunpack.c.l.b16 %v263
    %v1085 = vunpack.c.h.b16 %v263
    %v1086 = vunpack.c.l.b16 %v264
    %v1087 = vunpack.c.h.b16 %v264
    %v1088 = vunpack.c.l.b16 %v265
    %v1089 = vunpack.c.h.b16 %v265
    %v1090 = vunpack.c.l.b16 %v266
    %v1091 = vunpack.c.h.b16 %v266
    %v1092 = vunpack.c.l.b16 %v267
    %v1093 = vunpack.c.h.b16 %v267
    %v1094 = vunpack.c.l.b16 %v268
    %v1095 = vunpack.c.h.b16 %v268
    %v1096 = vunpack.c.l.b16 %v269
    %v1097 = vunpack.c.h.b16 %v269
    %v1098 = vunpack.c.l.b16 %v270
    %v1099 = vunpack.c.h.b16 %v270
    %v1100 = vunpack.c.l.b16 %v271
    %v1101 = vunpack.c.h.b16 %v271
    %v1102 = vunpack.c.l.b16 %v272
    %v1103 = vunpack.c.h.b16 %v272
    %v1104 = vunpack.c.l.b16 %v273
    %v1105 = vunpack.c.h.b16 %v273
    %v1106 = vunpack.c.l.b16 %v274
    %v1107 = vunpack.c.h.b16 %v274
    %v1108 = vunpack.c.l.b16 %v275
    %v1109 = vunpack.c.h.b16 %v275
    %v1110 = vunpack.c.l.b16 %v276
    %v1111 = vunpack.c.h.b16 %v276
    %v1112 = vunpack.c.l.b16 %v277
    %v1113 = vunpack.c.h.b16 %v277
    %v1114 = vunpack.c.l.b16 %v278
    %v1115 = vunpack.c.h.b16 %v278
    %v1116 = vunpack.c.l.b16 %v279
    %v1117 = vunpack.c.h.b16 %v279
    %v1118 = vunpack.c.l.b16 %v280
    %v1119 = vunpack.c.h.b16 %v280
    %v1120 = vunpack.c.l.b16 %v281
    %v1121 = vunpack.c.h.b16 %v281
    %v1122 = vunpack.c.l.b16 %v282
    %v1123 = vunpack.c.h.b16 %v282
    %v1124 = vunpack.c.l.b16 %v283
    %v1125 = vunpack.c.h.b16 %v283
    %v1126 = vunpack.c.l.b16 %v284
    %v1127 = vunpack.c.h.b16 %v284
    %v1128 = vunpack.c.l.b16 %v285
    %v1129 = vunpack.c.h.b16 %v285
    %v1130 = vunpack.c.l.b16 %v286
    %v1131 = vunpack.c.h.b16 %v286
    %v1132 = vunpack.c.l.b16 %v287
    %v1133 = vunpack.c.h.b16 %v287
    %v1134 = vunpack.c.l.b16 %v288
    %v1135 = vunpack.c.h.b16 %v288
    %v1136 = vunpack.c.l.b16 %v289
    %v1137 = vunpack.c.h.b16 %v289
    %v1138 = vunpack.c.l.b16 %v290
    %v1139 = vunpack.c.h.b16 %v290
    %v1140 = vunpack.c.l.b16 %v291
    %v1141 = vunpack.c.h.b16 %v291
    %v1142 = vunpack.c.l.b16 %v292
    %v1143 = vunpack.c.h.b16 %v292
    %v1144 = vunpack.c.l.b16 %v293
    %v1145 = vunpack.c.h.b16 %v293
    %v1146 = vunpack.c.l.b16 %v294
    %v1147 = vunpack.c.h.b16 %v294
    %v1148 = vunpack.c.l.b16 %v295
    %v1149 = vunpack.c.h.b16 %v295
    %v1150 = vunpack.c.l.b16 %v296
    %v1151 = vunpack.c.h.b16 %v296
    %v1152 = vunpack.c.l.b16 %v297
    %v1153 = vunpack.c.h.b16 %v297
    %v1154 = vunpack.c.l.b16 %v298
    %v1155 = vunpack.c.h.b16 %v298
    %v1156 = vunpack.c.l.b16 %v299
    %v1157 = vunpack.c.h.b16 %v299
    %v1158 = vunpack.c.l.b16 %v300
    %v1159 = vunpack.c.h.b16 %v300
    %v1160 = vunpack.c.l.b16 %v301
    %v1161 = vunpack.c.h.b16 %v301
    %v1162 = vunpack.c.l.b16 %v302
    %v1163 = vunpack.c.h.b16 %v302
    %v1164 = vunpack.c.l.b16 %v303
    %v1165 = vunpack.c.h.b16 %v303
    %v1166 = vunpack.c.l.b16 %v304
    %v1167 = vunpack.c.h.b16 %v304
    %v1168 = vunpack.c.l.b16 %v305
    %v1169 = vunpack.c.h.b16 %v305
    %v1170 = vunpack.c.l.b16 %v306
    %v1171 = vunpack.c.h.b16 %v306
    %v1172 = vunpack.c.l.b16 %v307
    %v1173 = vunpack.c.h.b16 %v307
    %v1174 = vunpack.c.l.b16 %v308
    %v1175 = vunpack.c.h.b16 %v308
    %v1176 = vunpack.c.l.b16 %v309
    %v1177 = vunpack.c.h.b16 %v309
    %v1178 = vunpack.c.l.b16 %v310
    %v1179 = vunpack.c.h.b16 %v310
    %v1180 = vunpack.c.l.b16 %v311
    %v1181 = vunpack.c.h.b16 %v311
    %v1182 = vpack.c.b16 %v674, %v670
    %v1183 = vpack.c.b16 %v675, %v671
    %v1184 = vpack.c.b16 %v676, %v672
    %v1185 = vpack.c.b16 %v677, %v673
    %v1186 = vpack.c.b16 %v682, %v678
    %v1187 = vpack.c.b16 %v683, %v679
    %v1188 = vpack.c.b16 %v684, %v680
    %v1189 = vpack.c.b16 %v685, %v681
    %v1190 = vpack.c.b16 %v690, %v686
    %v1191 = vpack.c.b16 %v691, %v687
    %v1192 = vpack.c.b16 %v692, %v688
    %v1193 = vpack.c.b16 %v693, %v689
    %v1194 = vpack.c.b16 %v698, %v694
    %v1195 = vpack.c.b16 %v699, %v695
    %v1196 = vpack.c.b16 %v700, %v696
    %v1197 = vpack.c.b16 %v701, %v697
    %v1198 = vpack.c.b16 %v706, %v702
    %v1199 = vpack.c.b16 %v707, %v703
    %v1200 = vpack.c.b16 %v708, %v704
    %v1201 = vpack.c.b16 %v709, %v705
    %v1202 = vpack.c.b16 %v714, %v710
    %v1203 = vpack.c.b16 %v715, %v711
    %v1204 = vpack.c.b16 %v716, %v712
    %v1205 = vpack.c.b16 %v717, %v713
    %v1206 = vpack.c.b16 %v722, %v718
    %v1207 = vpack.c.b16 %v723, %v719
    %v1208 = vpack.c.b16 %v724, %v720
    %v1209 = vpack.c.b16 %v725, %v721
    %v1210 = vpack.c.b16 %v730, %v726
    %v1211 = vpack.c.b16 %v731, %v727
    %v1212 = vpack.c.b16 %v732, %v728
    %v1213 = vpack.c.b16 %v733, %v729
    %v1214 = vpack.c.b16 %v738, %v734
    %v1215 = vpack.c.b16 %v739, %v735
    %v1216 = vpack.c.b16 %v740, %v736
    %v1217 = vpack.c.b16 %v741, %v737
    %v1218 = vpack.c.b16 %v746, %v742
    %v1219 = vpack.c.b16 %v747, %v743
    %v1220 = vpack.c.b16 %v748, %v744
    %v1221 = vpack.c.b16 %v749, %v745
    %v1222 = vpack.c.b16 %v754, %v750
    %v1223 = vpack.c.b16 %v755, %v751
    %v1224 = vpack.c.b16 %v756, %v752
    %v1225 = vpack.c.b16 %v757, %v753
    %v1226 = vpack.c.b16 %v762, %v758
    %v1227 = vpack.c.b16 %v763, %v759
    %v1228 = vpack.c.b16 %v764, %v760
    %v1229 = vpack.c.b16 %v765, %v761
    %v1230 = vpack.c.b16 %v770, %v766
    %v1231 = vpack.c.b16 %v771, %v767
    %v1232 = vpack.c.b16 %v772, %v768
    %v1233 = vpack.c.b16 %v773, %v769
    %v1234 = vpack.c.b16 %v778, %v774
    %v1235 = vpack.c.b16 %v779, %v775
    %v1236 = vpack.c.b16 %v780, %v776
    %v1237 = vpack.c.b16 %v781, %v777
    %v1238 = vpack.c.b16 %v786, %v782
    %v1239 = vpack.c.b16 %v787, %v783
    %v1240 = vpack.c.b16 %v788, %v784
    %v1241 = vpack.c.b16 %v789, %v785
    %v1242 = vpack.c.b16 %v794, %v790
    %v1243 = vpack.c.b16 %v795, %v791
    %v1244 = vpack.c.b16 %v796, %v792
    %v1245 = vpack.c.b16 %v797, %v793
    %v1246 = vpack.c.b16 %v802, %v798
    %v1247 = vpack.c.b16 %v803, %v799
    %v1248 = vpack.c.b16 %v804, %v800
    %v1249 = vpack.c.b16 %v805, %v801
    %v1250 = vpack.c.b16 %v810, %v806
    %v1251 = vpack.c.b16 %v811, %v807
    %v1252 = vpack.c.b16 %v812, %v808
    %v1253 = vpack.c.b16 %v813, %v809
    %v1254 = vpack.c.b16 %v818, %v814
    %v1255 = vpack.c.b16 %v819, %v815
    %v1256 = vpack.c.b16 %v820, %v816
    %v1257 = vpack.c.b16 %v821, %v817
    %v1258 = vpack.c.b16 %v826, %v822
    %v1259 = vpack.c.b16 %v827, %v823
    %v1260 = vpack.c.b16 %v828, %v824
    %v1261 = vpack.c.b16 %v829, %v825
    %v1262 = vpack.c.b16 %v834, %v830
    %v1263 = vpack.c.b16 %v835, %v831
    %v1264 = vpack.c.b16 %v836, %v832
    %v1265 = vpack.c.b16 %v837, %v833
    %v1266 = vpack.c.b16 %v842, %v838
    %v1267 = vpack.c.b16 %v843, %v839
    %v1268 = vpack.c.b16 %v844, %v840
    %v1269 = vpack.c.b16 %v845, %v841
    %v1270 = vpack.c.b16 %v850, %v846
    %v1271 = vpack.c.b16 %v851, %v847
    %v1272 = vpack.c.b16 %v852, %v848
    %v1273 = vpack.c.b16 %v853, %v849
    %v1274 = vpack.c.b16 %v858, %v854
    %v1275 = vpack.c.b16 %v859, %v855
    %v1276 = vpack.c.b16 %v860, %v856
    %v1277 = vpack.c.b16 %v861, %v857
    %v1278 = vpack.c.b16 %v866, %v862
    %v1279 = vpack.c.b16 %v867, %v863
    %v1280 = vpack.c.b16 %v868, %v864
    %v1281 = vpack.c.b16 %v869, %v865
    %v1282 = vpack.c.b16 %v874, %v870
    %v1283 = vpack.c.b16 %v875, %v871
    %v1284 = vpack.c.b16 %v876, %v872
    %v1285 = vpack.c.b16 %v877, %v873
    %v1286 = vpack.c.b16 %v882, %v878
    %v1287 = vpack.c.b16 %v883, %v879
    %v1288 = vpack.c.b16 %v884, %v880
    %v1289 = vpack.c.b16 %v885, %v881
    %v1290 = vpack.c.b16 %v890, %v886
    %v1291 = vpack.c.b16 %v891, %v887
    %v1292 = vpack.c.b16 %v892, %v888
    %v1293 = vpack.c.b16 %v893, %v889
    %v1294 = vpack.c.b16 %v898, %v894
    %v1295 = vpack.c.b16 %v899, %v895
    %v1296 = vpack.c.b16 %v900, %v896
    %v1297 = vpack.c.b16 %v901, %v897
    %v1298 = vpack.c.b16 %v906, %v902
    %v1299 = vpack.c.b16 %v907, %v903
    %v1300 = vpack.c.b16 %v908, %v904
    %v1301 = vpack.c.b16 %v909, %v905
    %v1302 = vpack.c.b16 %v914, %v910
    %v1303 = vpack.c.b16 %v915, %v911
    %v1304 = vpack.c.b16 %v916, %v912
    %v1305 = vpack.c.b16 %v917, %v913
    %v1306 = vpack.c.b16 %v922, %v918
    %v1307 = vpack.c.b16 %v923, %v919
    %v1308 = vpack.c.b16 %v924, %v920
    %v1309 = vpack.c.b16 %v925, %v921
    %v1310 = vpack.c.b16 %v930, %v926
    %v1311 = vpack.c.b16 %v931, %v927
    %v1312 = vpack.c.b16 %v932, %v928
    %v1313 = vpack.c.b16 %v933, %v929
    %v1314 = vpack.c.b16 %v938, %v934
    %v1315 = vpack.c.b16 %v939, %v935
    %v1316 = vpack.c.b16 %v940, %v936
    %v1317 = vpack.c.b16 %v941, %v937
    %v1318 = vpack.c.b16 %v946, %v942
    %v1319 = vpack.c.b16 %v947, %v943
    %v1320 = vpack.c.b16 %v948, %v944
    %v1321 = vpack.c.b16 %v949, %v945
    %v1322 = vpack.c.b16 %v954, %v950
    %v1323 = vpack.c.b16 %v955, %v951
    %v1324 = vpack.c.b16 %v956, %v952
    %v1325 = vpack.c.b16 %v957, %v953
    %v1326 = vpack.c.b16 %v962, %v958
    %v1327 = vpack.c.b16 %v963, %v959
    %v1328 = vpack.c.b16 %v964, %v960
    %v1329 = vpack.c.b16 %v965, %v961
    %v1330 = vpack.c.b16 %v970, %v966
    %v1331 = vpack.c.b16 %v971, %v967
    %v1332 = vpack.c.b16 %v972, %v968
    %v1333 = vpack.c.b16 %v973, %v969
    %v1334 = vpack.c.b16 %v978, %v974
    %v1335 = vpack.c.b16 %v979, %v975
    %v1336 = vpack.c.b16 %v980, %v976
    %v1337 = vpack.c.b16 %v981, %v977
    %v1338 = vpack.c.b16 %v986, %v982
    %v1339 = vpack.c.b16 %v987, %v983
    %v1340 = vpack.c.b16 %v988, %v984
    %v1341 = vpack.c.b16 %v989, %v985
    %v1342 = vpack.c.b16 %v994, %v990
    %v1343 = vpack.c.b16 %v995, %v991
    %v1344 = vpack.c.b16 %v996, %v992
    %v1345 = vpack.c.b16 %v997, %v993
    %v1346 = vpack.c.b16 %v1002, %v998
    %v1347 = vpack.c.b16 %v1003, %v999
    %v1348 = vpack.c.b16 %v1004, %v1000
    %v1349 = vpack.c.b16 %v1005, %v1001
    %v1350 = vpack.c.b16 %v1010, %v1006
    %v1351 = vpack.c.b16 %v1011, %v1007
    %v1352 = vpack.c.b16 %v1012, %v1008
    %v1353 = vpack.c.b16 %v1013, %v1009
    %v1354 = vpack.c.b16 %v1018, %v1014
    %v1355 = vpack.c.b16 %v1019, %v1015
    %v1356 = vpack.c.b16 %v1020, %v1016
    %v1357 = vpack.c.b16 %v1021, %v1017
    %v1358 = vpack.c.b16 %v1026, %v1022
    %v1359 = vpack.c.b16 %v1027, %v1023
    %v1360 = vpack.c.b16 %v1028, %v1024
    %v1361 = vpack.c.b16 %v1029, %v1025
    %v1362 = vpack.c.b16 %v1034, %v1030
    %v1363 = vpack.c.b16 %v1035, %v1031
    %v1364 = vpack.c.b16 %v1036, %v1032
    %v1365 = vpack.c.b16 %v1037, %v1033
    %v1366 = vpack.c.b16 %v1042, %v1038
    %v1367 = vpack.c.b16 %v1043, %v1039
    %v1368 = vpack.c.b16 %v1044, %v1040
    %v1369 = vpack.c.b16 %v1045, %v1041
    %v1370 = vpack.c.b16 %v1050, %v1046
    %v1371 = vpack.c.b16 %v1051, %v1047
    %v1372 = vpack.c.b16 %v1052, %v1048
    %v1373 = vpack.c.b16 %v1053, %v1049
    %v1374 = vpack.c.b16 %v1058, %v1054
    %v1375 = vpack.c.b16 %v1059, %v1055
    %v1376 = vpack.c.b16 %v1060, %v1056
    %v1377 = vpack.c.b16 %v1061, %v1057
    %v1378 = vpack.c.b16 %v1066, %v1062
    %v1379 = vpack.c.b16 %v1067, %v1063
    %v1380 = vpack.c.b16 %v1068, %v1064
    %v1381 = vpack.c.b16 %v1069, %v1065
    %v1382 = vpack.c.b16 %v1074, %v1070
    %v1383 = vpack.c.b16 %v1075, %v1071
    %v1384 = vpack.c.b16 %v1076, %v1072
    %v1385 = vpack.c.b16 %v1077, %v1073
    %v1386 = vpack.c.b16 %v1082, %v1078
    %v1387 = vpack.c.b16 %v1083, %v1079
    %v1388 = vpack.c.b16 %v1084, %v1080
    %v1389 = vpack.c.b16 %v1085, %v1081
    %v1390 = vpack.c.b16 %v1090, %v1086
    %v1391 = vpack.c.b16 %v1091, %v1087
    %v1392 = vpack.c.b16 %v1092, %v1088
    %v1393 = vpack.c.b16 %v1093, %v1089
    %v1394 = vpack.c.b16 %v1098, %v1094
    %v1395 = vpack.c.b16 %v1099, %v1095
    %v1396 = vpack.c.b16 %v1100, %v1096
    %v1397 = vpack.c.b16 %v1101, %v1097
    %v1398 = vpack.c.b16 %v1106, %v1102
    %v1399 = vpack.c.b16 %v1107, %v1103
    %v1400 = vpack.c.b16 %v1108, %v1104
    %v1401 = vpack.c.b16 %v1109, %v1105
    %v1402 = vpack.c.b16 %v1114, %v1110
    %v1403 = vpack.c.b16 %v1115, %v1111
    %v1404 = vpack.c.b16 %v1116, %v1112
    %v1405 = vpack.c.b16 %v1117, %v1113
    %v1406 = vpack.c.b16 %v1122, %v1118
    %v1407 = vpack.c.b16 %v1123, %v1119
    %v1408 = vpack.c.b16 %v1124, %v1120
    %v1409 = vpack.c.b16 %v1125, %v1121
    %v1410 = vpack.c.b16 %v1130, %v1126
    %v1411 = vpack.c.b16 %v1131, %v1127
    %v1412 = vpack.c.b16 %v1132, %v1128
    %v1413 = vpack.c.b16 %v1133, %v1129
    %v1414 = vpack.c.b16 %v1138, %v1134
    %v1415 = vpack.c.b16 %v1139, %v1135
    %v1416 = vpack.c.b16 %v1140, %v1136
    %v1417 = vpack.c.b16 %v1141, %v1137
    %v1418 = vpack.c.b16 %v1146, %v1142
    %v1419 = vpack.c.b16 %v1147, %v1143
    %v1420 = vpack.c.b16 %v1148, %v1144
    %v1421 = vpack.c.b16 %v1149, %v1145
    %v1422 = vpack.c.b16 %v1154, %v1150
    %v1423 = vpack.c.b16 %v1155, %v1151
    %v1424 = vpack.c.b16 %v1156, %v1152
    %v1425 = vpack.c.b16 %v1157, %v1153
    %v1426 = vpack.c.b16 %v1162, %v1158
    %v1427 = vpack.c.b16 %v1163, %v1159
    %v1428 = vpack.c.b16 %v1164, %v1160
    %v1429 = vpack.c.b16 %v1165, %v1161
    %v1430 = vpack.c.b16 %v1170, %v1166
    %v1431 = vpack.c.b16 %v1171, %v1167
    %v1432 = vpack.c.b16 %v1172, %v1168
    %v1433 = vpack.c.b16 %v1173, %v1169
    %v1434 = vpack.c.b16 %v1178, %v1174
    %v1435 = vpack.c.b16 %v1179, %v1175
    %v1436 = vpack.c.b16 %v1180, %v1176
    %v1437 = vpack.c.b16 %v1181, %v1177
    %1694 = vmatprep.subr.bf16.mxu0 %v1211
    %1695 = vmatpush1.bf16.msra.mxu0 %v1210
    %1696 = vmatprep.subr.bf16.mxu0 %v1207
    %1697 = vmatpush1.bf16.msra.mxu0 %v1206
    %1698 = vmatprep.subr.bf16.mxu0 %v1203
    %1699 = vmatpush1.bf16.msra.mxu0 %v1202
    %1700 = vmatprep.subr.bf16.mxu0 %v1199
    %1701 = vmatpush1.bf16.msra.mxu0 %v1198
    %1702 = vmatprep.subr.bf16.mxu0 %v1195
    %1703 = vmatpush1.bf16.msra.mxu0 %v1194
    %1704 = vmatprep.subr.bf16.mxu0 %v1191
    %1705 = vmatpush1.bf16.msra.mxu0 %v1190
    %1706 = vmatprep.subr.bf16.mxu0 %v1187
    %1707 = vmatpush1.bf16.msra.mxu0 %v1186
    %1708 = vmatprep.subr.bf16.mxu0 %v1183
    %1709 = vmatpush1.bf16.msra.mxu0 %v1182
    %1710 = vmatprep.subr.bf16.mxu0 %v1243
    %1711 = vmatpush2.bf16.msra.mxu0 %v1242
    %1712 = vmatprep.subr.bf16.mxu0 %v1239
    %1713 = vmatpush2.bf16.msra.mxu0 %v1238
    %1714 = vmatprep.subr.bf16.mxu0 %v1235
    %1715 = vmatpush2.bf16.msra.mxu0 %v1234
    %1716 = vmatprep.subr.bf16.mxu0 %v1231
    %1717 = vmatpush2.bf16.msra.mxu0 %v1230
    %1718 = vmatprep.subr.bf16.mxu0 %v1227
    %1719 = vmatpush2.bf16.msra.mxu0 %v1226
    %1720 = vmatprep.subr.bf16.mxu0 %v1223
    %1721 = vmatpush2.bf16.msra.mxu0 %v1222
    %1722 = vmatprep.subr.bf16.mxu0 %v1219
    %1723 = vmatpush2.bf16.msra.mxu0 %v1218
    %1724 = vmatprep.subr.bf16.mxu0 %v1215
    %1725 = vmatpush2.bf16.msra.mxu0 %v1214
    %1726 = vmatprep.mubr.bf16.mxu0 %v383
    %1727 = vmatmul.mubr.bf16.gmra.mxu0 %v382
    %v1728 = vpop.f32.mrf.mxu0
    %v1729 = vadd.f32 %v317, %v1728
    %v1730 = vpop.f32.mrf.mxu0
    %v1731 = vadd.f32 %v321, %v1730
    %v1732 = vpop.f32.mrf.mxu0
    %v1733 = vadd.f32 %v317, %v1732
    %v1734 = vpop.f32.mrf.mxu0
    %v1735 = vadd.f32 %v321, %v1734
    %1736 = vmatprep.mubr.bf16.mxu0 %v391
    %1737 = vmatmul.mubr.bf16.gmra.mxu0 %v390
    %v1738 = vpop.f32.mrf.mxu0
    %v1739 = vadd.f32 %v317, %v1738
    %v1740 = vpop.f32.mrf.mxu0
    %v1741 = vadd.f32 %v321, %v1740
    %v1742 = vpop.f32.mrf.mxu0
    %v1743 = vadd.f32 %v317, %v1742
    %v1744 = vpop.f32.mrf.mxu0
    %v1745 = vadd.f32 %v321, %v1744
    %1746 = vdwg.mxu0
    %1747 = vmatprep.subr.bf16.mxu0 %v1275
    %1748 = vmatpush1.bf16.msra.mxu0 %v1274
    %1749 = vmatprep.subr.bf16.mxu0 %v1271
    %1750 = vmatpush1.bf16.msra.mxu0 %v1270
    %1751 = vmatprep.subr.bf16.mxu0 %v1267
    %1752 = vmatpush1.bf16.msra.mxu0 %v1266
    %1753 = vmatprep.subr.bf16.mxu0 %v1263
    %1754 = vmatpush1.bf16.msra.mxu0 %v1262
    %1755 = vmatprep.subr.bf16.mxu0 %v1259
    %1756 = vmatpush1.bf16.msra.mxu0 %v1258
    %1757 = vmatprep.subr.bf16.mxu0 %v1255
    %1758 = vmatpush1.bf16.msra.mxu0 %v1254
    %1759 = vmatprep.subr.bf16.mxu0 %v1251
    %1760 = vmatpush1.bf16.msra.mxu0 %v1250
    %1761 = vmatprep.subr.bf16.mxu0 %v1247
    %1762 = vmatpush1.bf16.msra.mxu0 %v1246
    %1763 = vmatprep.subr.bf16.mxu0 %v1307
    %1764 = vmatpush2.bf16.msra.mxu0 %v1306
    %1765 = vmatprep.subr.bf16.mxu0 %v1303
    %1766 = vmatpush2.bf16.msra.mxu0 %v1302
    %1767 = vmatprep.subr.bf16.mxu0 %v1299
    %1768 = vmatpush2.bf16.msra.mxu0 %v1298
    %1769 = vmatprep.subr.bf16.mxu0 %v1295
    %1770 = vmatpush2.bf16.msra.mxu0 %v1294
    %1771 = vmatprep.subr.bf16.mxu0 %v1291
    %1772 = vmatpush2.bf16.msra.mxu0 %v1290
    %1773 = vmatprep.subr.bf16.mxu0 %v1287
    %1774 = vmatpush2.bf16.msra.mxu0 %v1286
    %1775 = vmatprep.subr.bf16.mxu0 %v1283
    %1776 = vmatpush2.bf16.msra.mxu0 %v1282
    %1777 = vmatprep.subr.bf16.mxu0 %v1279
    %1778 = vmatpush2.bf16.msra.mxu0 %v1278
    %1779 = vmatprep.mubr.bf16.mxu0 %v385
    %1780 = vmatmul.mubr.bf16.gmra.mxu0 %v384
    %v1781 = vpop.f32.mrf.mxu0
    %v1782 = vadd.f32 %v1729, %v1781
    %v1783 = vpop.f32.mrf.mxu0
    %v1784 = vadd.f32 %v1731, %v1783
    %v1785 = vpop.f32.mrf.mxu0
    %v1786 = vadd.f32 %v1733, %v1785
    %v1787 = vpop.f32.mrf.mxu0
    %v1788 = vadd.f32 %v1735, %v1787
    %1789 = vmatprep.mubr.bf16.mxu0 %v393
    %1790 = vmatmul.mubr.bf16.gmra.mxu0 %v392
    %v1791 = vpop.f32.mrf.mxu0
    %v1792 = vadd.f32 %v1739, %v1791
    %v1793 = vpop.f32.mrf.mxu0
    %v1794 = vadd.f32 %v1741, %v1793
    %v1795 = vpop.f32.mrf.mxu0
    %v1796 = vadd.f32 %v1743, %v1795
    %v1797 = vpop.f32.mrf.mxu0
    %v1798 = vadd.f32 %v1745, %v1797
    %1799 = vdwg.mxu0
    %1800 = vmatprep.subr.bf16.mxu0 %v1339
    %1801 = vmatpush1.bf16.msra.mxu0 %v1338
    %1802 = vmatprep.subr.bf16.mxu0 %v1335
    %1803 = vmatpush1.bf16.msra.mxu0 %v1334
    %1804 = vmatprep.subr.bf16.mxu0 %v1331
    %1805 = vmatpush1.bf16.msra.mxu0 %v1330
    %1806 = vmatprep.subr.bf16.mxu0 %v1327
    %1807 = vmatpush1.bf16.msra.mxu0 %v1326
    %1808 = vmatprep.subr.bf16.mxu0 %v1323
    %1809 = vmatpush1.bf16.msra.mxu0 %v1322
    %1810 = vmatprep.subr.bf16.mxu0 %v1319
    %1811 = vmatpush1.bf16.msra.mxu0 %v1318
    %1812 = vmatprep.subr.bf16.mxu0 %v1315
    %1813 = vmatpush1.bf16.msra.mxu0 %v1314
    %1814 = vmatprep.subr.bf16.mxu0 %v1311
    %1815 = vmatpush1.bf16.msra.mxu0 %v1310
    %1816 = vmatprep.subr.bf16.mxu0 %v1371
    %1817 = vmatpush2.bf16.msra.mxu0 %v1370
    %1818 = vmatprep.subr.bf16.mxu0 %v1367
    %1819 = vmatpush2.bf16.msra.mxu0 %v1366
    %1820 = vmatprep.subr.bf16.mxu0 %v1363
    %1821 = vmatpush2.bf16.msra.mxu0 %v1362
    %1822 = vmatprep.subr.bf16.mxu0 %v1359
    %1823 = vmatpush2.bf16.msra.mxu0 %v1358
    %1824 = vmatprep.subr.bf16.mxu0 %v1355
    %1825 = vmatpush2.bf16.msra.mxu0 %v1354
    %1826 = vmatprep.subr.bf16.mxu0 %v1351
    %1827 = vmatpush2.bf16.msra.mxu0 %v1350
    %1828 = vmatprep.subr.bf16.mxu0 %v1347
    %1829 = vmatpush2.bf16.msra.mxu0 %v1346
    %1830 = vmatprep.subr.bf16.mxu0 %v1343
    %1831 = vmatpush2.bf16.msra.mxu0 %v1342
    %1832 = vmatprep.mubr.bf16.mxu0 %v387
    %1833 = vmatmul.mubr.bf16.gmra.mxu0 %v386
    %v1834 = vpop.f32.mrf.mxu0
    %v1835 = vadd.f32 %v1782, %v1834
    %v1836 = vpop.f32.mrf.mxu0
    %v1837 = vadd.f32 %v1784, %v1836
    %v1838 = vpop.f32.mrf.mxu0
    %v1839 = vadd.f32 %v1786, %v1838
    %v1840 = vpop.f32.mrf.mxu0
    %v1841 = vadd.f32 %v1788, %v1840
    %1842 = vmatprep.mubr.bf16.mxu0 %v395
    %1843 = vmatmul.mubr.bf16.gmra.mxu0 %v394
    %v1844 = vpop.f32.mrf.mxu0
    %v1845 = vadd.f32 %v1792, %v1844
    %v1846 = vpop.f32.mrf.mxu0
    %v1847 = vadd.f32 %v1794, %v1846
    %v1848 = vpop.f32.mrf.mxu0
    %v1849 = vadd.f32 %v1796, %v1848
    %v1850 = vpop.f32.mrf.mxu0
    %v1851 = vadd.f32 %v1798, %v1850
    %1852 = vdwg.mxu0
    %1853 = vmatprep.subr.bf16.mxu0 %v1403
    %1854 = vmatpush1.bf16.msra.mxu0 %v1402
    %1855 = vmatprep.subr.bf16.mxu0 %v1399
    %1856 = vmatpush1.bf16.msra.mxu0 %v1398
    %1857 = vmatprep.subr.bf16.mxu0 %v1395
    %1858 = vmatpush1.bf16.msra.mxu0 %v1394
    %1859 = vmatprep.subr.bf16.mxu0 %v1391
    %1860 = vmatpush1.bf16.msra.mxu0 %v1390
    %1861 = vmatprep.subr.bf16.mxu0 %v1387
    %1862 = vmatpush1.bf16.msra.mxu0 %v1386
    %1863 = vmatprep.subr.bf16.mxu0 %v1383
    %1864 = vmatpush1.bf16.msra.mxu0 %v1382
    %1865 = vmatprep.subr.bf16.mxu0 %v1379
    %1866 = vmatpush1.bf16.msra.mxu0 %v1378
    %1867 = vmatprep.subr.bf16.mxu0 %v1375
    %1868 = vmatpush1.bf16.msra.mxu0 %v1374
    %1869 = vmatprep.subr.bf16.mxu0 %v1435
    %1870 = vmatpush2.bf16.msra.mxu0 %v1434
    %1871 = vmatprep.subr.bf16.mxu0 %v1431
    %1872 = vmatpush2.bf16.msra.mxu0 %v1430
    %1873 = vmatprep.subr.bf16.mxu0 %v1427
    %1874 = vmatpush2.bf16.msra.mxu0 %v1426
    %1875 = vmatprep.subr.bf16.mxu0 %v1423
    %1876 = vmatpush2.bf16.msra.mxu0 %v1422
    %1877 = vmatprep.subr.bf16.mxu0 %v1419
    %1878 = vmatpush2.bf16.msra.mxu0 %v1418
    %1879 = vmatprep.subr.bf16.mxu0 %v1415
    %1880 = vmatpush2.bf16.msra.mxu0 %v1414
    %1881 = vmatprep.subr.bf16.mxu0 %v1411
    %1882 = vmatpush2.bf16.msra.mxu0 %v1410
    %1883 = vmatprep.subr.bf16.mxu0 %v1407
    %1884 = vmatpush2.bf16.msra.mxu0 %v1406
    %1885 = vmatprep.mubr.bf16.mxu0 %v389
    %1886 = vmatmul.mubr.bf16.gmra.mxu0 %v388
    %v1887 = vpop.f32.mrf.mxu0
    %v1888 = vadd.f32 %v1835, %v1887
    %v1889 = vpop.f32.mrf.mxu0
    %v1890 = vadd.f32 %v1837, %v1889
    %v1891 = vpop.f32.mrf.mxu0
    %v1892 = vadd.f32 %v1839, %v1891
    %v1893 = vpop.f32.mrf.mxu0
    %v1894 = vadd.f32 %v1841, %v1893
    %1895 = vmatprep.mubr.bf16.mxu0 %v397
    %1896 = vmatmul.mubr.bf16.gmra.mxu0 %v396
    %v1897 = vpop.f32.mrf.mxu0
    %v1898 = vadd.f32 %v1845, %v1897
    %v1899 = vpop.f32.mrf.mxu0
    %v1900 = vadd.f32 %v1847, %v1899
    %v1901 = vpop.f32.mrf.mxu0
    %v1902 = vadd.f32 %v1849, %v1901
    %v1903 = vpop.f32.mrf.mxu0
    %v1904 = vadd.f32 %v1851, %v1903
    %1905 = vdwg.mxu0
    %1906 = vmatprep.subr.bf16.mxu0 %v1213
    %1907 = vmatpush1.bf16.msra.mxu0 %v1212
    %1908 = vmatprep.subr.bf16.mxu0 %v1209
    %1909 = vmatpush1.bf16.msra.mxu0 %v1208
    %1910 = vmatprep.subr.bf16.mxu0 %v1205
    %1911 = vmatpush1.bf16.msra.mxu0 %v1204
    %1912 = vmatprep.subr.bf16.mxu0 %v1201
    %1913 = vmatpush1.bf16.msra.mxu0 %v1200
    %1914 = vmatprep.subr.bf16.mxu0 %v1197
    %1915 = vmatpush1.bf16.msra.mxu0 %v1196
    %1916 = vmatprep.subr.bf16.mxu0 %v1193
    %1917 = vmatpush1.bf16.msra.mxu0 %v1192
    %1918 = vmatprep.subr.bf16.mxu0 %v1189
    %1919 = vmatpush1.bf16.msra.mxu0 %v1188
    %1920 = vmatprep.subr.bf16.mxu0 %v1185
    %1921 = vmatpush1.bf16.msra.mxu0 %v1184
    %1922 = vmatprep.subr.bf16.mxu0 %v1245
    %1923 = vmatpush2.bf16.msra.mxu0 %v1244
    %1924 = vmatprep.subr.bf16.mxu0 %v1241
    %1925 = vmatpush2.bf16.msra.mxu0 %v1240
    %1926 = vmatprep.subr.bf16.mxu0 %v1237
    %1927 = vmatpush2.bf16.msra.mxu0 %v1236
    %1928 = vmatprep.subr.bf16.mxu0 %v1233
    %1929 = vmatpush2.bf16.msra.mxu0 %v1232
    %1930 = vmatprep.subr.bf16.mxu0 %v1229
    %1931 = vmatpush2.bf16.msra.mxu0 %v1228
    %1932 = vmatprep.subr.bf16.mxu0 %v1225
    %1933 = vmatpush2.bf16.msra.mxu0 %v1224
    %1934 = vmatprep.subr.bf16.mxu0 %v1221
    %1935 = vmatpush2.bf16.msra.mxu0 %v1220
    %1936 = vmatprep.subr.bf16.mxu0 %v1217
    %1937 = vmatpush2.bf16.msra.mxu0 %v1216
    %1938 = vmatprep.mubr.bf16.mxu0 %v383
    %1939 = vmatmul.mubr.bf16.gmra.mxu0 %v382
    %v1940 = vpop.f32.mrf.mxu0
    %v1941 = vadd.f32 %v325, %v1940
    %v1942 = vpop.f32.mrf.mxu0
    %v1943 = vadd.f32 %v329, %v1942
    %v1944 = vpop.f32.mrf.mxu0
    %v1945 = vadd.f32 %v325, %v1944
    %v1946 = vpop.f32.mrf.mxu0
    %v1947 = vadd.f32 %v329, %v1946
    %1948 = vmatprep.mubr.bf16.mxu0 %v391
    %1949 = vmatmul.mubr.bf16.gmra.mxu0 %v390
    %v1950 = vpop.f32.mrf.mxu0
    %v1951 = vadd.f32 %v325, %v1950
    %v1952 = vpop.f32.mrf.mxu0
    %v1953 = vadd.f32 %v329, %v1952
    %v1954 = vpop.f32.mrf.mxu0
    %v1955 = vadd.f32 %v325, %v1954
    %v1956 = vpop.f32.mrf.mxu0
    %v1957 = vadd.f32 %v329, %v1956
    %1958 = vdwg.mxu0
    %1959 = vmatprep.subr.bf16.mxu0 %v1277
    %1960 = vmatpush1.bf16.msra.mxu0 %v1276
    %1961 = vmatprep.subr.bf16.mxu0 %v1273
    %1962 = vmatpush1.bf16.msra.mxu0 %v1272
    %1963 = vmatprep.subr.bf16.mxu0 %v1269
    %1964 = vmatpush1.bf16.msra.mxu0 %v1268
    %1965 = vmatprep.subr.bf16.mxu0 %v1265
    %1966 = vmatpush1.bf16.msra.mxu0 %v1264
    %1967 = vmatprep.subr.bf16.mxu0 %v1261
    %1968 = vmatpush1.bf16.msra.mxu0 %v1260
    %1969 = vmatprep.subr.bf16.mxu0 %v1257
    %1970 = vmatpush1.bf16.msra.mxu0 %v1256
    %1971 = vmatprep.subr.bf16.mxu0 %v1253
    %1972 = vmatpush1.bf16.msra.mxu0 %v1252
    %1973 = vmatprep.subr.bf16.mxu0 %v1249
    %1974 = vmatpush1.bf16.msra.mxu0 %v1248
    %1975 = vmatprep.subr.bf16.mxu0 %v1309
    %1976 = vmatpush2.bf16.msra.mxu0 %v1308
    %1977 = vmatprep.subr.bf16.mxu0 %v1305
    %1978 = vmatpush2.bf16.msra.mxu0 %v1304
    %1979 = vmatprep.subr.bf16.mxu0 %v1301
    %1980 = vmatpush2.bf16.msra.mxu0 %v1300
    %1981 = vmatprep.subr.bf16.mxu0 %v1297
    %1982 = vmatpush2.bf16.msra.mxu0 %v1296
    %1983 = vmatprep.subr.bf16.mxu0 %v1293
    %1984 = vmatpush2.bf16.msra.mxu0 %v1292
    %1985 = vmatprep.subr.bf16.mxu0 %v1289
    %1986 = vmatpush2.bf16.msra.mxu0 %v1288
    %1987 = vmatprep.subr.bf16.mxu0 %v1285
    %1988 = vmatpush2.bf16.msra.mxu0 %v1284
    %1989 = vmatprep.subr.bf16.mxu0 %v1281
    %1990 = vmatpush2.bf16.msra.mxu0 %v1280
    %1991 = vmatprep.mubr.bf16.mxu0 %v385
    %1992 = vmatmul.mubr.bf16.gmra.mxu0 %v384
    %v1993 = vpop.f32.mrf.mxu0
    %v1994 = vadd.f32 %v1941, %v1993
    %v1995 = vpop.f32.mrf.mxu0
    %v1996 = vadd.f32 %v1943, %v1995
    %v1997 = vpop.f32.mrf.mxu0
    %v1998 = vadd.f32 %v1945, %v1997
    %v1999 = vpop.f32.mrf.mxu0
    %v2000 = vadd.f32 %v1947, %v1999
    %2001 = vmatprep.mubr.bf16.mxu0 %v393
    %2002 = vmatmul.mubr.bf16.gmra.mxu0 %v392
    %v2003 = vpop.f32.mrf.mxu0
    %v2004 = vadd.f32 %v1951, %v2003
    %v2005 = vpop.f32.mrf.mxu0
    %v2006 = vadd.f32 %v1953, %v2005
    %v2007 = vpop.f32.mrf.mxu0
    %v2008 = vadd.f32 %v1955, %v2007
    %v2009 = vpop.f32.mrf.mxu0
    %v2010 = vadd.f32 %v1957, %v2009
    %2011 = vdwg.mxu0
    %2012 = vmatprep.subr.bf16.mxu0 %v1341
    %2013 = vmatpush1.bf16.msra.mxu0 %v1340
    %2014 = vmatprep.subr.bf16.mxu0 %v1337
    %2015 = vmatpush1.bf16.msra.mxu0 %v1336
    %2016 = vmatprep.subr.bf16.mxu0 %v1333
    %2017 = vmatpush1.bf16.msra.mxu0 %v1332
    %2018 = vmatprep.subr.bf16.mxu0 %v1329
    %2019 = vmatpush1.bf16.msra.mxu0 %v1328
    %2020 = vmatprep.subr.bf16.mxu0 %v1325
    %2021 = vmatpush1.bf16.msra.mxu0 %v1324
    %2022 = vmatprep.subr.bf16.mxu0 %v1321
    %2023 = vmatpush1.bf16.msra.mxu0 %v1320
    %2024 = vmatprep.subr.bf16.mxu0 %v1317
    %2025 = vmatpush1.bf16.msra.mxu0 %v1316
    %2026 = vmatprep.subr.bf16.mxu0 %v1313
    %2027 = vmatpush1.bf16.msra.mxu0 %v1312
    %2028 = vmatprep.subr.bf16.mxu0 %v1373
    %2029 = vmatpush2.bf16.msra.mxu0 %v1372
    %2030 = vmatprep.subr.bf16.mxu0 %v1369
    %2031 = vmatpush2.bf16.msra.mxu0 %v1368
    %2032 = vmatprep.subr.bf16.mxu0 %v1365
    %2033 = vmatpush2.bf16.msra.mxu0 %v1364
    %2034 = vmatprep.subr.bf16.mxu0 %v1361
    %2035 = vmatpush2.bf16.msra.mxu0 %v1360
    %2036 = vmatprep.subr.bf16.mxu0 %v1357
    %2037 = vmatpush2.bf16.msra.mxu0 %v1356
    %2038 = vmatprep.subr.bf16.mxu0 %v1353
    %2039 = vmatpush2.bf16.msra.mxu0 %v1352
    %2040 = vmatprep.subr.bf16.mxu0 %v1349
    %2041 = vmatpush2.bf16.msra.mxu0 %v1348
    %2042 = vmatprep.subr.bf16.mxu0 %v1345
    %2043 = vmatpush2.bf16.msra.mxu0 %v1344
    %2044 = vmatprep.mubr.bf16.mxu0 %v387
    %2045 = vmatmul.mubr.bf16.gmra.mxu0 %v386
    %v2046 = vpop.f32.mrf.mxu0
    %v2047 = vadd.f32 %v1994, %v2046
    %v2048 = vpop.f32.mrf.mxu0
    %v2049 = vadd.f32 %v1996, %v2048
    %v2050 = vpop.f32.mrf.mxu0
    %v2051 = vadd.f32 %v1998, %v2050
    %v2052 = vpop.f32.mrf.mxu0
    %v2053 = vadd.f32 %v2000, %v2052
    %2054 = vmatprep.mubr.bf16.mxu0 %v395
    %2055 = vmatmul.mubr.bf16.gmra.mxu0 %v394
    %v2056 = vpop.f32.mrf.mxu0
    %v2057 = vadd.f32 %v2004, %v2056
    %v2058 = vpop.f32.mrf.mxu0
    %v2059 = vadd.f32 %v2006, %v2058
    %v2060 = vpop.f32.mrf.mxu0
    %v2061 = vadd.f32 %v2008, %v2060
    %v2062 = vpop.f32.mrf.mxu0
    %v2063 = vadd.f32 %v2010, %v2062
    %2064 = vdwg.mxu0
    %2065 = vmatprep.subr.bf16.mxu0 %v1405
    %2066 = vmatpush1.bf16.msra.mxu0 %v1404
    %2067 = vmatprep.subr.bf16.mxu0 %v1401
    %2068 = vmatpush1.bf16.msra.mxu0 %v1400
    %2069 = vmatprep.subr.bf16.mxu0 %v1397
    %2070 = vmatpush1.bf16.msra.mxu0 %v1396
    %2071 = vmatprep.subr.bf16.mxu0 %v1393
    %2072 = vmatpush1.bf16.msra.mxu0 %v1392
    %2073 = vmatprep.subr.bf16.mxu0 %v1389
    %2074 = vmatpush1.bf16.msra.mxu0 %v1388
    %2075 = vmatprep.subr.bf16.mxu0 %v1385
    %2076 = vmatpush1.bf16.msra.mxu0 %v1384
    %2077 = vmatprep.subr.bf16.mxu0 %v1381
    %2078 = vmatpush1.bf16.msra.mxu0 %v1380
    %2079 = vmatprep.subr.bf16.mxu0 %v1377
    %2080 = vmatpush1.bf16.msra.mxu0 %v1376
    %2081 = vmatprep.subr.bf16.mxu0 %v1437
    %2082 = vmatpush2.bf16.msra.mxu0 %v1436
    %2083 = vmatprep.subr.bf16.mxu0 %v1433
    %2084 = vmatpush2.bf16.msra.mxu0 %v1432
    %2085 = vmatprep.subr.bf16.mxu0 %v1429
    %2086 = vmatpush2.bf16.msra.mxu0 %v1428
    %2087 = vmatprep.subr.bf16.mxu0 %v1425
    %2088 = vmatpush2.bf16.msra.mxu0 %v1424
    %2089 = vmatprep.subr.bf16.mxu0 %v1421
    %2090 = vmatpush2.bf16.msra.mxu0 %v1420
    %2091 = vmatprep.subr.bf16.mxu0 %v1417
    %2092 = vmatpush2.bf16.msra.mxu0 %v1416
    %2093 = vmatprep.subr.bf16.mxu0 %v1413
    %2094 = vmatpush2.bf16.msra.mxu0 %v1412
    %2095 = vmatprep.subr.bf16.mxu0 %v1409
    %2096 = vmatpush2.bf16.msra.mxu0 %v1408
    %2097 = vmatprep.mubr.bf16.mxu0 %v389
    %2098 = vmatmul.mubr.bf16.gmra.mxu0 %v388
    %v2099 = vpop.f32.mrf.mxu0
    %v2100 = vadd.f32 %v2047, %v2099
    %v2101 = vpop.f32.mrf.mxu0
    %v2102 = vadd.f32 %v2049, %v2101
    %v2103 = vpop.f32.mrf.mxu0
    %v2104 = vadd.f32 %v2051, %v2103
    %v2105 = vpop.f32.mrf.mxu0
    %v2106 = vadd.f32 %v2053, %v2105
    %2107 = vmatprep.mubr.bf16.mxu0 %v397
    %2108 = vmatmul.mubr.bf16.gmra.mxu0 %v396
    %v2109 = vpop.f32.mrf.mxu0
    %v2110 = vadd.f32 %v2057, %v2109
    %v2111 = vpop.f32.mrf.mxu0
    %v2112 = vadd.f32 %v2059, %v2111
    %v2113 = vpop.f32.mrf.mxu0
    %v2114 = vadd.f32 %v2061, %v2113
    %v2115 = vpop.f32.mrf.mxu0
    %v2116 = vadd.f32 %v2063, %v2115
    %2117 = vdwg.mxu0
    %v2118 = vmax.f32 %v1888, 0.0
    %v2119 = vmax.f32 %v1890, 0.0
    %v2120 = vmax.f32 %v2100, 0.0
    %v2121 = vmax.f32 %v2102, 0.0
    %v2122 = vmax.f32 %v1892, 0.0
    %v2123 = vmax.f32 %v1894, 0.0
    %v2124 = vmax.f32 %v2104, 0.0
    %v2125 = vmax.f32 %v2106, 0.0
    %v2126 = vmax.f32 %v1898, 0.0
    %v2127 = vmax.f32 %v1900, 0.0
    %v2128 = vmax.f32 %v2110, 0.0
    %v2129 = vmax.f32 %v2112, 0.0
    %v2130 = vmax.f32 %v1902, 0.0
    %v2131 = vmax.f32 %v1904, 0.0
    %v2132 = vmax.f32 %v2114, 0.0
    %v2133 = vmax.f32 %v2116, 0.0
    %v2134 = vpack.c.bf16 %v2122, %v2118
    %v2135 = vpack.c.bf16 %v2123, %v2119
    %v2136 = vpack.c.bf16 %v2124, %v2120
    %v2137 = vpack.c.bf16 %v2125, %v2121
    %v2138 = vpack.c.bf16 %v2130, %v2126
    %v2139 = vpack.c.bf16 %v2131, %v2127
    %v2140 = vpack.c.bf16 %v2132, %v2128
    %v2141 = vpack.c.bf16 %v2133, %v2129
    %v2150 = vunpack.c.l.b16 %v2134
    %v2151 = vunpack.c.l.b16 %v2135
    %v2152 = vunpack.c.l.b16 %v2136
    %v2153 = vunpack.c.l.b16 %v2137
    %v2154 = vunpack.c.h.b16 %v2134
    %v2155 = vunpack.c.h.b16 %v2135
    %v2156 = vunpack.c.h.b16 %v2136
    %v2157 = vunpack.c.h.b16 %v2137
    %v2158 = vunpack.c.l.b16 %v2138
    %v2159 = vunpack.c.l.b16 %v2139
    %v2160 = vunpack.c.l.b16 %v2140
    %v2161 = vunpack.c.l.b16 %v2141
    %v2162 = vunpack.c.h.b16 %v2138
    %v2163 = vunpack.c.h.b16 %v2139
    %v2164 = vunpack.c.h.b16 %v2140
    %v2165 = vunpack.c.h.b16 %v2141
    %v2166 = vpack.c.b16 %v2151, %v2150
    %v2167 = vpack.c.b16 %v2153, %v2152
    %v2168 = vpack.c.b16 %v2155, %v2154
    %v2169 = vpack.c.b16 %v2157, %v2156
    %v2170 = vpack.c.b16 %v2159, %v2158
    %v2171 = vpack.c.b16 %v2161, %v2160
    %v2172 = vpack.c.b16 %v2163, %v2162
    %v2173 = vpack.c.b16 %v2165, %v2164
    %2182 = vst [vmem:[%s3] sm:$0xff] %v2166
    %2183 = vst [vmem:[%s3 + $0x8] sm:$0xff] %v2167
    %2184 = vst [vmem:[%s3 + $0x10] sm:$0xff] %v2168
    %2185 = vst [vmem:[%s3 + $0x18] sm:$0xff] %v2169
    %2186 = vst [vmem:[%s3 + $0x20] sm:$0xff] %v2170
    %2187 = vst [vmem:[%s3 + $0x28] sm:$0xff] %v2171
    %2188 = vst [vmem:[%s3 + $0x30] sm:$0xff] %v2172
    %2189 = vst [vmem:[%s3 + $0x38] sm:$0xff] %v2173
    // Predicated region
    $region22: #{decoder_forward.6} parent=1 // pred_check
      _
    $region23: #{decoder_forward.6} parent=1 // pred_check_branch
      %2191 = sbr.rel (0) target = $region25
    $region24: #{decoder_forward.6} parent=1 // pred_region
      _
    $region25: #{decoder_forward.6} parent=1 // pred_fallthru
      _
    // Predicated region
    $region26: #{decoder_forward.6} parent=1 // pred_check
      _
    $region27: #{decoder_forward.6} parent=1 // pred_check_branch
      %2193 = sbr.rel (0) target = $region29
    $region28: #{decoder_forward.6} parent=1 // pred_region
      _
    $region29: #{decoder_forward.6} parent=1 // pred_fallthru
      _
    %2194 = vsyncpa [#allocation3], 1
    %2195 = vsyncpa [#allocation5], 1

// kernel: decoder_forward.8
$region0: #{decoder_forward.8}
  #allocation0 [shape = 'u32[]', space=smem, size = 0x4, offset = 0x4, fixed_abs, tag = 'smem constant byte address 0x4 - core index']
  #allocation1 [shape = 'u32[144,128]{1,0:T(1,128)}', space=vmem, size = 0x12000, scoped, tag = 'internal scratch']
  %s0 = inlined_call_operand.vmem [shape: bf16[512,256], index: 0, kind: input, shape index: {}]
  %s1 = inlined_call_operand.vmem [shape: bf16[256,128], index: 1, kind: input, shape index: {}]
  %s2 = inlined_call_operand.vmem [shape: f32[1,128], index: 2, kind: input, shape index: {}]
  %s3 = inlined_call_operand.vmem [shape: bf16[512,128], index: 3, kind: output, shape index: {}]
  %s4 = sld [smem:[#allocation0]]
  $region45: #{decoder_forward.8} parent=0
    _
  %s6 = ssub.s32 1, %s4
  %s7 = scalar_select 0, %s6, %s4
  loop: start=0, step=1, limit=4
  $region2: #{decoder_forward.8} parent=0 // loop_pre_header
    _
  $region3: #{decoder_forward.8} parent=0 // loop_header
    %s9 = sphi 0, %s13
    %p10 = scmp.ge.s32.totalorder %s9, 4
    %s19 = sphi 0, %s21
    %s22 = sphi 0, %s19
    %s23 = sphi 0, %s22
    %s39 = sphi 0, %s23
    %s43 = sphi 0, %s43
    %s45 = sphi 0, %s43
    %s46 = sphi 0, %s45
    %s60 = sphi 0, %s46
    %s64 = sphi 0, %s64
    %s66 = sphi 0, %s64
    %s67 = sphi 0, %s66
    %s81 = sphi 0, %s67
    %s87 = sphi 0, %s89
    %s90 = sphi 0, %s87
    %s91 = sphi 0, %s90
    %s107 = sphi 0, %s91
  $region4: #{decoder_forward.8} parent=0 // loop_header_branch
    %12 = sbr.rel (%p10) target = $region8
  $region5: #{decoder_forward.8} parent=0 // loop_body
    %s14 = ssub.s32 %s9, 1
    %s15 = ssub.s32 %s9, 2
    %s16 = sadd.s32 %s9, 1
    %s17 = ssub.s32 %s9, %s16
    %p18 = scmp.eq.s32.totalorder %s17, 0
    %s20 = sadd.s32 %s19, 1
    %s21 = scalar_select %p18, %s19, %s20
    %p24 = pneg %p18
    %p25 = scmp.eq.s32.totalorder %s9, 1
    %p26 = por %p24, %p25
    %p27 = scmp.ne.s32.totalorder %s19, %s22
    %p28 = scmp.eq.s32.totalorder %s9, 0
    %p29 = por %p27, %p28
    %p30 = scmp.ne.s32.totalorder %s19, %s22
    %p31 = scmp.eq.s32.totalorder %s14, 1
    %p32 = por %p30, %p31
    %p33 = scmp.ne.s32.totalorder %s22, %s23
    %p34 = scmp.eq.s32.totalorder %s14, 0
    %p35 = por %p33, %p34
    %p36 = scmp.ne.s32.totalorder %s22, %s23
    %p37 = scmp.eq.s32.totalorder %s15, 1
    %p38 = por %p36, %p37
    %p40 = scmp.ne.s32.totalorder %s23, %s39
    %p41 = scmp.eq.s32.totalorder %s15, 0
    %p42 = por %p40, %p41
    %s44 = sadd.s32 %s43, 1
    %p47 = scmp.eq.s32.totalorder %s9, 1
    %p48 = scmp.ne.s32.totalorder %s43, %s45
    %p49 = scmp.eq.s32.totalorder %s9, 0
    %p50 = por %p48, %p49
    %p51 = scmp.ne.s32.totalorder %s43, %s45
    %p52 = scmp.eq.s32.totalorder %s14, 1
    %p53 = por %p51, %p52
    %p54 = scmp.ne.s32.totalorder %s45, %s46
    %p55 = scmp.eq.s32.totalorder %s14, 0
    %p56 = por %p54, %p55
    %p57 = scmp.ne.s32.totalorder %s45, %s46
    %p58 = scmp.eq.s32.totalorder %s15, 1
    %p59 = por %p57, %p58
    %p61 = scmp.ne.s32.totalorder %s46, %s60
    %p62 = scmp.eq.s32.totalorder %s15, 0
    %p63 = por %p61, %p62
    %s65 = sadd.s32 %s64, 1
    %p68 = scmp.eq.s32.totalorder %s9, 1
    %p69 = scmp.ne.s32.totalorder %s64, %s66
    %p70 = scmp.eq.s32.totalorder %s9, 0
    %p71 = por %p69, %p70
    %p72 = scmp.ne.s32.totalorder %s64, %s66
    %p73 = scmp.eq.s32.totalorder %s14, 1
    %p74 = por %p72, %p73
    %p75 = scmp.ne.s32.totalorder %s66, %s67
    %p76 = scmp.eq.s32.totalorder %s14, 0
    %p77 = por %p75, %p76
    %p78 = scmp.ne.s32.totalorder %s66, %s67
    %p79 = scmp.eq.s32.totalorder %s15, 1
    %p80 = por %p78, %p79
    %p82 = scmp.ne.s32.totalorder %s67, %s81
    %p83 = scmp.eq.s32.totalorder %s15, 0
    %p84 = por %p82, %p83
    %s85 = ssub.s32 %s9, %s16
    %p86 = scmp.eq.s32.totalorder %s85, 0
    %s88 = sadd.s32 %s87, 1
    %s89 = scalar_select %p86, %s87, %s88
    %p92 = pneg %p86
    %p93 = scmp.eq.s32.totalorder %s9, 1
    %p94 = por %p92, %p93
    %p95 = scmp.ne.s32.totalorder %s87, %s90
    %p96 = scmp.eq.s32.totalorder %s9, 0
    %p97 = por %p95, %p96
    %p98 = scmp.ne.s32.totalorder %s87, %s90
    %p99 = scmp.eq.s32.totalorder %s14, 1
    %p100 = por %p98, %p99
    %p101 = scmp.ne.s32.totalorder %s90, %s91
    %p102 = scmp.eq.s32.totalorder %s14, 0
    %p103 = por %p101, %p102
    %p104 = scmp.ne.s32.totalorder %s90, %s91
    %p105 = scmp.eq.s32.totalorder %s15, 1
    %p106 = por %p104, %p105
    %p108 = scmp.ne.s32.totalorder %s91, %s107
    %p109 = scmp.eq.s32.totalorder %s15, 0
    %p110 = por %p108, %p109
    %p111 = scmp.le.s32.totalorder 1, %s9
    %p112 = scmp.lt.s32.totalorder %s9, 3
    %p113 = pnand %p111, %p112
    %p114 = pneg %p113
    // Predicated region
    $region9: #{decoder_forward.8} parent=5 // pred_check
      _
    $region10: #{decoder_forward.8} parent=5 // pred_check_branch
      %116 = sbr.rel (%p113) target = $region12
    $region11: #{decoder_forward.8} parent=5 // pred_region
      %s117 = ssub.s32 %s9, 1
      // Predicated region
      $region13: #{decoder_forward.8} parent=11 // pred_check
        %p118 = pneg %p56
      $region14: #{decoder_forward.8} parent=11 // pred_check_branch
        %120 = sbr.rel (%p118) target = $region16
      $region15: #{decoder_forward.8} parent=11 // pred_region
        _
      $region16: #{decoder_forward.8} parent=11 // pred_fallthru
        _
      // Predicated region
      $region17: #{decoder_forward.8} parent=11 // pred_check
        %p121 = pneg %p77
      $region18: #{decoder_forward.8} parent=11 // pred_check_branch
        %123 = sbr.rel (%p121) target = $region20
      $region19: #{decoder_forward.8} parent=11 // pred_region
        _
      $region20: #{decoder_forward.8} parent=11 // pred_fallthru
        _
    $region12: #{decoder_forward.8} parent=5 // pred_fallthru
      _
    %p124 = scmp.lt.s32.totalorder %s9, 2
    // Predicated region
    $region21: #{decoder_forward.8} parent=5 // pred_check
      %p125 = pneg %p124
    $region22: #{decoder_forward.8} parent=5 // pred_check_branch
      %127 = sbr.rel (%p125) target = $region24
    $region23: #{decoder_forward.8} parent=5 // pred_region
      // Predicated region
      $region25: #{decoder_forward.8} parent=23 // pred_check
        %p128 = pneg %p29
      $region26: #{decoder_forward.8} parent=23 // pred_check_branch
        %130 = sbr.rel (%p128) target = $region28
      $region27: #{decoder_forward.8} parent=23 // pred_region
        %s131 = smul.u32 32, %s9
        %p132 = scmp.lt.s32.totalorder %s131, 63
        %s133 = scalar_select %p132, %s131, 63
        %s134 = smul.addr %s133, 2
        %s135 = smul.addr %s134, 4
        %s136 = scalar_lea.vmem %s0, %s135
        %s137 = smul.u32 32, %s9
      $region28: #{decoder_forward.8} parent=23 // pred_fallthru
        _
    $region24: #{decoder_forward.8} parent=5 // pred_fallthru
      _
    %p138 = scmp.le.s32.totalorder 1, %s9
    %p139 = scmp.lt.s32.totalorder %s9, 3
    %p140 = pnand %p138, %p139
    %p141 = pneg %p140
    // Predicated region
    $region29: #{decoder_forward.8} parent=5 // pred_check
      _
    $region30: #{decoder_forward.8} parent=5 // pred_check_branch
      %143 = sbr.rel (%p140) target = $region32
    $region31: #{decoder_forward.8} parent=5 // pred_region
      %s144 = ssub.s32 %s9, 1
      %s145 = smul.u32 32, %s14
      %p146 = scmp.lt.s32.totalorder %s145, 63
      %s147 = scalar_select %p146, %s145, 63
      %s148 = smul.addr %s147, 2
      %s149 = smul.addr %s148, 4
      %s150 = scalar_lea.vmem %s0, %s149
      %p151 = pneg %p35
      %p152 = pneg %p32
      %p153 = pneg %p56
      %p154 = pneg %p53
      %p155 = pneg %p77
      %p156 = pneg %p74
      %p157 = pneg %p103
      %p158 = pneg %p100
      %s159 = smul.u32 32, %s14
      %p160 = scmp.lt.s32.totalorder %s159, 63
      %s161 = scalar_select %p160, %s159, 63
      %s162 = smul.addr %s161, 4
      %s163 = scalar_lea.vmem %s3, %s162
      %s164 = smul.u32 32, %s14
      %p165 = scmp.lt.s32.totalorder %s164, 63
      %s166 = scalar_select %p165, %s164, 63
      %s167 = smul.addr %s166, 2
      %s168 = smul.addr %s167, 4
      %s169 = scalar_lea.vmem %s0, %s168
      %s170 = smul.u32 32, %s14
      %s171 = smul.u32 32, %s14
      %p172 = scmp.lt.s32.totalorder %s171, 63
      %s173 = scalar_select %p172, %s171, 63
      %s174 = smul.addr %s173, 4
      %s175 = scalar_lea.vmem %s3, %s174
      %s176 = smul.u32 32, %s14
      %v178 = vld [vmem:[%s169] sm:$0xff]
      %v179 = vld [vmem:[%s169 + $0x8] sm:$0xff]
      %v180 = vld [vmem:[%s169 + $0x10] sm:$0xff]
      %v181 = vld [vmem:[%s169 + $0x18] sm:$0xff]
      %v182 = vld [vmem:[%s169 + $0x20] sm:$0xff]
      %v183 = vld [vmem:[%s169 + $0x28] sm:$0xff]
      %v184 = vld [vmem:[%s169 + $0x30] sm:$0xff]
      %v185 = vld [vmem:[%s169 + $0x38] sm:$0xff]
      %v186 = vld [vmem:[%s169 + $0x40] sm:$0xff]
      %v187 = vld [vmem:[%s169 + $0x48] sm:$0xff]
      %v188 = vld [vmem:[%s169 + $0x50] sm:$0xff]
      %v189 = vld [vmem:[%s169 + $0x58] sm:$0xff]
      %v190 = vld [vmem:[%s169 + $0x60] sm:$0xff]
      %v191 = vld [vmem:[%s169 + $0x68] sm:$0xff]
      %v192 = vld [vmem:[%s169 + $0x70] sm:$0xff]
      %v193 = vld [vmem:[%s169 + $0x78] sm:$0xff]
      %v194 = vld [vmem:[%s169 + $0x80] sm:$0xff]
      %v195 = vld [vmem:[%s169 + $0x88] sm:$0xff]
      %v196 = vld [vmem:[%s169 + $0x90] sm:$0xff]
      %v197 = vld [vmem:[%s169 + $0x98] sm:$0xff]
      %v198 = vld [vmem:[%s169 + $0xa0] sm:$0xff]
      %v199 = vld [vmem:[%s169 + $0xa8] sm:$0xff]
      %v200 = vld [vmem:[%s169 + $0xb0] sm:$0xff]
      %v201 = vld [vmem:[%s169 + $0xb8] sm:$0xff]
      %v202 = vld [vmem:[%s169 + $0xc0] sm:$0xff]
      %v203 = vld [vmem:[%s169 + $0xc8] sm:$0xff]
      %v204 = vld [vmem:[%s169 + $0xd0] sm:$0xff]
      %v205 = vld [vmem:[%s169 + $0xd8] sm:$0xff]
      %v206 = vld [vmem:[%s169 + $0xe0] sm:$0xff]
      %v207 = vld [vmem:[%s169 + $0xe8] sm:$0xff]
      %v208 = vld [vmem:[%s169 + $0xf0] sm:$0xff]
      %v209 = vld [vmem:[%s169 + $0xf8] sm:$0xff]
      %v210 = vld [vmem:[%s1] sm:$0xf]
      %v211 = vld [vmem:[%s1 + $0x4] sm:$0xf]
      %v212 = vld [vmem:[%s1 + $0x8] sm:$0xf]
      %v213 = vld [vmem:[%s1 + $0xc] sm:$0xf]
      %v214 = vld [vmem:[%s1 + $0x10] sm:$0xf]
      %v215 = vld [vmem:[%s1 + $0x14] sm:$0xf]
      %v216 = vld [vmem:[%s1 + $0x18] sm:$0xf]
      %v217 = vld [vmem:[%s1 + $0x1c] sm:$0xf]
      %v218 = vld [vmem:[%s1 + $0x20] sm:$0xf]
      %v219 = vld [vmem:[%s1 + $0x24] sm:$0xf]
      %v220 = vld [vmem:[%s1 + $0x28] sm:$0xf]
      %v221 = vld [vmem:[%s1 + $0x2c] sm:$0xf]
      %v222 = vld [vmem:[%s1 + $0x30] sm:$0xf]
      %v223 = vld [vmem:[%s1 + $0x34] sm:$0xf]
      %v224 = vld [vmem:[%s1 + $0x38] sm:$0xf]
      %v225 = vld [vmem:[%s1 + $0x3c] sm:$0xf]
      %v226 = vld [vmem:[%s1 + $0x40] sm:$0xf]
      %v227 = vld [vmem:[%s1 + $0x44] sm:$0xf]
      %v228 = vld [vmem:[%s1 + $0x48] sm:$0xf]
      %v229 = vld [vmem:[%s1 + $0x4c] sm:$0xf]
      %v230 = vld [vmem:[%s1 + $0x50] sm:$0xf]
      %v231 = vld [vmem:[%s1 + $0x54] sm:$0xf]
      %v232 = vld [vmem:[%s1 + $0x58] sm:$0xf]
      %v233 = vld [vmem:[%s1 + $0x5c] sm:$0xf]
      %v234 = vld [vmem:[%s1 + $0x60] sm:$0xf]
      %v235 = vld [vmem:[%s1 + $0x64] sm:$0xf]
      %v236 = vld [vmem:[%s1 + $0x68] sm:$0xf]
      %v237 = vld [vmem:[%s1 + $0x6c] sm:$0xf]
      %v238 = vld [vmem:[%s1 + $0x70] sm:$0xf]
      %v239 = vld [vmem:[%s1 + $0x74] sm:$0xf]
      %v240 = vld [vmem:[%s1 + $0x78] sm:$0xf]
      %v241 = vld [vmem:[%s1 + $0x7c] sm:$0xf]
      %v242 = vld [vmem:[%s2] sm:$0x1]
      %v244 = vlaneseq
      %v245 = vshrl.u32 %v244, 7
      %v246 = vsub.s32 0, %v245
      %v247 = vrot.slane %v242, %v246
      %v281 = vunpack.c.l.b16 %v178
      %v282 = vunpack.c.h.b16 %v178
      %v283 = vunpack.c.l.b16 %v179
      %v284 = vunpack.c.h.b16 %v179
      %v285 = vunpack.c.l.b16 %v180
      %v286 = vunpack.c.h.b16 %v180
      %v287 = vunpack.c.l.b16 %v181
      %v288 = vunpack.c.h.b16 %v181
      %v289 = vunpack.c.l.b16 %v182
      %v290 = vunpack.c.h.b16 %v182
      %v291 = vunpack.c.l.b16 %v183
      %v292 = vunpack.c.h.b16 %v183
      %v293 = vunpack.c.l.b16 %v184
      %v294 = vunpack.c.h.b16 %v184
      %v295 = vunpack.c.l.b16 %v185
      %v296 = vunpack.c.h.b16 %v185
      %v297 = vunpack.c.l.b16 %v186
      %v298 = vunpack.c.h.b16 %v186
      %v299 = vunpack.c.l.b16 %v187
      %v300 = vunpack.c.h.b16 %v187
      %v301 = vunpack.c.l.b16 %v188
      %v302 = vunpack.c.h.b16 %v188
      %v303 = vunpack.c.l.b16 %v189
      %v304 = vunpack.c.h.b16 %v189
      %v305 = vunpack.c.l.b16 %v190
      %v306 = vunpack.c.h.b16 %v190
      %v307 = vunpack.c.l.b16 %v191
      %v308 = vunpack.c.h.b16 %v191
      %v309 = vunpack.c.l.b16 %v192
      %v310 = vunpack.c.h.b16 %v192
      %v311 = vunpack.c.l.b16 %v193
      %v312 = vunpack.c.h.b16 %v193
      %v313 = vunpack.c.l.b16 %v194
      %v314 = vunpack.c.h.b16 %v194
      %v315 = vunpack.c.l.b16 %v195
      %v316 = vunpack.c.h.b16 %v195
      %v317 = vunpack.c.l.b16 %v196
      %v318 = vunpack.c.h.b16 %v196
      %v319 = vunpack.c.l.b16 %v197
      %v320 = vunpack.c.h.b16 %v197
      %v321 = vunpack.c.l.b16 %v198
      %v322 = vunpack.c.h.b16 %v198
      %v323 = vunpack.c.l.b16 %v199
      %v324 = vunpack.c.h.b16 %v199
      %v325 = vunpack.c.l.b16 %v200
      %v326 = vunpack.c.h.b16 %v200
      %v327 = vunpack.c.l.b16 %v201
      %v328 = vunpack.c.h.b16 %v201
      %v329 = vunpack.c.l.b16 %v202
      %v330 = vunpack.c.h.b16 %v202
      %v331 = vunpack.c.l.b16 %v203
      %v332 = vunpack.c.h.b16 %v203
      %v333 = vunpack.c.l.b16 %v204
      %v334 = vunpack.c.h.b16 %v204
      %v335 = vunpack.c.l.b16 %v205
      %v336 = vunpack.c.h.b16 %v205
      %v337 = vunpack.c.l.b16 %v206
      %v338 = vunpack.c.h.b16 %v206
      %v339 = vunpack.c.l.b16 %v207
      %v340 = vunpack.c.h.b16 %v207
      %v341 = vunpack.c.l.b16 %v208
      %v342 = vunpack.c.h.b16 %v208
      %v343 = vunpack.c.l.b16 %v209
      %v344 = vunpack.c.h.b16 %v209
      %v345 = vpack.c.b16 %v283, %v281
      %v346 = vpack.c.b16 %v284, %v282
      %v347 = vpack.c.b16 %v287, %v285
      %v348 = vpack.c.b16 %v288, %v286
      %v349 = vpack.c.b16 %v291, %v289
      %v350 = vpack.c.b16 %v292, %v290
      %v351 = vpack.c.b16 %v295, %v293
      %v352 = vpack.c.b16 %v296, %v294
      %v353 = vpack.c.b16 %v299, %v297
      %v354 = vpack.c.b16 %v300, %v298
      %v355 = vpack.c.b16 %v303, %v301
      %v356 = vpack.c.b16 %v304, %v302
      %v357 = vpack.c.b16 %v307, %v305
      %v358 = vpack.c.b16 %v308, %v306
      %v359 = vpack.c.b16 %v311, %v309
      %v360 = vpack.c.b16 %v312, %v310
      %v361 = vpack.c.b16 %v315, %v313
      %v362 = vpack.c.b16 %v316, %v314
      %v363 = vpack.c.b16 %v319, %v317
      %v364 = vpack.c.b16 %v320, %v318
      %v365 = vpack.c.b16 %v323, %v321
      %v366 = vpack.c.b16 %v324, %v322
      %v367 = vpack.c.b16 %v327, %v325
      %v368 = vpack.c.b16 %v328, %v326
      %v369 = vpack.c.b16 %v331, %v329
      %v370 = vpack.c.b16 %v332, %v330
      %v371 = vpack.c.b16 %v335, %v333
      %v372 = vpack.c.b16 %v336, %v334
      %v373 = vpack.c.b16 %v339, %v337
      %v374 = vpack.c.b16 %v340, %v338
      %v375 = vpack.c.b16 %v343, %v341
      %v376 = vpack.c.b16 %v344, %v342
      %v441 = vunpack.c.l.b16 %v210
      %v442 = vunpack.c.l.b16 %v211
      %v443 = vunpack.c.l.b16 %v212
      %v444 = vunpack.c.l.b16 %v213
      %v445 = vunpack.c.l.b16 %v214
      %v446 = vunpack.c.l.b16 %v215
      %v447 = vunpack.c.l.b16 %v216
      %v448 = vunpack.c.l.b16 %v217
      %v449 = vunpack.c.l.b16 %v218
      %v450 = vunpack.c.l.b16 %v219
      %v451 = vunpack.c.l.b16 %v220
      %v452 = vunpack.c.l.b16 %v221
      %v453 = vunpack.c.l.b16 %v222
      %v454 = vunpack.c.l.b16 %v223
      %v455 = vunpack.c.l.b16 %v224
      %v456 = vunpack.c.l.b16 %v225
      %v457 = vunpack.c.l.b16 %v226
      %v458 = vunpack.c.l.b16 %v227
      %v459 = vunpack.c.l.b16 %v228
      %v460 = vunpack.c.l.b16 %v229
      %v461 = vunpack.c.l.b16 %v230
      %v462 = vunpack.c.l.b16 %v231
      %v463 = vunpack.c.l.b16 %v232
      %v464 = vunpack.c.l.b16 %v233
      %v465 = vunpack.c.l.b16 %v234
      %v466 = vunpack.c.l.b16 %v235
      %v467 = vunpack.c.l.b16 %v236
      %v468 = vunpack.c.l.b16 %v237
      %v469 = vunpack.c.l.b16 %v238
      %v470 = vunpack.c.l.b16 %v239
      %v471 = vunpack.c.l.b16 %v240
      %v472 = vunpack.c.l.b16 %v241
      %v473 = vpack.c.b16 %v442, %v441
      %v474 = vpack.c.b16 %v444, %v443
      %v475 = vpack.c.b16 %v446, %v445
      %v476 = vpack.c.b16 %v448, %v447
      %v477 = vpack.c.b16 %v450, %v449
      %v478 = vpack.c.b16 %v452, %v451
      %v479 = vpack.c.b16 %v454, %v453
      %v480 = vpack.c.b16 %v456, %v455
      %v481 = vpack.c.b16 %v458, %v457
      %v482 = vpack.c.b16 %v460, %v459
      %v483 = vpack.c.b16 %v462, %v461
      %v484 = vpack.c.b16 %v464, %v463
      %v485 = vpack.c.b16 %v466, %v465
      %v486 = vpack.c.b16 %v468, %v467
      %v487 = vpack.c.b16 %v470, %v469
      %v488 = vpack.c.b16 %v472, %v471
      %505 = vmatprep.subr.bf16.mxu0 0
      %506 = vmatpush1.bf16.msra.mxu0 %v480
      %507 = vmatprep.subr.bf16.mxu0 0
      %508 = vmatpush1.bf16.msra.mxu0 %v479
      %509 = vmatprep.subr.bf16.mxu0 0
      %510 = vmatpush1.bf16.msra.mxu0 %v478
      %511 = vmatprep.subr.bf16.mxu0 0
      %512 = vmatpush1.bf16.msra.mxu0 %v477
      %513 = vmatprep.subr.bf16.mxu0 0
      %514 = vmatpush1.bf16.msra.mxu0 %v476
      %515 = vmatprep.subr.bf16.mxu0 0
      %516 = vmatpush1.bf16.msra.mxu0 %v475
      %517 = vmatprep.subr.bf16.mxu0 0
      %518 = vmatpush1.bf16.msra.mxu0 %v474
      %519 = vmatprep.subr.bf16.mxu0 0
      %520 = vmatpush1.bf16.msra.mxu0 %v473
      %521 = vmatprep.subr.bf16.mxu0 0
      %522 = vmatpush2.bf16.msra.mxu0 %v488
      %523 = vmatprep.subr.bf16.mxu0 0
      %524 = vmatpush2.bf16.msra.mxu0 %v487
      %525 = vmatprep.subr.bf16.mxu0 0
      %526 = vmatpush2.bf16.msra.mxu0 %v486
      %527 = vmatprep.subr.bf16.mxu0 0
      %528 = vmatpush2.bf16.msra.mxu0 %v485
      %529 = vmatprep.subr.bf16.mxu0 0
      %530 = vmatpush2.bf16.msra.mxu0 %v484
      %531 = vmatprep.subr.bf16.mxu0 0
      %532 = vmatpush2.bf16.msra.mxu0 %v483
      %533 = vmatprep.subr.bf16.mxu0 0
      %534 = vmatpush2.bf16.msra.mxu0 %v482
      %535 = vmatprep.subr.bf16.mxu0 0
      %536 = vmatpush2.bf16.msra.mxu0 %v481
      %537 = vmatprep.mubr.bf16.mxu0 %v346
      %538 = vmatmul.mubr.bf16.gmra.mxu0 %v345
      %v539 = vpop.f32.mrf.mxu0
      %v540 = vadd.f32 %v247, %v539
      %v541 = vpop.f32.mrf.mxu0
      %v542 = vpop.f32.mrf.mxu0
      %v543 = vadd.f32 %v247, %v542
      %v544 = vpop.f32.mrf.mxu0
      %545 = vmatprep.mubr.bf16.mxu0 %v348
      %546 = vmatmul.mubr.bf16.gmra.mxu0 %v347
      %v547 = vpop.f32.mrf.mxu0
      %v548 = vadd.f32 %v247, %v547
      %v549 = vpop.f32.mrf.mxu0
      %v550 = vpop.f32.mrf.mxu0
      %v551 = vadd.f32 %v247, %v550
      %v552 = vpop.f32.mrf.mxu0
      %553 = vmatprep.mubr.bf16.mxu0 %v350
      %554 = vmatmul.mubr.bf16.gmra.mxu0 %v349
      %v555 = vpop.f32.mrf.mxu0
      %v556 = vadd.f32 %v247, %v555
      %v557 = vpop.f32.mrf.mxu0
      %v558 = vpop.f32.mrf.mxu0
      %v559 = vadd.f32 %v247, %v558
      %v560 = vpop.f32.mrf.mxu0
      %561 = vmatprep.mubr.bf16.mxu0 %v352
      %562 = vmatmul.mubr.bf16.gmra.mxu0 %v351
      %v563 = vpop.f32.mrf.mxu0
      %v564 = vadd.f32 %v247, %v563
      %v565 = vpop.f32.mrf.mxu0
      %v566 = vpop.f32.mrf.mxu0
      %v567 = vadd.f32 %v247, %v566
      %v568 = vpop.f32.mrf.mxu0
      %569 = vmatprep.mubr.bf16.mxu0 %v354
      %570 = vmatmul.mubr.bf16.gmra.mxu0 %v353
      %v571 = vpop.f32.mrf.mxu0
      %v572 = vadd.f32 %v247, %v571
      %v573 = vpop.f32.mrf.mxu0
      %v574 = vpop.f32.mrf.mxu0
      %v575 = vadd.f32 %v247, %v574
      %v576 = vpop.f32.mrf.mxu0
      %577 = vmatprep.mubr.bf16.mxu0 %v356
      %578 = vmatmul.mubr.bf16.gmra.mxu0 %v355
      %v579 = vpop.f32.mrf.mxu0
      %v580 = vadd.f32 %v247, %v579
      %v581 = vpop.f32.mrf.mxu0
      %v582 = vpop.f32.mrf.mxu0
      %v583 = vadd.f32 %v247, %v582
      %v584 = vpop.f32.mrf.mxu0
      %585 = vmatprep.mubr.bf16.mxu0 %v358
      %586 = vmatmul.mubr.bf16.gmra.mxu0 %v357
      %v587 = vpop.f32.mrf.mxu0
      %v588 = vadd.f32 %v247, %v587
      %v589 = vpop.f32.mrf.mxu0
      %v590 = vpop.f32.mrf.mxu0
      %v591 = vadd.f32 %v247, %v590
      %v592 = vpop.f32.mrf.mxu0
      %593 = vmatprep.mubr.bf16.mxu0 %v360
      %594 = vmatmul.mubr.bf16.gmra.mxu0 %v359
      %v595 = vpop.f32.mrf.mxu0
      %v596 = vadd.f32 %v247, %v595
      %v597 = vpop.f32.mrf.mxu0
      %v598 = vpop.f32.mrf.mxu0
      %v599 = vadd.f32 %v247, %v598
      %v600 = vpop.f32.mrf.mxu0
      %601 = vmatprep.mubr.bf16.mxu0 %v362
      %602 = vmatmul.mubr.bf16.gmra.mxu0 %v361
      %v603 = vpop.f32.mrf.mxu0
      %v604 = vadd.f32 %v247, %v603
      %v605 = vpop.f32.mrf.mxu0
      %v606 = vpop.f32.mrf.mxu0
      %v607 = vadd.f32 %v247, %v606
      %v608 = vpop.f32.mrf.mxu0
      %609 = vmatprep.mubr.bf16.mxu0 %v364
      %610 = vmatmul.mubr.bf16.gmra.mxu0 %v363
      %v611 = vpop.f32.mrf.mxu0
      %v612 = vadd.f32 %v247, %v611
      %v613 = vpop.f32.mrf.mxu0
      %v614 = vpop.f32.mrf.mxu0
      %v615 = vadd.f32 %v247, %v614
      %v616 = vpop.f32.mrf.mxu0
      %617 = vmatprep.mubr.bf16.mxu0 %v366
      %618 = vmatmul.mubr.bf16.gmra.mxu0 %v365
      %v619 = vpop.f32.mrf.mxu0
      %v620 = vadd.f32 %v247, %v619
      %v621 = vpop.f32.mrf.mxu0
      %v622 = vpop.f32.mrf.mxu0
      %v623 = vadd.f32 %v247, %v622
      %v624 = vpop.f32.mrf.mxu0
      %625 = vmatprep.mubr.bf16.mxu0 %v368
      %626 = vmatmul.mubr.bf16.gmra.mxu0 %v367
      %v627 = vpop.f32.mrf.mxu0
      %v628 = vadd.f32 %v247, %v627
      %v629 = vpop.f32.mrf.mxu0
      %v630 = vpop.f32.mrf.mxu0
      %v631 = vadd.f32 %v247, %v630
      %v632 = vpop.f32.mrf.mxu0
      %633 = vmatprep.mubr.bf16.mxu0 %v370
      %634 = vmatmul.mubr.bf16.gmra.mxu0 %v369
      %v635 = vpop.f32.mrf.mxu0
      %v636 = vadd.f32 %v247, %v635
      %v637 = vpop.f32.mrf.mxu0
      %v638 = vpop.f32.mrf.mxu0
      %v639 = vadd.f32 %v247, %v638
      %v640 = vpop.f32.mrf.mxu0
      %641 = vmatprep.mubr.bf16.mxu0 %v372
      %642 = vmatmul.mubr.bf16.gmra.mxu0 %v371
      %v643 = vpop.f32.mrf.mxu0
      %v644 = vadd.f32 %v247, %v643
      %v645 = vpop.f32.mrf.mxu0
      %v646 = vpop.f32.mrf.mxu0
      %v647 = vadd.f32 %v247, %v646
      %v648 = vpop.f32.mrf.mxu0
      %649 = vmatprep.mubr.bf16.mxu0 %v374
      %650 = vmatmul.mubr.bf16.gmra.mxu0 %v373
      %v651 = vpop.f32.mrf.mxu0
      %v652 = vadd.f32 %v247, %v651
      %v653 = vpop.f32.mrf.mxu0
      %v654 = vpop.f32.mrf.mxu0
      %v655 = vadd.f32 %v247, %v654
      %v656 = vpop.f32.mrf.mxu0
      %657 = vmatprep.mubr.bf16.mxu0 %v376
      %658 = vmatmul.mubr.bf16.gmra.mxu0 %v375
      %v659 = vpop.f32.mrf.mxu0
      %v660 = vadd.f32 %v247, %v659
      %v661 = vpop.f32.mrf.mxu0
      %v662 = vpop.f32.mrf.mxu0
      %v663 = vadd.f32 %v247, %v662
      %v664 = vpop.f32.mrf.mxu0
      %665 = vdwg.mxu0
      %v666 = vmax.f32 %v540, 0.0
      %v667 = vmax.f32 %v543, 0.0
      %v668 = vmax.f32 %v548, 0.0
      %v669 = vmax.f32 %v551, 0.0
      %v670 = vmax.f32 %v556, 0.0
      %v671 = vmax.f32 %v559, 0.0
      %v672 = vmax.f32 %v564, 0.0
      %v673 = vmax.f32 %v567, 0.0
      %v674 = vmax.f32 %v572, 0.0
      %v675 = vmax.f32 %v575, 0.0
      %v676 = vmax.f32 %v580, 0.0
      %v677 = vmax.f32 %v583, 0.0
      %v678 = vmax.f32 %v588, 0.0
      %v679 = vmax.f32 %v591, 0.0
      %v680 = vmax.f32 %v596, 0.0
      %v681 = vmax.f32 %v599, 0.0
      %v682 = vmax.f32 %v604, 0.0
      %v683 = vmax.f32 %v607, 0.0
      %v684 = vmax.f32 %v612, 0.0
      %v685 = vmax.f32 %v615, 0.0
      %v686 = vmax.f32 %v620, 0.0
      %v687 = vmax.f32 %v623, 0.0
      %v688 = vmax.f32 %v628, 0.0
      %v689 = vmax.f32 %v631, 0.0
      %v690 = vmax.f32 %v636, 0.0
      %v691 = vmax.f32 %v639, 0.0
      %v692 = vmax.f32 %v644, 0.0
      %v693 = vmax.f32 %v647, 0.0
      %v694 = vmax.f32 %v652, 0.0
      %v695 = vmax.f32 %v655, 0.0
      %v696 = vmax.f32 %v660, 0.0
      %v697 = vmax.f32 %v663, 0.0
      %v698 = vpack.c.bf16 %v667, %v666
      %v699 = vpack.c.bf16 %v669, %v668
      %v700 = vpack.c.bf16 %v671, %v670
      %v701 = vpack.c.bf16 %v673, %v672
      %v702 = vpack.c.bf16 %v675, %v674
      %v703 = vpack.c.bf16 %v677, %v676
      %v704 = vpack.c.bf16 %v679, %v678
      %v705 = vpack.c.bf16 %v681, %v680
      %v706 = vpack.c.bf16 %v683, %v682
      %v707 = vpack.c.bf16 %v685, %v684
      %v708 = vpack.c.bf16 %v687, %v686
      %v709 = vpack.c.bf16 %v689, %v688
      %v710 = vpack.c.bf16 %v691, %v690
      %v711 = vpack.c.bf16 %v693, %v692
      %v712 = vpack.c.bf16 %v695, %v694
      %v713 = vpack.c.bf16 %v697, %v696
      %v730 = vunpack.c.l.b16 %v698
      %v731 = vunpack.c.h.b16 %v698
      %v732 = vunpack.c.l.b16 %v699
      %v733 = vunpack.c.h.b16 %v699
      %v734 = vunpack.c.l.b16 %v700
      %v735 = vunpack.c.h.b16 %v700
      %v736 = vunpack.c.l.b16 %v701
      %v737 = vunpack.c.h.b16 %v701
      %v738 = vunpack.c.l.b16 %v702
      %v739 = vunpack.c.h.b16 %v702
      %v740 = vunpack.c.l.b16 %v703
      %v741 = vunpack.c.h.b16 %v703
      %v742 = vunpack.c.l.b16 %v704
      %v743 = vunpack.c.h.b16 %v704
      %v744 = vunpack.c.l.b16 %v705
      %v745 = vunpack.c.h.b16 %v705
      %v746 = vunpack.c.l.b16 %v706
      %v747 = vunpack.c.h.b16 %v706
      %v748 = vunpack.c.l.b16 %v707
      %v749 = vunpack.c.h.b16 %v707
      %v750 = vunpack.c.l.b16 %v708
      %v751 = vunpack.c.h.b16 %v708
      %v752 = vunpack.c.l.b16 %v709
      %v753 = vunpack.c.h.b16 %v709
      %v754 = vunpack.c.l.b16 %v710
      %v755 = vunpack.c.h.b16 %v710
      %v756 = vunpack.c.l.b16 %v711
      %v757 = vunpack.c.h.b16 %v711
      %v758 = vunpack.c.l.b16 %v712
      %v759 = vunpack.c.h.b16 %v712
      %v760 = vunpack.c.l.b16 %v713
      %v761 = vunpack.c.h.b16 %v713
      %v762 = vpack.c.b16 %v730, %v730
      %v763 = vpack.c.b16 %v731, %v731
      %v764 = vpack.c.b16 %v732, %v732
      %v765 = vpack.c.b16 %v733, %v733
      %v766 = vpack.c.b16 %v734, %v734
      %v767 = vpack.c.b16 %v735, %v735
      %v768 = vpack.c.b16 %v736, %v736
      %v769 = vpack.c.b16 %v737, %v737
      %v770 = vpack.c.b16 %v738, %v738
      %v771 = vpack.c.b16 %v739, %v739
      %v772 = vpack.c.b16 %v740, %v740
      %v773 = vpack.c.b16 %v741, %v741
      %v774 = vpack.c.b16 %v742, %v742
      %v775 = vpack.c.b16 %v743, %v743
      %v776 = vpack.c.b16 %v744, %v744
      %v777 = vpack.c.b16 %v745, %v745
      %v778 = vpack.c.b16 %v746, %v746
      %v779 = vpack.c.b16 %v747, %v747
      %v780 = vpack.c.b16 %v748, %v748
      %v781 = vpack.c.b16 %v749, %v749
      %v782 = vpack.c.b16 %v750, %v750
      %v783 = vpack.c.b16 %v751, %v751
      %v784 = vpack.c.b16 %v752, %v752
      %v785 = vpack.c.b16 %v753, %v753
      %v786 = vpack.c.b16 %v754, %v754
      %v787 = vpack.c.b16 %v755, %v755
      %v788 = vpack.c.b16 %v756, %v756
      %v789 = vpack.c.b16 %v757, %v757
      %v790 = vpack.c.b16 %v758, %v758
      %v791 = vpack.c.b16 %v759, %v759
      %v792 = vpack.c.b16 %v760, %v760
      %v793 = vpack.c.b16 %v761, %v761
      %826 = vst [vmem:[%s175] sm:$0xf] %v762
      %827 = vst [vmem:[%s175 + $0x4] sm:$0xf] %v763
      %828 = vst [vmem:[%s175 + $0x8] sm:$0xf] %v764
      %829 = vst [vmem:[%s175 + $0xc] sm:$0xf] %v765
      %830 = vst [vmem:[%s175 + $0x10] sm:$0xf] %v766
      %831 = vst [vmem:[%s175 + $0x14] sm:$0xf] %v767
      %832 = vst [vmem:[%s175 + $0x18] sm:$0xf] %v768
      %833 = vst [vmem:[%s175 + $0x1c] sm:$0xf] %v769
      %834 = vst [vmem:[%s175 + $0x20] sm:$0xf] %v770
      %835 = vst [vmem:[%s175 + $0x24] sm:$0xf] %v771
      %836 = vst [vmem:[%s175 + $0x28] sm:$0xf] %v772
      %837 = vst [vmem:[%s175 + $0x2c] sm:$0xf] %v773
      %838 = vst [vmem:[%s175 + $0x30] sm:$0xf] %v774
      %839 = vst [vmem:[%s175 + $0x34] sm:$0xf] %v775
      %840 = vst [vmem:[%s175 + $0x38] sm:$0xf] %v776
      %841 = vst [vmem:[%s175 + $0x3c] sm:$0xf] %v777
      %842 = vst [vmem:[%s175 + $0x40] sm:$0xf] %v778
      %843 = vst [vmem:[%s175 + $0x44] sm:$0xf] %v779
      %844 = vst [vmem:[%s175 + $0x48] sm:$0xf] %v780
      %845 = vst [vmem:[%s175 + $0x4c] sm:$0xf] %v781
      %846 = vst [vmem:[%s175 + $0x50] sm:$0xf] %v782
      %847 = vst [vmem:[%s175 + $0x54] sm:$0xf] %v783
      %848 = vst [vmem:[%s175 + $0x58] sm:$0xf] %v784
      %849 = vst [vmem:[%s175 + $0x5c] sm:$0xf] %v785
      %850 = vst [vmem:[%s175 + $0x60] sm:$0xf] %v786
      %851 = vst [vmem:[%s175 + $0x64] sm:$0xf] %v787
      %852 = vst [vmem:[%s175 + $0x68] sm:$0xf] %v788
      %853 = vst [vmem:[%s175 + $0x6c] sm:$0xf] %v789
      %854 = vst [vmem:[%s175 + $0x70] sm:$0xf] %v790
      %855 = vst [vmem:[%s175 + $0x74] sm:$0xf] %v791
      %856 = vst [vmem:[%s175 + $0x78] sm:$0xf] %v792
      %857 = vst [vmem:[%s175 + $0x7c] sm:$0xf] %v793
      %s858 = smul.u32 32, %s14
      %p859 = scmp.lt.s32.totalorder %s858, 63
      %s860 = scalar_select %p859, %s858, 63
      %s861 = smul.addr %s860, 4
      %s862 = scalar_lea.vmem %s3, %s861
      // Predicated region
      $region33: #{decoder_forward.8} parent=31 // pred_check
        %p863 = pneg %p100
      $region34: #{decoder_forward.8} parent=31 // pred_check_branch
        %865 = sbr.rel (%p863) target = $region36
      $region35: #{decoder_forward.8} parent=31 // pred_region
        %s866 = smul.u32 32, %s14
      $region36: #{decoder_forward.8} parent=31 // pred_fallthru
        _
    $region32: #{decoder_forward.8} parent=5 // pred_fallthru
      _
    %p867 = scmp.le.s32.totalorder 2, %s9
    // Predicated region
    $region37: #{decoder_forward.8} parent=5 // pred_check
      %p868 = pneg %p867
    $region38: #{decoder_forward.8} parent=5 // pred_check_branch
      %870 = sbr.rel (%p868) target = $region40
    $region39: #{decoder_forward.8} parent=5 // pred_region
      %s871 = ssub.s32 %s9, 2
      // Predicated region
      $region41: #{decoder_forward.8} parent=39 // pred_check
        %p872 = pneg %p106
      $region42: #{decoder_forward.8} parent=39 // pred_check_branch
        %874 = sbr.rel (%p872) target = $region44
      $region43: #{decoder_forward.8} parent=39 // pred_region
        %s875 = smul.u32 32, %s15
        %p876 = scmp.lt.s32.totalorder %s875, 63
        %s877 = scalar_select %p876, %s875, 63
        %s878 = smul.addr %s877, 4
        %s879 = scalar_lea.vmem %s3, %s878
      $region44: #{decoder_forward.8} parent=39 // pred_fallthru
        _
    $region40: #{decoder_forward.8} parent=5 // pred_fallthru
      _
  $region6: #{decoder_forward.8} parent=0 // loop_footer
    %s13 = sadd.s32 1, %s9
  $region7: #{decoder_forward.8} parent=0 // loop_footer_branch
    %8 = sbr.rel target = $region3
  $region8: #{decoder_forward.8} parent=0 // loop_exit
    _

// kernel: decoder_forward.9
$region0: #{decoder_forward.9}
  #allocation0 [shape = 'u32[]', space=smem, size = 0x4, offset = 0x4, fixed_abs, tag = 'smem constant byte address 0x4 - core index']
  #allocation1 [shape = 'u32[144,128]{1,0:T(1,128)}', space=vmem, size = 0x12000, scoped, tag = 'internal scratch']
  %s0 = inlined_call_operand.vmem [shape: bf16[7168,288], index: 0, kind: input, shape index: {}]
  %s1 = inlined_call_operand.vmem [shape: bf16[288,3], index: 1, kind: input, shape index: {}]
  %s2 = inlined_call_operand.vmem [shape: f32[1,3], index: 2, kind: input, shape index: {}]
  %s3 = inlined_call_operand.vmem [shape: f32[7168,3], index: 3, kind: output, shape index: {}]
  %s4 = sld [smem:[#allocation0]]
  $region45: #{decoder_forward.9} parent=0
    _
  %s6 = ssub.s32 1, %s4
  %s7 = scalar_select 0, %s6, %s4
  loop: start=0, step=1, limit=16
  $region2: #{decoder_forward.9} parent=0 // loop_pre_header
    _
  $region3: #{decoder_forward.9} parent=0 // loop_header
    %s9 = sphi 0, %s13
    %p10 = scmp.ge.s32.totalorder %s9, 16
    %s19 = sphi 0, %s21
    %s22 = sphi 0, %s19
    %s23 = sphi 0, %s22
    %s39 = sphi 0, %s23
    %s43 = sphi 0, %s43
    %s45 = sphi 0, %s43
    %s46 = sphi 0, %s45
    %s60 = sphi 0, %s46
    %s64 = sphi 0, %s64
    %s66 = sphi 0, %s64
    %s67 = sphi 0, %s66
    %s81 = sphi 0, %s67
    %s87 = sphi 0, %s89
    %s90 = sphi 0, %s87
    %s91 = sphi 0, %s90
    %s107 = sphi 0, %s91
  $region4: #{decoder_forward.9} parent=0 // loop_header_branch
    %12 = sbr.rel (%p10) target = $region8
  $region5: #{decoder_forward.9} parent=0 // loop_body
    %s14 = ssub.s32 %s9, 1
    %s15 = ssub.s32 %s9, 2
    %s16 = sadd.s32 %s9, 1
    %s17 = ssub.s32 %s9, %s16
    %p18 = scmp.eq.s32.totalorder %s17, 0
    %s20 = sadd.s32 %s19, 1
    %s21 = scalar_select %p18, %s19, %s20
    %p24 = pneg %p18
    %p25 = scmp.eq.s32.totalorder %s9, 13
    %p26 = por %p24, %p25
    %p27 = scmp.ne.s32.totalorder %s19, %s22
    %p28 = scmp.eq.s32.totalorder %s9, 0
    %p29 = por %p27, %p28
    %p30 = scmp.ne.s32.totalorder %s19, %s22
    %p31 = scmp.eq.s32.totalorder %s14, 13
    %p32 = por %p30, %p31
    %p33 = scmp.ne.s32.totalorder %s22, %s23
    %p34 = scmp.eq.s32.totalorder %s14, 0
    %p35 = por %p33, %p34
    %p36 = scmp.ne.s32.totalorder %s22, %s23
    %p37 = scmp.eq.s32.totalorder %s15, 13
    %p38 = por %p36, %p37
    %p40 = scmp.ne.s32.totalorder %s23, %s39
    %p41 = scmp.eq.s32.totalorder %s15, 0
    %p42 = por %p40, %p41
    %s44 = sadd.s32 %s43, 1
    %p47 = scmp.eq.s32.totalorder %s9, 13
    %p48 = scmp.ne.s32.totalorder %s43, %s45
    %p49 = scmp.eq.s32.totalorder %s9, 0
    %p50 = por %p48, %p49
    %p51 = scmp.ne.s32.totalorder %s43, %s45
    %p52 = scmp.eq.s32.totalorder %s14, 13
    %p53 = por %p51, %p52
    %p54 = scmp.ne.s32.totalorder %s45, %s46
    %p55 = scmp.eq.s32.totalorder %s14, 0
    %p56 = por %p54, %p55
    %p57 = scmp.ne.s32.totalorder %s45, %s46
    %p58 = scmp.eq.s32.totalorder %s15, 13
    %p59 = por %p57, %p58
    %p61 = scmp.ne.s32.totalorder %s46, %s60
    %p62 = scmp.eq.s32.totalorder %s15, 0
    %p63 = por %p61, %p62
    %s65 = sadd.s32 %s64, 1
    %p68 = scmp.eq.s32.totalorder %s9, 13
    %p69 = scmp.ne.s32.totalorder %s64, %s66
    %p70 = scmp.eq.s32.totalorder %s9, 0
    %p71 = por %p69, %p70
    %p72 = scmp.ne.s32.totalorder %s64, %s66
    %p73 = scmp.eq.s32.totalorder %s14, 13
    %p74 = por %p72, %p73
    %p75 = scmp.ne.s32.totalorder %s66, %s67
    %p76 = scmp.eq.s32.totalorder %s14, 0
    %p77 = por %p75, %p76
    %p78 = scmp.ne.s32.totalorder %s66, %s67
    %p79 = scmp.eq.s32.totalorder %s15, 13
    %p80 = por %p78, %p79
    %p82 = scmp.ne.s32.totalorder %s67, %s81
    %p83 = scmp.eq.s32.totalorder %s15, 0
    %p84 = por %p82, %p83
    %s85 = ssub.s32 %s9, %s16
    %p86 = scmp.eq.s32.totalorder %s85, 0
    %s88 = sadd.s32 %s87, 1
    %s89 = scalar_select %p86, %s87, %s88
    %p92 = pneg %p86
    %p93 = scmp.eq.s32.totalorder %s9, 13
    %p94 = por %p92, %p93
    %p95 = scmp.ne.s32.totalorder %s87, %s90
    %p96 = scmp.eq.s32.totalorder %s9, 0
    %p97 = por %p95, %p96
    %p98 = scmp.ne.s32.totalorder %s87, %s90
    %p99 = scmp.eq.s32.totalorder %s14, 13
    %p100 = por %p98, %p99
    %p101 = scmp.ne.s32.totalorder %s90, %s91
    %p102 = scmp.eq.s32.totalorder %s14, 0
    %p103 = por %p101, %p102
    %p104 = scmp.ne.s32.totalorder %s90, %s91
    %p105 = scmp.eq.s32.totalorder %s15, 13
    %p106 = por %p104, %p105
    %p108 = scmp.ne.s32.totalorder %s91, %s107
    %p109 = scmp.eq.s32.totalorder %s15, 0
    %p110 = por %p108, %p109
    %p111 = scmp.le.s32.totalorder 1, %s9
    %p112 = scmp.lt.s32.totalorder %s9, 15
    %p113 = pnand %p111, %p112
    %p114 = pneg %p113
    // Predicated region
    $region9: #{decoder_forward.9} parent=5 // pred_check
      _
    $region10: #{decoder_forward.9} parent=5 // pred_check_branch
      %116 = sbr.rel (%p113) target = $region12
    $region11: #{decoder_forward.9} parent=5 // pred_region
      %s117 = ssub.s32 %s9, 1
      // Predicated region
      $region13: #{decoder_forward.9} parent=11 // pred_check
        %p118 = pneg %p56
      $region14: #{decoder_forward.9} parent=11 // pred_check_branch
        %120 = sbr.rel (%p118) target = $region16
      $region15: #{decoder_forward.9} parent=11 // pred_region
        _
      $region16: #{decoder_forward.9} parent=11 // pred_fallthru
        _
      // Predicated region
      $region17: #{decoder_forward.9} parent=11 // pred_check
        %p121 = pneg %p77
      $region18: #{decoder_forward.9} parent=11 // pred_check_branch
        %123 = sbr.rel (%p121) target = $region20
      $region19: #{decoder_forward.9} parent=11 // pred_region
        _
      $region20: #{decoder_forward.9} parent=11 // pred_fallthru
        _
    $region12: #{decoder_forward.9} parent=5 // pred_fallthru
      _
    %p124 = scmp.lt.s32.totalorder %s9, 14
    // Predicated region
    $region21: #{decoder_forward.9} parent=5 // pred_check
      %p125 = pneg %p124
    $region22: #{decoder_forward.9} parent=5 // pred_check_branch
      %127 = sbr.rel (%p125) target = $region24
    $region23: #{decoder_forward.9} parent=5 // pred_region
      // Predicated region
      $region25: #{decoder_forward.9} parent=23 // pred_check
        %p128 = pneg %p29
      $region26: #{decoder_forward.9} parent=23 // pred_check_branch
        %130 = sbr.rel (%p128) target = $region28
      $region27: #{decoder_forward.9} parent=23 // pred_region
        %s131 = smul.u32 64, %s9
        %p132 = scmp.lt.s32.totalorder %s131, 895
        %s133 = scalar_select %p132, %s131, 895
        %s134 = smul.addr %s133, 3
        %s135 = smul.addr %s134, 4
        %s136 = scalar_lea.vmem %s0, %s135
        %s137 = smul.u32 64, %s9
      $region28: #{decoder_forward.9} parent=23 // pred_fallthru
        _
    $region24: #{decoder_forward.9} parent=5 // pred_fallthru
      _
    %p138 = scmp.le.s32.totalorder 1, %s9
    %p139 = scmp.lt.s32.totalorder %s9, 15
    %p140 = pnand %p138, %p139
    %p141 = pneg %p140
    // Predicated region
    $region29: #{decoder_forward.9} parent=5 // pred_check
      _
    $region30: #{decoder_forward.9} parent=5 // pred_check_branch
      %143 = sbr.rel (%p140) target = $region32
    $region31: #{decoder_forward.9} parent=5 // pred_region
      %s144 = ssub.s32 %s9, 1
      %s145 = smul.u32 64, %s14
      %p146 = scmp.lt.s32.totalorder %s145, 895
      %s147 = scalar_select %p146, %s145, 895
      %s148 = smul.addr %s147, 3
      %s149 = smul.addr %s148, 4
      %s150 = scalar_lea.vmem %s0, %s149
      %p151 = pneg %p35
      %p152 = pneg %p32
      %p153 = pneg %p56
      %p154 = pneg %p53
      %p155 = pneg %p77
      %p156 = pneg %p74
      %p157 = pneg %p103
      %p158 = pneg %p100
      %s159 = smul.u32 64, %s14
      %p160 = scmp.lt.s32.totalorder %s159, 895
      %s161 = scalar_select %p160, %s159, 895
      %s162 = smul.addr %s161, 8
      %s163 = scalar_lea.vmem %s3, %s162
      %s164 = smul.u32 64, %s14
      %p165 = scmp.lt.s32.totalorder %s164, 895
      %s166 = scalar_select %p165, %s164, 895
      %s167 = smul.addr %s166, 3
      %s168 = smul.addr %s167, 4
      %s169 = scalar_lea.vmem %s0, %s168
      %s170 = smul.u32 64, %s14
      %s171 = smul.u32 64, %s14
      %p172 = scmp.lt.s32.totalorder %s171, 895
      %s173 = scalar_select %p172, %s171, 895
      %s174 = smul.addr %s173, 8
      %s175 = scalar_lea.vmem %s3, %s174
      %s176 = smul.u32 64, %s14
      %v178 = vld [vmem:[%s169] sm:$0xff]
      %v179 = vld [vmem:[%s169 + $0x8] sm:$0xf]
      %v180 = vld [vmem:[%s169 + $0xc] sm:$0xff]
      %v181 = vld [vmem:[%s169 + $0x14] sm:$0xf]
      %v182 = vld [vmem:[%s169 + $0x18] sm:$0xff]
      %v183 = vld [vmem:[%s169 + $0x20] sm:$0xf]
      %v184 = vld [vmem:[%s169 + $0x24] sm:$0xff]
      %v185 = vld [vmem:[%s169 + $0x2c] sm:$0xf]
      %v186 = vld [vmem:[%s169 + $0x30] sm:$0xff]
      %v187 = vld [vmem:[%s169 + $0x38] sm:$0xf]
      %v188 = vld [vmem:[%s169 + $0x3c] sm:$0xff]
      %v189 = vld [vmem:[%s169 + $0x44] sm:$0xf]
      %v190 = vld [vmem:[%s169 + $0x48] sm:$0xff]
      %v191 = vld [vmem:[%s169 + $0x50] sm:$0xf]
      %v192 = vld [vmem:[%s169 + $0x54] sm:$0xff]
      %v193 = vld [vmem:[%s169 + $0x5c] sm:$0xf]
      %v194 = vld [vmem:[%s169 + $0x60] sm:$0xff]
      %v195 = vld [vmem:[%s169 + $0x68] sm:$0xf]
      %v196 = vld [vmem:[%s169 + $0x6c] sm:$0xff]
      %v197 = vld [vmem:[%s169 + $0x74] sm:$0xf]
      %v198 = vld [vmem:[%s169 + $0x78] sm:$0xff]
      %v199 = vld [vmem:[%s169 + $0x80] sm:$0xf]
      %v200 = vld [vmem:[%s169 + $0x84] sm:$0xff]
      %v201 = vld [vmem:[%s169 + $0x8c] sm:$0xf]
      %v202 = vld [vmem:[%s169 + $0x90] sm:$0xff]
      %v203 = vld [vmem:[%s169 + $0x98] sm:$0xf]
      %v204 = vld [vmem:[%s169 + $0x9c] sm:$0xff]
      %v205 = vld [vmem:[%s169 + $0xa4] sm:$0xf]
      %v206 = vld [vmem:[%s169 + $0xa8] sm:$0xff]
      %v207 = vld [vmem:[%s169 + $0xb0] sm:$0xf]
      %v208 = vld [vmem:[%s169 + $0xb4] sm:$0xff]
      %v209 = vld [vmem:[%s169 + $0xbc] sm:$0xf]
      %v210 = vld [vmem:[%s169 + $0xc0] sm:$0xff]
      %v211 = vld [vmem:[%s169 + $0xc8] sm:$0xf]
      %v212 = vld [vmem:[%s169 + $0xcc] sm:$0xff]
      %v213 = vld [vmem:[%s169 + $0xd4] sm:$0xf]
      %v214 = vld [vmem:[%s169 + $0xd8] sm:$0xff]
      %v215 = vld [vmem:[%s169 + $0xe0] sm:$0xf]
      %v216 = vld [vmem:[%s169 + $0xe4] sm:$0xff]
      %v217 = vld [vmem:[%s169 + $0xec] sm:$0xf]
      %v218 = vld [vmem:[%s169 + $0xf0] sm:$0xff]
      %v219 = vld [vmem:[%s169 + $0xf8] sm:$0xf]
      %v220 = vld [vmem:[%s169 + $0xfc] sm:$0xff]
      %v221 = vld [vmem:[%s169 + $0x104] sm:$0xf]
      %v222 = vld [vmem:[%s169 + $0x108] sm:$0xff]
      %v223 = vld [vmem:[%s169 + $0x110] sm:$0xf]
      %v224 = vld [vmem:[%s169 + $0x114] sm:$0xff]
      %v225 = vld [vmem:[%s169 + $0x11c] sm:$0xf]
      %v226 = vld [vmem:[%s169 + $0x120] sm:$0xff]
      %v227 = vld [vmem:[%s169 + $0x128] sm:$0xf]
      %v228 = vld [vmem:[%s169 + $0x12c] sm:$0xff]
      %v229 = vld [vmem:[%s169 + $0x134] sm:$0xf]
      %v230 = vld [vmem:[%s169 + $0x138] sm:$0xff]
      %v231 = vld [vmem:[%s169 + $0x140] sm:$0xf]
      %v232 = vld [vmem:[%s169 + $0x144] sm:$0xff]
      %v233 = vld [vmem:[%s169 + $0x14c] sm:$0xf]
      %v234 = vld [vmem:[%s169 + $0x150] sm:$0xff]
      %v235 = vld [vmem:[%s169 + $0x158] sm:$0xf]
      %v236 = vld [vmem:[%s169 + $0x15c] sm:$0xff]
      %v237 = vld [vmem:[%s169 + $0x164] sm:$0xf]
      %v238 = vld [vmem:[%s169 + $0x168] sm:$0xff]
      %v239 = vld [vmem:[%s169 + $0x170] sm:$0xf]
      %v240 = vld [vmem:[%s169 + $0x174] sm:$0xff]
      %v241 = vld [vmem:[%s169 + $0x17c] sm:$0xf]
      %v242 = vld [vmem:[%s169 + $0x180] sm:$0xff]
      %v243 = vld [vmem:[%s169 + $0x188] sm:$0xf]
      %v244 = vld [vmem:[%s169 + $0x18c] sm:$0xff]
      %v245 = vld [vmem:[%s169 + $0x194] sm:$0xf]
      %v246 = vld [vmem:[%s169 + $0x198] sm:$0xff]
      %v247 = vld [vmem:[%s169 + $0x1a0] sm:$0xf]
      %v248 = vld [vmem:[%s169 + $0x1a4] sm:$0xff]
      %v249 = vld [vmem:[%s169 + $0x1ac] sm:$0xf]
      %v250 = vld [vmem:[%s169 + $0x1b0] sm:$0xff]
      %v251 = vld [vmem:[%s169 + $0x1b8] sm:$0xf]
      %v252 = vld [vmem:[%s169 + $0x1bc] sm:$0xff]
      %v253 = vld [vmem:[%s169 + $0x1c4] sm:$0xf]
      %v254 = vld [vmem:[%s169 + $0x1c8] sm:$0xff]
      %v255 = vld [vmem:[%s169 + $0x1d0] sm:$0xf]
      %v256 = vld [vmem:[%s169 + $0x1d4] sm:$0xff]
      %v257 = vld [vmem:[%s169 + $0x1dc] sm:$0xf]
      %v258 = vld [vmem:[%s169 + $0x1e0] sm:$0xff]
      %v259 = vld [vmem:[%s169 + $0x1e8] sm:$0xf]
      %v260 = vld [vmem:[%s169 + $0x1ec] sm:$0xff]
      %v261 = vld [vmem:[%s169 + $0x1f4] sm:$0xf]
      %v262 = vld [vmem:[%s169 + $0x1f8] sm:$0xff]
      %v263 = vld [vmem:[%s169 + $0x200] sm:$0xf]
      %v264 = vld [vmem:[%s169 + $0x204] sm:$0xff]
      %v265 = vld [vmem:[%s169 + $0x20c] sm:$0xf]
      %v266 = vld [vmem:[%s169 + $0x210] sm:$0xff]
      %v267 = vld [vmem:[%s169 + $0x218] sm:$0xf]
      %v268 = vld [vmem:[%s169 + $0x21c] sm:$0xff]
      %v269 = vld [vmem:[%s169 + $0x224] sm:$0xf]
      %v270 = vld [vmem:[%s169 + $0x228] sm:$0xff]
      %v271 = vld [vmem:[%s169 + $0x230] sm:$0xf]
      %v272 = vld [vmem:[%s169 + $0x234] sm:$0xff]
      %v273 = vld [vmem:[%s169 + $0x23c] sm:$0xf]
      %v274 = vld [vmem:[%s169 + $0x240] sm:$0xff]
      %v275 = vld [vmem:[%s169 + $0x248] sm:$0xf]
      %v276 = vld [vmem:[%s169 + $0x24c] sm:$0xff]
      %v277 = vld [vmem:[%s169 + $0x254] sm:$0xf]
      %v278 = vld [vmem:[%s169 + $0x258] sm:$0xff]
      %v279 = vld [vmem:[%s169 + $0x260] sm:$0xf]
      %v280 = vld [vmem:[%s169 + $0x264] sm:$0xff]
      %v281 = vld [vmem:[%s169 + $0x26c] sm:$0xf]
      %v282 = vld [vmem:[%s169 + $0x270] sm:$0xff]
      %v283 = vld [vmem:[%s169 + $0x278] sm:$0xf]
      %v284 = vld [vmem:[%s169 + $0x27c] sm:$0xff]
      %v285 = vld [vmem:[%s169 + $0x284] sm:$0xf]
      %v286 = vld [vmem:[%s169 + $0x288] sm:$0xff]
      %v287 = vld [vmem:[%s169 + $0x290] sm:$0xf]
      %v288 = vld [vmem:[%s169 + $0x294] sm:$0xff]
      %v289 = vld [vmem:[%s169 + $0x29c] sm:$0xf]
      %v290 = vld [vmem:[%s169 + $0x2a0] sm:$0xff]
      %v291 = vld [vmem:[%s169 + $0x2a8] sm:$0xf]
      %v292 = vld [vmem:[%s169 + $0x2ac] sm:$0xff]
      %v293 = vld [vmem:[%s169 + $0x2b4] sm:$0xf]
      %v294 = vld [vmem:[%s169 + $0x2b8] sm:$0xff]
      %v295 = vld [vmem:[%s169 + $0x2c0] sm:$0xf]
      %v296 = vld [vmem:[%s169 + $0x2c4] sm:$0xff]
      %v297 = vld [vmem:[%s169 + $0x2cc] sm:$0xf]
      %v298 = vld [vmem:[%s169 + $0x2d0] sm:$0xff]
      %v299 = vld [vmem:[%s169 + $0x2d8] sm:$0xf]
      %v300 = vld [vmem:[%s169 + $0x2dc] sm:$0xff]
      %v301 = vld [vmem:[%s169 + $0x2e4] sm:$0xf]
      %v302 = vld [vmem:[%s169 + $0x2e8] sm:$0xff]
      %v303 = vld [vmem:[%s169 + $0x2f0] sm:$0xf]
      %v304 = vld [vmem:[%s169 + $0x2f4] sm:$0xff]
      %v305 = vld [vmem:[%s169 + $0x2fc] sm:$0xf]
      %v306 = vld [vmem:[%s1] sm:$0xf]
      %v307 = vld [vmem:[%s1 + $0x4] sm:$0xf]
      %v308 = vld [vmem:[%s1 + $0x8] sm:$0xf]
      %v309 = vld [vmem:[%s1 + $0xc] sm:$0xf]
      %v310 = vld [vmem:[%s1 + $0x10] sm:$0xf]
      %v311 = vld [vmem:[%s1 + $0x14] sm:$0xf]
      %v312 = vld [vmem:[%s1 + $0x18] sm:$0xf]
      %v313 = vld [vmem:[%s1 + $0x1c] sm:$0xf]
      %v314 = vld [vmem:[%s1 + $0x20] sm:$0xf]
      %v315 = vld [vmem:[%s1 + $0x24] sm:$0xf]
      %v316 = vld [vmem:[%s1 + $0x28] sm:$0xf]
      %v317 = vld [vmem:[%s1 + $0x2c] sm:$0xf]
      %v318 = vld [vmem:[%s1 + $0x30] sm:$0xf]
      %v319 = vld [vmem:[%s1 + $0x34] sm:$0xf]
      %v320 = vld [vmem:[%s1 + $0x38] sm:$0xf]
      %v321 = vld [vmem:[%s1 + $0x3c] sm:$0xf]
      %v322 = vld [vmem:[%s1 + $0x40] sm:$0xf]
      %v323 = vld [vmem:[%s1 + $0x44] sm:$0xf]
      %v324 = vld [vmem:[%s1 + $0x48] sm:$0xf]
      %v325 = vld [vmem:[%s1 + $0x4c] sm:$0xf]
      %v326 = vld [vmem:[%s1 + $0x50] sm:$0xf]
      %v327 = vld [vmem:[%s1 + $0x54] sm:$0xf]
      %v328 = vld [vmem:[%s1 + $0x58] sm:$0xf]
      %v329 = vld [vmem:[%s1 + $0x5c] sm:$0xf]
      %v330 = vld [vmem:[%s1 + $0x60] sm:$0xf]
      %v331 = vld [vmem:[%s1 + $0x64] sm:$0xf]
      %v332 = vld [vmem:[%s1 + $0x68] sm:$0xf]
      %v333 = vld [vmem:[%s1 + $0x6c] sm:$0xf]
      %v334 = vld [vmem:[%s1 + $0x70] sm:$0xf]
      %v335 = vld [vmem:[%s1 + $0x74] sm:$0xf]
      %v336 = vld [vmem:[%s1 + $0x78] sm:$0xf]
      %v337 = vld [vmem:[%s1 + $0x7c] sm:$0xf]
      %v338 = vld [vmem:[%s1 + $0x80] sm:$0xf]
      %v339 = vld [vmem:[%s1 + $0x84] sm:$0xf]
      %v340 = vld [vmem:[%s1 + $0x88] sm:$0xf]
      %v341 = vld [vmem:[%s1 + $0x8c] sm:$0xf]
      %v342 = vld [vmem:[%s2] sm:$0x1]
      %v344 = vlaneseq
      %v345 = vshrl.u32 %v344, 7
      %v346 = vsub.s32 0, %v345
      %v347 = vrot.slane %v342, %v346
      %v477 = vunpack.c.l.b16 %v178
      %v478 = vunpack.c.h.b16 %v178
      %v479 = vunpack.c.l.b16 %v179
      %v480 = vunpack.c.l.b16 %v180
      %v481 = vunpack.c.h.b16 %v180
      %v482 = vunpack.c.l.b16 %v181
      %v483 = vunpack.c.l.b16 %v182
      %v484 = vunpack.c.h.b16 %v182
      %v485 = vunpack.c.l.b16 %v183
      %v486 = vunpack.c.l.b16 %v184
      %v487 = vunpack.c.h.b16 %v184
      %v488 = vunpack.c.l.b16 %v185
      %v489 = vunpack.c.l.b16 %v186
      %v490 = vunpack.c.h.b16 %v186
      %v491 = vunpack.c.l.b16 %v187
      %v492 = vunpack.c.l.b16 %v188
      %v493 = vunpack.c.h.b16 %v188
      %v494 = vunpack.c.l.b16 %v189
      %v495 = vunpack.c.l.b16 %v190
      %v496 = vunpack.c.h.b16 %v190
      %v497 = vunpack.c.l.b16 %v191
      %v498 = vunpack.c.l.b16 %v192
      %v499 = vunpack.c.h.b16 %v192
      %v500 = vunpack.c.l.b16 %v193
      %v501 = vunpack.c.l.b16 %v194
      %v502 = vunpack.c.h.b16 %v194
      %v503 = vunpack.c.l.b16 %v195
      %v504 = vunpack.c.l.b16 %v196
      %v505 = vunpack.c.h.b16 %v196
      %v506 = vunpack.c.l.b16 %v197
      %v507 = vunpack.c.l.b16 %v198
      %v508 = vunpack.c.h.b16 %v198
      %v509 = vunpack.c.l.b16 %v199
      %v510 = vunpack.c.l.b16 %v200
      %v511 = vunpack.c.h.b16 %v200
      %v512 = vunpack.c.l.b16 %v201
      %v513 = vunpack.c.l.b16 %v202
      %v514 = vunpack.c.h.b16 %v202
      %v515 = vunpack.c.l.b16 %v203
      %v516 = vunpack.c.l.b16 %v204
      %v517 = vunpack.c.h.b16 %v204
      %v518 = vunpack.c.l.b16 %v205
      %v519 = vunpack.c.l.b16 %v206
      %v520 = vunpack.c.h.b16 %v206
      %v521 = vunpack.c.l.b16 %v207
      %v522 = vunpack.c.l.b16 %v208
      %v523 = vunpack.c.h.b16 %v208
      %v524 = vunpack.c.l.b16 %v209
      %v525 = vunpack.c.l.b16 %v210
      %v526 = vunpack.c.h.b16 %v210
      %v527 = vunpack.c.l.b16 %v211
      %v528 = vunpack.c.l.b16 %v212
      %v529 = vunpack.c.h.b16 %v212
      %v530 = vunpack.c.l.b16 %v213
      %v531 = vunpack.c.l.b16 %v214
      %v532 = vunpack.c.h.b16 %v214
      %v533 = vunpack.c.l.b16 %v215
      %v534 = vunpack.c.l.b16 %v216
      %v535 = vunpack.c.h.b16 %v216
      %v536 = vunpack.c.l.b16 %v217
      %v537 = vunpack.c.l.b16 %v218
      %v538 = vunpack.c.h.b16 %v218
      %v539 = vunpack.c.l.b16 %v219
      %v540 = vunpack.c.l.b16 %v220
      %v541 = vunpack.c.h.b16 %v220
      %v542 = vunpack.c.l.b16 %v221
      %v543 = vunpack.c.l.b16 %v222
      %v544 = vunpack.c.h.b16 %v222
      %v545 = vunpack.c.l.b16 %v223
      %v546 = vunpack.c.l.b16 %v224
      %v547 = vunpack.c.h.b16 %v224
      %v548 = vunpack.c.l.b16 %v225
      %v549 = vunpack.c.l.b16 %v226
      %v550 = vunpack.c.h.b16 %v226
      %v551 = vunpack.c.l.b16 %v227
      %v552 = vunpack.c.l.b16 %v228
      %v553 = vunpack.c.h.b16 %v228
      %v554 = vunpack.c.l.b16 %v229
      %v555 = vunpack.c.l.b16 %v230
      %v556 = vunpack.c.h.b16 %v230
      %v557 = vunpack.c.l.b16 %v231
      %v558 = vunpack.c.l.b16 %v232
      %v559 = vunpack.c.h.b16 %v232
      %v560 = vunpack.c.l.b16 %v233
      %v561 = vunpack.c.l.b16 %v234
      %v562 = vunpack.c.h.b16 %v234
      %v563 = vunpack.c.l.b16 %v235
      %v564 = vunpack.c.l.b16 %v236
      %v565 = vunpack.c.h.b16 %v236
      %v566 = vunpack.c.l.b16 %v237
      %v567 = vunpack.c.l.b16 %v238
      %v568 = vunpack.c.h.b16 %v238
      %v569 = vunpack.c.l.b16 %v239
      %v570 = vunpack.c.l.b16 %v240
      %v571 = vunpack.c.h.b16 %v240
      %v572 = vunpack.c.l.b16 %v241
      %v573 = vunpack.c.l.b16 %v242
      %v574 = vunpack.c.h.b16 %v242
      %v575 = vunpack.c.l.b16 %v243
      %v576 = vunpack.c.l.b16 %v244
      %v577 = vunpack.c.h.b16 %v244
      %v578 = vunpack.c.l.b16 %v245
      %v579 = vunpack.c.l.b16 %v246
      %v580 = vunpack.c.h.b16 %v246
      %v581 = vunpack.c.l.b16 %v247
      %v582 = vunpack.c.l.b16 %v248
      %v583 = vunpack.c.h.b16 %v248
      %v584 = vunpack.c.l.b16 %v249
      %v585 = vunpack.c.l.b16 %v250
      %v586 = vunpack.c.h.b16 %v250
      %v587 = vunpack.c.l.b16 %v251
      %v588 = vunpack.c.l.b16 %v252
      %v589 = vunpack.c.h.b16 %v252
      %v590 = vunpack.c.l.b16 %v253
      %v591 = vunpack.c.l.b16 %v254
      %v592 = vunpack.c.h.b16 %v254
      %v593 = vunpack.c.l.b16 %v255
      %v594 = vunpack.c.l.b16 %v256
      %v595 = vunpack.c.h.b16 %v256
      %v596 = vunpack.c.l.b16 %v257
      %v597 = vunpack.c.l.b16 %v258
      %v598 = vunpack.c.h.b16 %v258
      %v599 = vunpack.c.l.b16 %v259
      %v600 = vunpack.c.l.b16 %v260
      %v601 = vunpack.c.h.b16 %v260
      %v602 = vunpack.c.l.b16 %v261
      %v603 = vunpack.c.l.b16 %v262
      %v604 = vunpack.c.h.b16 %v262
      %v605 = vunpack.c.l.b16 %v263
      %v606 = vunpack.c.l.b16 %v264
      %v607 = vunpack.c.h.b16 %v264
      %v608 = vunpack.c.l.b16 %v265
      %v609 = vunpack.c.l.b16 %v266
      %v610 = vunpack.c.h.b16 %v266
      %v611 = vunpack.c.l.b16 %v267
      %v612 = vunpack.c.l.b16 %v268
      %v613 = vunpack.c.h.b16 %v268
      %v614 = vunpack.c.l.b16 %v269
      %v615 = vunpack.c.l.b16 %v270
      %v616 = vunpack.c.h.b16 %v270
      %v617 = vunpack.c.l.b16 %v271
      %v618 = vunpack.c.l.b16 %v272
      %v619 = vunpack.c.h.b16 %v272
      %v620 = vunpack.c.l.b16 %v273
      %v621 = vunpack.c.l.b16 %v274
      %v622 = vunpack.c.h.b16 %v274
      %v623 = vunpack.c.l.b16 %v275
      %v624 = vunpack.c.l.b16 %v276
      %v625 = vunpack.c.h.b16 %v276
      %v626 = vunpack.c.l.b16 %v277
      %v627 = vunpack.c.l.b16 %v278
      %v628 = vunpack.c.h.b16 %v278
      %v629 = vunpack.c.l.b16 %v279
      %v630 = vunpack.c.l.b16 %v280
      %v631 = vunpack.c.h.b16 %v280
      %v632 = vunpack.c.l.b16 %v281
      %v633 = vunpack.c.l.b16 %v282
      %v634 = vunpack.c.h.b16 %v282
      %v635 = vunpack.c.l.b16 %v283
      %v636 = vunpack.c.l.b16 %v284
      %v637 = vunpack.c.h.b16 %v284
      %v638 = vunpack.c.l.b16 %v285
      %v639 = vunpack.c.l.b16 %v286
      %v640 = vunpack.c.h.b16 %v286
      %v641 = vunpack.c.l.b16 %v287
      %v642 = vunpack.c.l.b16 %v288
      %v643 = vunpack.c.h.b16 %v288
      %v644 = vunpack.c.l.b16 %v289
      %v645 = vunpack.c.l.b16 %v290
      %v646 = vunpack.c.h.b16 %v290
      %v647 = vunpack.c.l.b16 %v291
      %v648 = vunpack.c.l.b16 %v292
      %v649 = vunpack.c.h.b16 %v292
      %v650 = vunpack.c.l.b16 %v293
      %v651 = vunpack.c.l.b16 %v294
      %v652 = vunpack.c.h.b16 %v294
      %v653 = vunpack.c.l.b16 %v295
      %v654 = vunpack.c.l.b16 %v296
      %v655 = vunpack.c.h.b16 %v296
      %v656 = vunpack.c.l.b16 %v297
      %v657 = vunpack.c.l.b16 %v298
      %v658 = vunpack.c.h.b16 %v298
      %v659 = vunpack.c.l.b16 %v299
      %v660 = vunpack.c.l.b16 %v300
      %v661 = vunpack.c.h.b16 %v300
      %v662 = vunpack.c.l.b16 %v301
      %v663 = vunpack.c.l.b16 %v302
      %v664 = vunpack.c.h.b16 %v302
      %v665 = vunpack.c.l.b16 %v303
      %v666 = vunpack.c.l.b16 %v304
      %v667 = vunpack.c.h.b16 %v304
      %v668 = vunpack.c.l.b16 %v305
      %v669 = vpack.c.b16 %v480, %v477
      %v670 = vpack.c.b16 %v481, %v478
      %v671 = vpack.c.b16 %v482, %v479
      %v672 = vpack.c.b16 %v486, %v483
      %v673 = vpack.c.b16 %v487, %v484
      %v674 = vpack.c.b16 %v488, %v485
      %v675 = vpack.c.b16 %v492, %v489
      %v676 = vpack.c.b16 %v493, %v490
      %v677 = vpack.c.b16 %v494, %v491
      %v678 = vpack.c.b16 %v498, %v495
      %v679 = vpack.c.b16 %v499, %v496
      %v680 = vpack.c.b16 %v500, %v497
      %v681 = vpack.c.b16 %v504, %v501
      %v682 = vpack.c.b16 %v505, %v502
      %v683 = vpack.c.b16 %v506, %v503
      %v684 = vpack.c.b16 %v510, %v507
      %v685 = vpack.c.b16 %v511, %v508
      %v686 = vpack.c.b16 %v512, %v509
      %v687 = vpack.c.b16 %v516, %v513
      %v688 = vpack.c.b16 %v517, %v514
      %v689 = vpack.c.b16 %v518, %v515
      %v690 = vpack.c.b16 %v522, %v519
      %v691 = vpack.c.b16 %v523, %v520
      %v692 = vpack.c.b16 %v524, %v521
      %v693 = vpack.c.b16 %v528, %v525
      %v694 = vpack.c.b16 %v529, %v526
      %v695 = vpack.c.b16 %v530, %v527
      %v696 = vpack.c.b16 %v534, %v531
      %v697 = vpack.c.b16 %v535, %v532
      %v698 = vpack.c.b16 %v536, %v533
      %v699 = vpack.c.b16 %v540, %v537
      %v700 = vpack.c.b16 %v541, %v538
      %v701 = vpack.c.b16 %v542, %v539
      %v702 = vpack.c.b16 %v546, %v543
      %v703 = vpack.c.b16 %v547, %v544
      %v704 = vpack.c.b16 %v548, %v545
      %v705 = vpack.c.b16 %v552, %v549
      %v706 = vpack.c.b16 %v553, %v550
      %v707 = vpack.c.b16 %v554, %v551
      %v708 = vpack.c.b16 %v558, %v555
      %v709 = vpack.c.b16 %v559, %v556
      %v710 = vpack.c.b16 %v560, %v557
      %v711 = vpack.c.b16 %v564, %v561
      %v712 = vpack.c.b16 %v565, %v562
      %v713 = vpack.c.b16 %v566, %v563
      %v714 = vpack.c.b16 %v570, %v567
      %v715 = vpack.c.b16 %v571, %v568
      %v716 = vpack.c.b16 %v572, %v569
      %v717 = vpack.c.b16 %v576, %v573
      %v718 = vpack.c.b16 %v577, %v574
      %v719 = vpack.c.b16 %v578, %v575
      %v720 = vpack.c.b16 %v582, %v579
      %v721 = vpack.c.b16 %v583, %v580
      %v722 = vpack.c.b16 %v584, %v581
      %v723 = vpack.c.b16 %v588, %v585
      %v724 = vpack.c.b16 %v589, %v586
      %v725 = vpack.c.b16 %v590, %v587
      %v726 = vpack.c.b16 %v594, %v591
      %v727 = vpack.c.b16 %v595, %v592
      %v728 = vpack.c.b16 %v596, %v593
      %v729 = vpack.c.b16 %v600, %v597
      %v730 = vpack.c.b16 %v601, %v598
      %v731 = vpack.c.b16 %v602, %v599
      %v732 = vpack.c.b16 %v606, %v603
      %v733 = vpack.c.b16 %v607, %v604
      %v734 = vpack.c.b16 %v608, %v605
      %v735 = vpack.c.b16 %v612, %v609
      %v736 = vpack.c.b16 %v613, %v610
      %v737 = vpack.c.b16 %v614, %v611
      %v738 = vpack.c.b16 %v618, %v615
      %v739 = vpack.c.b16 %v619, %v616
      %v740 = vpack.c.b16 %v620, %v617
      %v741 = vpack.c.b16 %v624, %v621
      %v742 = vpack.c.b16 %v625, %v622
      %v743 = vpack.c.b16 %v626, %v623
      %v744 = vpack.c.b16 %v630, %v627
      %v745 = vpack.c.b16 %v631, %v628
      %v746 = vpack.c.b16 %v632, %v629
      %v747 = vpack.c.b16 %v636, %v633
      %v748 = vpack.c.b16 %v637, %v634
      %v749 = vpack.c.b16 %v638, %v635
      %v750 = vpack.c.b16 %v642, %v639
      %v751 = vpack.c.b16 %v643, %v640
      %v752 = vpack.c.b16 %v644, %v641
      %v753 = vpack.c.b16 %v648, %v645
      %v754 = vpack.c.b16 %v649, %v646
      %v755 = vpack.c.b16 %v650, %v647
      %v756 = vpack.c.b16 %v654, %v651
      %v757 = vpack.c.b16 %v655, %v652
      %v758 = vpack.c.b16 %v656, %v653
      %v759 = vpack.c.b16 %v660, %v657
      %v760 = vpack.c.b16 %v661, %v658
      %v761 = vpack.c.b16 %v662, %v659
      %v762 = vpack.c.b16 %v666, %v663
      %v763 = vpack.c.b16 %v667, %v664
      %v764 = vpack.c.b16 %v668, %v665
      %v865 = vunpack.c.l.b16 %v306
      %v866 = vunpack.c.l.b16 %v307
      %v867 = vunpack.c.l.b16 %v308
      %v868 = vunpack.c.l.b16 %v309
      %v869 = vunpack.c.l.b16 %v310
      %v870 = vunpack.c.l.b16 %v311
      %v871 = vunpack.c.l.b16 %v312
      %v872 = vunpack.c.l.b16 %v313
      %v873 = vunpack.c.l.b16 %v314
      %v874 = vunpack.c.l.b16 %v315
      %v875 = vunpack.c.l.b16 %v316
      %v876 = vunpack.c.l.b16 %v317
      %v877 = vunpack.c.l.b16 %v318
      %v878 = vunpack.c.l.b16 %v319
      %v879 = vunpack.c.l.b16 %v320
      %v880 = vunpack.c.l.b16 %v321
      %v881 = vunpack.c.l.b16 %v322
      %v882 = vunpack.c.l.b16 %v323
      %v883 = vunpack.c.l.b16 %v324
      %v884 = vunpack.c.l.b16 %v325
      %v885 = vunpack.c.l.b16 %v326
      %v886 = vunpack.c.l.b16 %v327
      %v887 = vunpack.c.l.b16 %v328
      %v888 = vunpack.c.l.b16 %v329
      %v889 = vunpack.c.l.b16 %v330
      %v890 = vunpack.c.l.b16 %v331
      %v891 = vunpack.c.l.b16 %v332
      %v892 = vunpack.c.l.b16 %v333
      %v893 = vunpack.c.l.b16 %v334
      %v894 = vunpack.c.l.b16 %v335
      %v895 = vunpack.c.l.b16 %v336
      %v896 = vunpack.c.l.b16 %v337
      %v897 = vunpack.c.l.b16 %v338
      %v898 = vunpack.c.l.b16 %v339
      %v899 = vunpack.c.l.b16 %v340
      %v900 = vunpack.c.l.b16 %v341
      %v901 = vpack.c.b16 %v866, %v865
      %v902 = vpack.c.b16 %v868, %v867
      %v903 = vpack.c.b16 %v870, %v869
      %v904 = vpack.c.b16 %v872, %v871
      %v905 = vpack.c.b16 %v874, %v873
      %v906 = vpack.c.b16 %v876, %v875
      %v907 = vpack.c.b16 %v878, %v877
      %v908 = vpack.c.b16 %v880, %v879
      %v909 = vpack.c.b16 %v882, %v881
      %v910 = vpack.c.b16 %v884, %v883
      %v911 = vpack.c.b16 %v886, %v885
      %v912 = vpack.c.b16 %v888, %v887
      %v913 = vpack.c.b16 %v890, %v889
      %v914 = vpack.c.b16 %v892, %v891
      %v915 = vpack.c.b16 %v894, %v893
      %v916 = vpack.c.b16 %v896, %v895
      %v917 = vpack.c.b16 %v898, %v897
      %v918 = vpack.c.b16 %v900, %v899
      %vm937 = vcmask 261120
      %v939 = vsel %vm937, %v671, 0
      %v942 = vsel %vm937, %v674, 0
      %v945 = vsel %vm937, %v677, 0
      %v948 = vsel %vm937, %v680, 0
      %v951 = vsel %vm937, %v683, 0
      %v954 = vsel %vm937, %v686, 0
      %v957 = vsel %vm937, %v689, 0
      %v960 = vsel %vm937, %v692, 0
      %v963 = vsel %vm937, %v695, 0
      %v966 = vsel %vm937, %v698, 0
      %v969 = vsel %vm937, %v701, 0
      %v972 = vsel %vm937, %v704, 0
      %v975 = vsel %vm937, %v707, 0
      %v978 = vsel %vm937, %v710, 0
      %v981 = vsel %vm937, %v713, 0
      %v984 = vsel %vm937, %v716, 0
      %v987 = vsel %vm937, %v719, 0
      %v990 = vsel %vm937, %v722, 0
      %v993 = vsel %vm937, %v725, 0
      %v996 = vsel %vm937, %v728, 0
      %v999 = vsel %vm937, %v731, 0
      %v1002 = vsel %vm937, %v734, 0
      %v1005 = vsel %vm937, %v737, 0
      %v1008 = vsel %vm937, %v740, 0
      %v1011 = vsel %vm937, %v743, 0
      %v1014 = vsel %vm937, %v746, 0
      %v1017 = vsel %vm937, %v749, 0
      %v1020 = vsel %vm937, %v752, 0
      %v1023 = vsel %vm937, %v755, 0
      %v1026 = vsel %vm937, %v758, 0
      %v1029 = vsel %vm937, %v761, 0
      %v1032 = vsel %vm937, %v764, 0
      %1034 = vmatprep.subr.bf16.mxu0 0
      %1035 = vmatpush1.bf16.msra.mxu0 %v908
      %1036 = vmatprep.subr.bf16.mxu0 0
      %1037 = vmatpush1.bf16.msra.mxu0 %v907
      %1038 = vmatprep.subr.bf16.mxu0 0
      %1039 = vmatpush1.bf16.msra.mxu0 %v906
      %1040 = vmatprep.subr.bf16.mxu0 0
      %1041 = vmatpush1.bf16.msra.mxu0 %v905
      %1042 = vmatprep.subr.bf16.mxu0 0
      %1043 = vmatpush1.bf16.msra.mxu0 %v904
      %1044 = vmatprep.subr.bf16.mxu0 0
      %1045 = vmatpush1.bf16.msra.mxu0 %v903
      %1046 = vmatprep.subr.bf16.mxu0 0
      %1047 = vmatpush1.bf16.msra.mxu0 %v902
      %1048 = vmatprep.subr.bf16.mxu0 0
      %1049 = vmatpush1.bf16.msra.mxu0 %v901
      %1050 = vmatprep.subr.bf16.mxu0 0
      %1051 = vmatpush2.bf16.msra.mxu0 %v916
      %1052 = vmatprep.subr.bf16.mxu0 0
      %1053 = vmatpush2.bf16.msra.mxu0 %v915
      %1054 = vmatprep.subr.bf16.mxu0 0
      %1055 = vmatpush2.bf16.msra.mxu0 %v914
      %1056 = vmatprep.subr.bf16.mxu0 0
      %1057 = vmatpush2.bf16.msra.mxu0 %v913
      %1058 = vmatprep.subr.bf16.mxu0 0
      %1059 = vmatpush2.bf16.msra.mxu0 %v912
      %1060 = vmatprep.subr.bf16.mxu0 0
      %1061 = vmatpush2.bf16.msra.mxu0 %v911
      %1062 = vmatprep.subr.bf16.mxu0 0
      %1063 = vmatpush2.bf16.msra.mxu0 %v910
      %1064 = vmatprep.subr.bf16.mxu0 0
      %1065 = vmatpush2.bf16.msra.mxu0 %v909
      %1066 = vmatprep.mubr.bf16.mxu0 %v670
      %1067 = vmatmul.mubr.bf16.gmra.mxu0 %v669
      %v1068 = vpop.f32.mrf.mxu0
      %v1069 = vadd.f32 %v347, %v1068
      %v1070 = vpop.f32.mrf.mxu0
      %v1071 = vpop.f32.mrf.mxu0
      %v1072 = vadd.f32 %v347, %v1071
      %v1073 = vpop.f32.mrf.mxu0
      %1074 = vmatprep.mubr.bf16.mxu0 %v673
      %1075 = vmatmul.mubr.bf16.gmra.mxu0 %v672
      %v1076 = vpop.f32.mrf.mxu0
      %v1077 = vadd.f32 %v347, %v1076
      %v1078 = vpop.f32.mrf.mxu0
      %v1079 = vpop.f32.mrf.mxu0
      %v1080 = vadd.f32 %v347, %v1079
      %v1081 = vpop.f32.mrf.mxu0
      %1082 = vmatprep.mubr.bf16.mxu0 %v676
      %1083 = vmatmul.mubr.bf16.gmra.mxu0 %v675
      %v1084 = vpop.f32.mrf.mxu0
      %v1085 = vadd.f32 %v347, %v1084
      %v1086 = vpop.f32.mrf.mxu0
      %v1087 = vpop.f32.mrf.mxu0
      %v1088 = vadd.f32 %v347, %v1087
      %v1089 = vpop.f32.mrf.mxu0
      %1090 = vmatprep.mubr.bf16.mxu0 %v679
      %1091 = vmatmul.mubr.bf16.gmra.mxu0 %v678
      %v1092 = vpop.f32.mrf.mxu0
      %v1093 = vadd.f32 %v347, %v1092
      %v1094 = vpop.f32.mrf.mxu0
      %v1095 = vpop.f32.mrf.mxu0
      %v1096 = vadd.f32 %v347, %v1095
      %v1097 = vpop.f32.mrf.mxu0
      %1098 = vmatprep.mubr.bf16.mxu0 %v682
      %1099 = vmatmul.mubr.bf16.gmra.mxu0 %v681
      %v1100 = vpop.f32.mrf.mxu0
      %v1101 = vadd.f32 %v347, %v1100
      %v1102 = vpop.f32.mrf.mxu0
      %v1103 = vpop.f32.mrf.mxu0
      %v1104 = vadd.f32 %v347, %v1103
      %v1105 = vpop.f32.mrf.mxu0
      %1106 = vmatprep.mubr.bf16.mxu0 %v685
      %1107 = vmatmul.mubr.bf16.gmra.mxu0 %v684
      %v1108 = vpop.f32.mrf.mxu0
      %v1109 = vadd.f32 %v347, %v1108
      %v1110 = vpop.f32.mrf.mxu0
      %v1111 = vpop.f32.mrf.mxu0
      %v1112 = vadd.f32 %v347, %v1111
      %v1113 = vpop.f32.mrf.mxu0
      %1114 = vmatprep.mubr.bf16.mxu0 %v688
      %1115 = vmatmul.mubr.bf16.gmra.mxu0 %v687
      %v1116 = vpop.f32.mrf.mxu0
      %v1117 = vadd.f32 %v347, %v1116
      %v1118 = vpop.f32.mrf.mxu0
      %v1119 = vpop.f32.mrf.mxu0
      %v1120 = vadd.f32 %v347, %v1119
      %v1121 = vpop.f32.mrf.mxu0
      %1122 = vmatprep.mubr.bf16.mxu0 %v691
      %1123 = vmatmul.mubr.bf16.gmra.mxu0 %v690
      %v1124 = vpop.f32.mrf.mxu0
      %v1125 = vadd.f32 %v347, %v1124
      %v1126 = vpop.f32.mrf.mxu0
      %v1127 = vpop.f32.mrf.mxu0
      %v1128 = vadd.f32 %v347, %v1127
      %v1129 = vpop.f32.mrf.mxu0
      %1130 = vmatprep.mubr.bf16.mxu0 %v694
      %1131 = vmatmul.mubr.bf16.gmra.mxu0 %v693
      %v1132 = vpop.f32.mrf.mxu0
      %v1133 = vadd.f32 %v347, %v1132
      %v1134 = vpop.f32.mrf.mxu0
      %v1135 = vpop.f32.mrf.mxu0
      %v1136 = vadd.f32 %v347, %v1135
      %v1137 = vpop.f32.mrf.mxu0
      %1138 = vmatprep.mubr.bf16.mxu0 %v697
      %1139 = vmatmul.mubr.bf16.gmra.mxu0 %v696
      %v1140 = vpop.f32.mrf.mxu0
      %v1141 = vadd.f32 %v347, %v1140
      %v1142 = vpop.f32.mrf.mxu0
      %v1143 = vpop.f32.mrf.mxu0
      %v1144 = vadd.f32 %v347, %v1143
      %v1145 = vpop.f32.mrf.mxu0
      %1146 = vmatprep.mubr.bf16.mxu0 %v700
      %1147 = vmatmul.mubr.bf16.gmra.mxu0 %v699
      %v1148 = vpop.f32.mrf.mxu0
      %v1149 = vadd.f32 %v347, %v1148
      %v1150 = vpop.f32.mrf.mxu0
      %v1151 = vpop.f32.mrf.mxu0
      %v1152 = vadd.f32 %v347, %v1151
      %v1153 = vpop.f32.mrf.mxu0
      %1154 = vmatprep.mubr.bf16.mxu0 %v703
      %1155 = vmatmul.mubr.bf16.gmra.mxu0 %v702
      %v1156 = vpop.f32.mrf.mxu0
      %v1157 = vadd.f32 %v347, %v1156
      %v1158 = vpop.f32.mrf.mxu0
      %v1159 = vpop.f32.mrf.mxu0
      %v1160 = vadd.f32 %v347, %v1159
      %v1161 = vpop.f32.mrf.mxu0
      %1162 = vmatprep.mubr.bf16.mxu0 %v706
      %1163 = vmatmul.mubr.bf16.gmra.mxu0 %v705
      %v1164 = vpop.f32.mrf.mxu0
      %v1165 = vadd.f32 %v347, %v1164
      %v1166 = vpop.f32.mrf.mxu0
      %v1167 = vpop.f32.mrf.mxu0
      %v1168 = vadd.f32 %v347, %v1167
      %v1169 = vpop.f32.mrf.mxu0
      %1170 = vmatprep.mubr.bf16.mxu0 %v709
      %1171 = vmatmul.mubr.bf16.gmra.mxu0 %v708
      %v1172 = vpop.f32.mrf.mxu0
      %v1173 = vadd.f32 %v347, %v1172
      %v1174 = vpop.f32.mrf.mxu0
      %v1175 = vpop.f32.mrf.mxu0
      %v1176 = vadd.f32 %v347, %v1175
      %v1177 = vpop.f32.mrf.mxu0
      %1178 = vmatprep.mubr.bf16.mxu0 %v712
      %1179 = vmatmul.mubr.bf16.gmra.mxu0 %v711
      %v1180 = vpop.f32.mrf.mxu0
      %v1181 = vadd.f32 %v347, %v1180
      %v1182 = vpop.f32.mrf.mxu0
      %v1183 = vpop.f32.mrf.mxu0
      %v1184 = vadd.f32 %v347, %v1183
      %v1185 = vpop.f32.mrf.mxu0
      %1186 = vmatprep.mubr.bf16.mxu0 %v715
      %1187 = vmatmul.mubr.bf16.gmra.mxu0 %v714
      %v1188 = vpop.f32.mrf.mxu0
      %v1189 = vadd.f32 %v347, %v1188
      %v1190 = vpop.f32.mrf.mxu0
      %v1191 = vpop.f32.mrf.mxu0
      %v1192 = vadd.f32 %v347, %v1191
      %v1193 = vpop.f32.mrf.mxu0
      %1194 = vmatprep.mubr.bf16.mxu0 %v718
      %1195 = vmatmul.mubr.bf16.gmra.mxu0 %v717
      %v1196 = vpop.f32.mrf.mxu0
      %v1197 = vadd.f32 %v347, %v1196
      %v1198 = vpop.f32.mrf.mxu0
      %v1199 = vpop.f32.mrf.mxu0
      %v1200 = vadd.f32 %v347, %v1199
      %v1201 = vpop.f32.mrf.mxu0
      %1202 = vmatprep.mubr.bf16.mxu0 %v721
      %1203 = vmatmul.mubr.bf16.gmra.mxu0 %v720
      %v1204 = vpop.f32.mrf.mxu0
      %v1205 = vadd.f32 %v347, %v1204
      %v1206 = vpop.f32.mrf.mxu0
      %v1207 = vpop.f32.mrf.mxu0
      %v1208 = vadd.f32 %v347, %v1207
      %v1209 = vpop.f32.mrf.mxu0
      %1210 = vmatprep.mubr.bf16.mxu0 %v724
      %1211 = vmatmul.mubr.bf16.gmra.mxu0 %v723
      %v1212 = vpop.f32.mrf.mxu0
      %v1213 = vadd.f32 %v347, %v1212
      %v1214 = vpop.f32.mrf.mxu0
      %v1215 = vpop.f32.mrf.mxu0
      %v1216 = vadd.f32 %v347, %v1215
      %v1217 = vpop.f32.mrf.mxu0
      %1218 = vmatprep.mubr.bf16.mxu0 %v727
      %1219 = vmatmul.mubr.bf16.gmra.mxu0 %v726
      %v1220 = vpop.f32.mrf.mxu0
      %v1221 = vadd.f32 %v347, %v1220
      %v1222 = vpop.f32.mrf.mxu0
      %v1223 = vpop.f32.mrf.mxu0
      %v1224 = vadd.f32 %v347, %v1223
      %v1225 = vpop.f32.mrf.mxu0
      %1226 = vmatprep.mubr.bf16.mxu0 %v730
      %1227 = vmatmul.mubr.bf16.gmra.mxu0 %v729
      %v1228 = vpop.f32.mrf.mxu0
      %v1229 = vadd.f32 %v347, %v1228
      %v1230 = vpop.f32.mrf.mxu0
      %v1231 = vpop.f32.mrf.mxu0
      %v1232 = vadd.f32 %v347, %v1231
      %v1233 = vpop.f32.mrf.mxu0
      %1234 = vmatprep.mubr.bf16.mxu0 %v733
      %1235 = vmatmul.mubr.bf16.gmra.mxu0 %v732
      %v1236 = vpop.f32.mrf.mxu0
      %v1237 = vadd.f32 %v347, %v1236
      %v1238 = vpop.f32.mrf.mxu0
      %v1239 = vpop.f32.mrf.mxu0
      %v1240 = vadd.f32 %v347, %v1239
      %v1241 = vpop.f32.mrf.mxu0
      %1242 = vmatprep.mubr.bf16.mxu0 %v736
      %1243 = vmatmul.mubr.bf16.gmra.mxu0 %v735
      %v1244 = vpop.f32.mrf.mxu0
      %v1245 = vadd.f32 %v347, %v1244
      %v1246 = vpop.f32.mrf.mxu0
      %v1247 = vpop.f32.mrf.mxu0
      %v1248 = vadd.f32 %v347, %v1247
      %v1249 = vpop.f32.mrf.mxu0
      %1250 = vmatprep.mubr.bf16.mxu0 %v739
      %1251 = vmatmul.mubr.bf16.gmra.mxu0 %v738
      %v1252 = vpop.f32.mrf.mxu0
      %v1253 = vadd.f32 %v347, %v1252
      %v1254 = vpop.f32.mrf.mxu0
      %v1255 = vpop.f32.mrf.mxu0
      %v1256 = vadd.f32 %v347, %v1255
      %v1257 = vpop.f32.mrf.mxu0
      %1258 = vmatprep.mubr.bf16.mxu0 %v742
      %1259 = vmatmul.mubr.bf16.gmra.mxu0 %v741
      %v1260 = vpop.f32.mrf.mxu0
      %v1261 = vadd.f32 %v347, %v1260
      %v1262 = vpop.f32.mrf.mxu0
      %v1263 = vpop.f32.mrf.mxu0
      %v1264 = vadd.f32 %v347, %v1263
      %v1265 = vpop.f32.mrf.mxu0
      %1266 = vmatprep.mubr.bf16.mxu0 %v745
      %1267 = vmatmul.mubr.bf16.gmra.mxu0 %v744
      %v1268 = vpop.f32.mrf.mxu0
      %v1269 = vadd.f32 %v347, %v1268
      %v1270 = vpop.f32.mrf.mxu0
      %v1271 = vpop.f32.mrf.mxu0
      %v1272 = vadd.f32 %v347, %v1271
      %v1273 = vpop.f32.mrf.mxu0
      %1274 = vmatprep.mubr.bf16.mxu0 %v748
      %1275 = vmatmul.mubr.bf16.gmra.mxu0 %v747
      %v1276 = vpop.f32.mrf.mxu0
      %v1277 = vadd.f32 %v347, %v1276
      %v1278 = vpop.f32.mrf.mxu0
      %v1279 = vpop.f32.mrf.mxu0
      %v1280 = vadd.f32 %v347, %v1279
      %v1281 = vpop.f32.mrf.mxu0
      %1282 = vmatprep.mubr.bf16.mxu0 %v751
      %1283 = vmatmul.mubr.bf16.gmra.mxu0 %v750
      %v1284 = vpop.f32.mrf.mxu0
      %v1285 = vadd.f32 %v347, %v1284
      %v1286 = vpop.f32.mrf.mxu0
      %v1287 = vpop.f32.mrf.mxu0
      %v1288 = vadd.f32 %v347, %v1287
      %v1289 = vpop.f32.mrf.mxu0
      %1290 = vmatprep.mubr.bf16.mxu0 %v754
      %1291 = vmatmul.mubr.bf16.gmra.mxu0 %v753
      %v1292 = vpop.f32.mrf.mxu0
      %v1293 = vadd.f32 %v347, %v1292
      %v1294 = vpop.f32.mrf.mxu0
      %v1295 = vpop.f32.mrf.mxu0
      %v1296 = vadd.f32 %v347, %v1295
      %v1297 = vpop.f32.mrf.mxu0
      %1298 = vmatprep.mubr.bf16.mxu0 %v757
      %1299 = vmatmul.mubr.bf16.gmra.mxu0 %v756
      %v1300 = vpop.f32.mrf.mxu0
      %v1301 = vadd.f32 %v347, %v1300
      %v1302 = vpop.f32.mrf.mxu0
      %v1303 = vpop.f32.mrf.mxu0
      %v1304 = vadd.f32 %v347, %v1303
      %v1305 = vpop.f32.mrf.mxu0
      %1306 = vmatprep.mubr.bf16.mxu0 %v760
      %1307 = vmatmul.mubr.bf16.gmra.mxu0 %v759
      %v1308 = vpop.f32.mrf.mxu0
      %v1309 = vadd.f32 %v347, %v1308
      %v1310 = vpop.f32.mrf.mxu0
      %v1311 = vpop.f32.mrf.mxu0
      %v1312 = vadd.f32 %v347, %v1311
      %v1313 = vpop.f32.mrf.mxu0
      %1314 = vmatprep.mubr.bf16.mxu0 %v763
      %1315 = vmatmul.mubr.bf16.gmra.mxu0 %v762
      %v1316 = vpop.f32.mrf.mxu0
      %v1317 = vadd.f32 %v347, %v1316
      %v1318 = vpop.f32.mrf.mxu0
      %v1319 = vpop.f32.mrf.mxu0
      %v1320 = vadd.f32 %v347, %v1319
      %v1321 = vpop.f32.mrf.mxu0
      %1322 = vdwg.mxu0
      %1323 = vmatprep.subr.bf16.mxu0 0
      %1324 = vmatpush1.bf16.msra.mxu0 0
      %1325 = vmatprep.subr.bf16.mxu0 0
      %1326 = vmatpush1.bf16.msra.mxu0 0
      %1327 = vmatprep.subr.bf16.mxu0 0
      %1328 = vmatpush1.bf16.msra.mxu0 0
      %1329 = vmatprep.subr.bf16.mxu0 0
      %1330 = vmatpush1.bf16.msra.mxu0 0
      %1331 = vmatprep.subr.bf16.mxu0 0
      %1332 = vmatpush1.bf16.msra.mxu0 0
      %1333 = vmatprep.subr.bf16.mxu0 0
      %1334 = vmatpush1.bf16.msra.mxu0 0
      %1335 = vmatprep.subr.bf16.mxu0 0
      %1336 = vmatpush1.bf16.msra.mxu0 %v918
      %1337 = vmatprep.subr.bf16.mxu0 0
      %1338 = vmatpush1.bf16.msra.mxu0 %v917
      %1339 = vmatprep.subr.bf16.mxu0 0
      %1340 = vmatpush2.bf16.msra.mxu0 0
      %1341 = vmatprep.subr.bf16.mxu0 0
      %1342 = vmatpush2.bf16.msra.mxu0 0
      %1343 = vmatprep.subr.bf16.mxu0 0
      %1344 = vmatpush2.bf16.msra.mxu0 0
      %1345 = vmatprep.subr.bf16.mxu0 0
      %1346 = vmatpush2.bf16.msra.mxu0 0
      %1347 = vmatprep.subr.bf16.mxu0 0
      %1348 = vmatpush2.bf16.msra.mxu0 0
      %1349 = vmatprep.subr.bf16.mxu0 0
      %1350 = vmatpush2.bf16.msra.mxu0 0
      %1351 = vmatprep.subr.bf16.mxu0 0
      %1352 = vmatpush2.bf16.msra.mxu0 0
      %1353 = vmatprep.subr.bf16.mxu0 0
      %1354 = vmatpush2.bf16.msra.mxu0 0
      %1355 = vmatprep.mubr.bf16.mxu0 0
      %1356 = vmatmul.mubr.bf16.gmra.mxu0 %v939
      %v1357 = vpop.f32.mrf.mxu0
      %v1358 = vadd.f32 %v1069, %v1357
      %v1359 = vpop.f32.mrf.mxu0
      %v1360 = vpop.f32.mrf.mxu0
      %v1361 = vadd.f32 %v1072, %v1360
      %v1362 = vpop.f32.mrf.mxu0
      %1363 = vmatprep.mubr.bf16.mxu0 0
      %1364 = vmatmul.mubr.bf16.gmra.mxu0 %v942
      %v1365 = vpop.f32.mrf.mxu0
      %v1366 = vadd.f32 %v1077, %v1365
      %v1367 = vpop.f32.mrf.mxu0
      %v1368 = vpop.f32.mrf.mxu0
      %v1369 = vadd.f32 %v1080, %v1368
      %v1370 = vpop.f32.mrf.mxu0
      %1371 = vmatprep.mubr.bf16.mxu0 0
      %1372 = vmatmul.mubr.bf16.gmra.mxu0 %v945
      %v1373 = vpop.f32.mrf.mxu0
      %v1374 = vadd.f32 %v1085, %v1373
      %v1375 = vpop.f32.mrf.mxu0
      %v1376 = vpop.f32.mrf.mxu0
      %v1377 = vadd.f32 %v1088, %v1376
      %v1378 = vpop.f32.mrf.mxu0
      %1379 = vmatprep.mubr.bf16.mxu0 0
      %1380 = vmatmul.mubr.bf16.gmra.mxu0 %v948
      %v1381 = vpop.f32.mrf.mxu0
      %v1382 = vadd.f32 %v1093, %v1381
      %v1383 = vpop.f32.mrf.mxu0
      %v1384 = vpop.f32.mrf.mxu0
      %v1385 = vadd.f32 %v1096, %v1384
      %v1386 = vpop.f32.mrf.mxu0
      %1387 = vmatprep.mubr.bf16.mxu0 0
      %1388 = vmatmul.mubr.bf16.gmra.mxu0 %v951
      %v1389 = vpop.f32.mrf.mxu0
      %v1390 = vadd.f32 %v1101, %v1389
      %v1391 = vpop.f32.mrf.mxu0
      %v1392 = vpop.f32.mrf.mxu0
      %v1393 = vadd.f32 %v1104, %v1392
      %v1394 = vpop.f32.mrf.mxu0
      %1395 = vmatprep.mubr.bf16.mxu0 0
      %1396 = vmatmul.mubr.bf16.gmra.mxu0 %v954
      %v1397 = vpop.f32.mrf.mxu0
      %v1398 = vadd.f32 %v1109, %v1397
      %v1399 = vpop.f32.mrf.mxu0
      %v1400 = vpop.f32.mrf.mxu0
      %v1401 = vadd.f32 %v1112, %v1400
      %v1402 = vpop.f32.mrf.mxu0
      %1403 = vmatprep.mubr.bf16.mxu0 0
      %1404 = vmatmul.mubr.bf16.gmra.mxu0 %v957
      %v1405 = vpop.f32.mrf.mxu0
      %v1406 = vadd.f32 %v1117, %v1405
      %v1407 = vpop.f32.mrf.mxu0
      %v1408 = vpop.f32.mrf.mxu0
      %v1409 = vadd.f32 %v1120, %v1408
      %v1410 = vpop.f32.mrf.mxu0
      %1411 = vmatprep.mubr.bf16.mxu0 0
      %1412 = vmatmul.mubr.bf16.gmra.mxu0 %v960
      %v1413 = vpop.f32.mrf.mxu0
      %v1414 = vadd.f32 %v1125, %v1413
      %v1415 = vpop.f32.mrf.mxu0
      %v1416 = vpop.f32.mrf.mxu0
      %v1417 = vadd.f32 %v1128, %v1416
      %v1418 = vpop.f32.mrf.mxu0
      %1419 = vmatprep.mubr.bf16.mxu0 0
      %1420 = vmatmul.mubr.bf16.gmra.mxu0 %v963
      %v1421 = vpop.f32.mrf.mxu0
      %v1422 = vadd.f32 %v1133, %v1421
      %v1423 = vpop.f32.mrf.mxu0
      %v1424 = vpop.f32.mrf.mxu0
      %v1425 = vadd.f32 %v1136, %v1424
      %v1426 = vpop.f32.mrf.mxu0
      %1427 = vmatprep.mubr.bf16.mxu0 0
      %1428 = vmatmul.mubr.bf16.gmra.mxu0 %v966
      %v1429 = vpop.f32.mrf.mxu0
      %v1430 = vadd.f32 %v1141, %v1429
      %v1431 = vpop.f32.mrf.mxu0
      %v1432 = vpop.f32.mrf.mxu0
      %v1433 = vadd.f32 %v1144, %v1432
      %v1434 = vpop.f32.mrf.mxu0
      %1435 = vmatprep.mubr.bf16.mxu0 0
      %1436 = vmatmul.mubr.bf16.gmra.mxu0 %v969
      %v1437 = vpop.f32.mrf.mxu0
      %v1438 = vadd.f32 %v1149, %v1437
      %v1439 = vpop.f32.mrf.mxu0
      %v1440 = vpop.f32.mrf.mxu0
      %v1441 = vadd.f32 %v1152, %v1440
      %v1442 = vpop.f32.mrf.mxu0
      %1443 = vmatprep.mubr.bf16.mxu0 0
      %1444 = vmatmul.mubr.bf16.gmra.mxu0 %v972
      %v1445 = vpop.f32.mrf.mxu0
      %v1446 = vadd.f32 %v1157, %v1445
      %v1447 = vpop.f32.mrf.mxu0
      %v1448 = vpop.f32.mrf.mxu0
      %v1449 = vadd.f32 %v1160, %v1448
      %v1450 = vpop.f32.mrf.mxu0
      %1451 = vmatprep.mubr.bf16.mxu0 0
      %1452 = vmatmul.mubr.bf16.gmra.mxu0 %v975
      %v1453 = vpop.f32.mrf.mxu0
      %v1454 = vadd.f32 %v1165, %v1453
      %v1455 = vpop.f32.mrf.mxu0
      %v1456 = vpop.f32.mrf.mxu0
      %v1457 = vadd.f32 %v1168, %v1456
      %v1458 = vpop.f32.mrf.mxu0
      %1459 = vmatprep.mubr.bf16.mxu0 0
      %1460 = vmatmul.mubr.bf16.gmra.mxu0 %v978
      %v1461 = vpop.f32.mrf.mxu0
      %v1462 = vadd.f32 %v1173, %v1461
      %v1463 = vpop.f32.mrf.mxu0
      %v1464 = vpop.f32.mrf.mxu0
      %v1465 = vadd.f32 %v1176, %v1464
      %v1466 = vpop.f32.mrf.mxu0
      %1467 = vmatprep.mubr.bf16.mxu0 0
      %1468 = vmatmul.mubr.bf16.gmra.mxu0 %v981
      %v1469 = vpop.f32.mrf.mxu0
      %v1470 = vadd.f32 %v1181, %v1469
      %v1471 = vpop.f32.mrf.mxu0
      %v1472 = vpop.f32.mrf.mxu0
      %v1473 = vadd.f32 %v1184, %v1472
      %v1474 = vpop.f32.mrf.mxu0
      %1475 = vmatprep.mubr.bf16.mxu0 0
      %1476 = vmatmul.mubr.bf16.gmra.mxu0 %v984
      %v1477 = vpop.f32.mrf.mxu0
      %v1478 = vadd.f32 %v1189, %v1477
      %v1479 = vpop.f32.mrf.mxu0
      %v1480 = vpop.f32.mrf.mxu0
      %v1481 = vadd.f32 %v1192, %v1480
      %v1482 = vpop.f32.mrf.mxu0
      %1483 = vmatprep.mubr.bf16.mxu0 0
      %1484 = vmatmul.mubr.bf16.gmra.mxu0 %v987
      %v1485 = vpop.f32.mrf.mxu0
      %v1486 = vadd.f32 %v1197, %v1485
      %v1487 = vpop.f32.mrf.mxu0
      %v1488 = vpop.f32.mrf.mxu0
      %v1489 = vadd.f32 %v1200, %v1488
      %v1490 = vpop.f32.mrf.mxu0
      %1491 = vmatprep.mubr.bf16.mxu0 0
      %1492 = vmatmul.mubr.bf16.gmra.mxu0 %v990
      %v1493 = vpop.f32.mrf.mxu0
      %v1494 = vadd.f32 %v1205, %v1493
      %v1495 = vpop.f32.mrf.mxu0
      %v1496 = vpop.f32.mrf.mxu0
      %v1497 = vadd.f32 %v1208, %v1496
      %v1498 = vpop.f32.mrf.mxu0
      %1499 = vmatprep.mubr.bf16.mxu0 0
      %1500 = vmatmul.mubr.bf16.gmra.mxu0 %v993
      %v1501 = vpop.f32.mrf.mxu0
      %v1502 = vadd.f32 %v1213, %v1501
      %v1503 = vpop.f32.mrf.mxu0
      %v1504 = vpop.f32.mrf.mxu0
      %v1505 = vadd.f32 %v1216, %v1504
      %v1506 = vpop.f32.mrf.mxu0
      %1507 = vmatprep.mubr.bf16.mxu0 0
      %1508 = vmatmul.mubr.bf16.gmra.mxu0 %v996
      %v1509 = vpop.f32.mrf.mxu0
      %v1510 = vadd.f32 %v1221, %v1509
      %v1511 = vpop.f32.mrf.mxu0
      %v1512 = vpop.f32.mrf.mxu0
      %v1513 = vadd.f32 %v1224, %v1512
      %v1514 = vpop.f32.mrf.mxu0
      %1515 = vmatprep.mubr.bf16.mxu0 0
      %1516 = vmatmul.mubr.bf16.gmra.mxu0 %v999
      %v1517 = vpop.f32.mrf.mxu0
      %v1518 = vadd.f32 %v1229, %v1517
      %v1519 = vpop.f32.mrf.mxu0
      %v1520 = vpop.f32.mrf.mxu0
      %v1521 = vadd.f32 %v1232, %v1520
      %v1522 = vpop.f32.mrf.mxu0
      %1523 = vmatprep.mubr.bf16.mxu0 0
      %1524 = vmatmul.mubr.bf16.gmra.mxu0 %v1002
      %v1525 = vpop.f32.mrf.mxu0
      %v1526 = vadd.f32 %v1237, %v1525
      %v1527 = vpop.f32.mrf.mxu0
      %v1528 = vpop.f32.mrf.mxu0
      %v1529 = vadd.f32 %v1240, %v1528
      %v1530 = vpop.f32.mrf.mxu0
      %1531 = vmatprep.mubr.bf16.mxu0 0
      %1532 = vmatmul.mubr.bf16.gmra.mxu0 %v1005
      %v1533 = vpop.f32.mrf.mxu0
      %v1534 = vadd.f32 %v1245, %v1533
      %v1535 = vpop.f32.mrf.mxu0
      %v1536 = vpop.f32.mrf.mxu0
      %v1537 = vadd.f32 %v1248, %v1536
      %v1538 = vpop.f32.mrf.mxu0
      %1539 = vmatprep.mubr.bf16.mxu0 0
      %1540 = vmatmul.mubr.bf16.gmra.mxu0 %v1008
      %v1541 = vpop.f32.mrf.mxu0
      %v1542 = vadd.f32 %v1253, %v1541
      %v1543 = vpop.f32.mrf.mxu0
      %v1544 = vpop.f32.mrf.mxu0
      %v1545 = vadd.f32 %v1256, %v1544
      %v1546 = vpop.f32.mrf.mxu0
      %1547 = vmatprep.mubr.bf16.mxu0 0
      %1548 = vmatmul.mubr.bf16.gmra.mxu0 %v1011
      %v1549 = vpop.f32.mrf.mxu0
      %v1550 = vadd.f32 %v1261, %v1549
      %v1551 = vpop.f32.mrf.mxu0
      %v1552 = vpop.f32.mrf.mxu0
      %v1553 = vadd.f32 %v1264, %v1552
      %v1554 = vpop.f32.mrf.mxu0
      %1555 = vmatprep.mubr.bf16.mxu0 0
      %1556 = vmatmul.mubr.bf16.gmra.mxu0 %v1014
      %v1557 = vpop.f32.mrf.mxu0
      %v1558 = vadd.f32 %v1269, %v1557
      %v1559 = vpop.f32.mrf.mxu0
      %v1560 = vpop.f32.mrf.mxu0
      %v1561 = vadd.f32 %v1272, %v1560
      %v1562 = vpop.f32.mrf.mxu0
      %1563 = vmatprep.mubr.bf16.mxu0 0
      %1564 = vmatmul.mubr.bf16.gmra.mxu0 %v1017
      %v1565 = vpop.f32.mrf.mxu0
      %v1566 = vadd.f32 %v1277, %v1565
      %v1567 = vpop.f32.mrf.mxu0
      %v1568 = vpop.f32.mrf.mxu0
      %v1569 = vadd.f32 %v1280, %v1568
      %v1570 = vpop.f32.mrf.mxu0
      %1571 = vmatprep.mubr.bf16.mxu0 0
      %1572 = vmatmul.mubr.bf16.gmra.mxu0 %v1020
      %v1573 = vpop.f32.mrf.mxu0
      %v1574 = vadd.f32 %v1285, %v1573
      %v1575 = vpop.f32.mrf.mxu0
      %v1576 = vpop.f32.mrf.mxu0
      %v1577 = vadd.f32 %v1288, %v1576
      %v1578 = vpop.f32.mrf.mxu0
      %1579 = vmatprep.mubr.bf16.mxu0 0
      %1580 = vmatmul.mubr.bf16.gmra.mxu0 %v1023
      %v1581 = vpop.f32.mrf.mxu0
      %v1582 = vadd.f32 %v1293, %v1581
      %v1583 = vpop.f32.mrf.mxu0
      %v1584 = vpop.f32.mrf.mxu0
      %v1585 = vadd.f32 %v1296, %v1584
      %v1586 = vpop.f32.mrf.mxu0
      %1587 = vmatprep.mubr.bf16.mxu0 0
      %1588 = vmatmul.mubr.bf16.gmra.mxu0 %v1026
      %v1589 = vpop.f32.mrf.mxu0
      %v1590 = vadd.f32 %v1301, %v1589
      %v1591 = vpop.f32.mrf.mxu0
      %v1592 = vpop.f32.mrf.mxu0
      %v1593 = vadd.f32 %v1304, %v1592
      %v1594 = vpop.f32.mrf.mxu0
      %1595 = vmatprep.mubr.bf16.mxu0 0
      %1596 = vmatmul.mubr.bf16.gmra.mxu0 %v1029
      %v1597 = vpop.f32.mrf.mxu0
      %v1598 = vadd.f32 %v1309, %v1597
      %v1599 = vpop.f32.mrf.mxu0
      %v1600 = vpop.f32.mrf.mxu0
      %v1601 = vadd.f32 %v1312, %v1600
      %v1602 = vpop.f32.mrf.mxu0
      %1603 = vmatprep.mubr.bf16.mxu0 0
      %1604 = vmatmul.mubr.bf16.gmra.mxu0 %v1032
      %v1605 = vpop.f32.mrf.mxu0
      %v1606 = vadd.f32 %v1317, %v1605
      %v1607 = vpop.f32.mrf.mxu0
      %v1608 = vpop.f32.mrf.mxu0
      %v1609 = vadd.f32 %v1320, %v1608
      %v1610 = vpop.f32.mrf.mxu0
      %1611 = vdwg.mxu0
      %vm1612 = vcmask 23552
      %1613 = vst.msk [vmem:[%s175] sm:$0xff] %vm1612, %v1358
      %1614 = vst.msk [vmem:[%s175 + $0x8] sm:$0xff] %vm1612, %v1361
      %1615 = vst.msk [vmem:[%s175 + $0x10] sm:$0xff] %vm1612, %v1366
      %1616 = vst.msk [vmem:[%s175 + $0x18] sm:$0xff] %vm1612, %v1369
      %1617 = vst.msk [vmem:[%s175 + $0x20] sm:$0xff] %vm1612, %v1374
      %1618 = vst.msk [vmem:[%s175 + $0x28] sm:$0xff] %vm1612, %v1377
      %1619 = vst.msk [vmem:[%s175 + $0x30] sm:$0xff] %vm1612, %v1382
      %1620 = vst.msk [vmem:[%s175 + $0x38] sm:$0xff] %vm1612, %v1385
      %1621 = vst.msk [vmem:[%s175 + $0x40] sm:$0xff] %vm1612, %v1390
      %1622 = vst.msk [vmem:[%s175 + $0x48] sm:$0xff] %vm1612, %v1393
      %1623 = vst.msk [vmem:[%s175 + $0x50] sm:$0xff] %vm1612, %v1398
      %1624 = vst.msk [vmem:[%s175 + $0x58] sm:$0xff] %vm1612, %v1401
      %1625 = vst.msk [vmem:[%s175 + $0x60] sm:$0xff] %vm1612, %v1406
      %1626 = vst.msk [vmem:[%s175 + $0x68] sm:$0xff] %vm1612, %v1409
      %1627 = vst.msk [vmem:[%s175 + $0x70] sm:$0xff] %vm1612, %v1414
      %1628 = vst.msk [vmem:[%s175 + $0x78] sm:$0xff] %vm1612, %v1417
      %1629 = vst.msk [vmem:[%s175 + $0x80] sm:$0xff] %vm1612, %v1422
      %1630 = vst.msk [vmem:[%s175 + $0x88] sm:$0xff] %vm1612, %v1425
      %1631 = vst.msk [vmem:[%s175 + $0x90] sm:$0xff] %vm1612, %v1430
      %1632 = vst.msk [vmem:[%s175 + $0x98] sm:$0xff] %vm1612, %v1433
      %1633 = vst.msk [vmem:[%s175 + $0xa0] sm:$0xff] %vm1612, %v1438
      %1634 = vst.msk [vmem:[%s175 + $0xa8] sm:$0xff] %vm1612, %v1441
      %1635 = vst.msk [vmem:[%s175 + $0xb0] sm:$0xff] %vm1612, %v1446
      %1636 = vst.msk [vmem:[%s175 + $0xb8] sm:$0xff] %vm1612, %v1449
      %1637 = vst.msk [vmem:[%s175 + $0xc0] sm:$0xff] %vm1612, %v1454
      %1638 = vst.msk [vmem:[%s175 + $0xc8] sm:$0xff] %vm1612, %v1457
      %1639 = vst.msk [vmem:[%s175 + $0xd0] sm:$0xff] %vm1612, %v1462
      %1640 = vst.msk [vmem:[%s175 + $0xd8] sm:$0xff] %vm1612, %v1465
      %1641 = vst.msk [vmem:[%s175 + $0xe0] sm:$0xff] %vm1612, %v1470
      %1642 = vst.msk [vmem:[%s175 + $0xe8] sm:$0xff] %vm1612, %v1473
      %1643 = vst.msk [vmem:[%s175 + $0xf0] sm:$0xff] %vm1612, %v1478
      %1644 = vst.msk [vmem:[%s175 + $0xf8] sm:$0xff] %vm1612, %v1481
      %1645 = vst.msk [vmem:[%s175 + $0x100] sm:$0xff] %vm1612, %v1486
      %1646 = vst.msk [vmem:[%s175 + $0x108] sm:$0xff] %vm1612, %v1489
      %1647 = vst.msk [vmem:[%s175 + $0x110] sm:$0xff] %vm1612, %v1494
      %1648 = vst.msk [vmem:[%s175 + $0x118] sm:$0xff] %vm1612, %v1497
      %1649 = vst.msk [vmem:[%s175 + $0x120] sm:$0xff] %vm1612, %v1502
      %1650 = vst.msk [vmem:[%s175 + $0x128] sm:$0xff] %vm1612, %v1505
      %1651 = vst.msk [vmem:[%s175 + $0x130] sm:$0xff] %vm1612, %v1510
      %1652 = vst.msk [vmem:[%s175 + $0x138] sm:$0xff] %vm1612, %v1513
      %1653 = vst.msk [vmem:[%s175 + $0x140] sm:$0xff] %vm1612, %v1518
      %1654 = vst.msk [vmem:[%s175 + $0x148] sm:$0xff] %vm1612, %v1521
      %1655 = vst.msk [vmem:[%s175 + $0x150] sm:$0xff] %vm1612, %v1526
      %1656 = vst.msk [vmem:[%s175 + $0x158] sm:$0xff] %vm1612, %v1529
      %1657 = vst.msk [vmem:[%s175 + $0x160] sm:$0xff] %vm1612, %v1534
      %1658 = vst.msk [vmem:[%s175 + $0x168] sm:$0xff] %vm1612, %v1537
      %1659 = vst.msk [vmem:[%s175 + $0x170] sm:$0xff] %vm1612, %v1542
      %1660 = vst.msk [vmem:[%s175 + $0x178] sm:$0xff] %vm1612, %v1545
      %1661 = vst.msk [vmem:[%s175 + $0x180] sm:$0xff] %vm1612, %v1550
      %1662 = vst.msk [vmem:[%s175 + $0x188] sm:$0xff] %vm1612, %v1553
      %1663 = vst.msk [vmem:[%s175 + $0x190] sm:$0xff] %vm1612, %v1558
      %1664 = vst.msk [vmem:[%s175 + $0x198] sm:$0xff] %vm1612, %v1561
      %1665 = vst.msk [vmem:[%s175 + $0x1a0] sm:$0xff] %vm1612, %v1566
      %1666 = vst.msk [vmem:[%s175 + $0x1a8] sm:$0xff] %vm1612, %v1569
      %1667 = vst.msk [vmem:[%s175 + $0x1b0] sm:$0xff] %vm1612, %v1574
      %1668 = vst.msk [vmem:[%s175 + $0x1b8] sm:$0xff] %vm1612, %v1577
      %1669 = vst.msk [vmem:[%s175 + $0x1c0] sm:$0xff] %vm1612, %v1582
      %1670 = vst.msk [vmem:[%s175 + $0x1c8] sm:$0xff] %vm1612, %v1585
      %1671 = vst.msk [vmem:[%s175 + $0x1d0] sm:$0xff] %vm1612, %v1590
      %1672 = vst.msk [vmem:[%s175 + $0x1d8] sm:$0xff] %vm1612, %v1593
      %1673 = vst.msk [vmem:[%s175 + $0x1e0] sm:$0xff] %vm1612, %v1598
      %1674 = vst.msk [vmem:[%s175 + $0x1e8] sm:$0xff] %vm1612, %v1601
      %1675 = vst.msk [vmem:[%s175 + $0x1f0] sm:$0xff] %vm1612, %v1606
      %1676 = vst.msk [vmem:[%s175 + $0x1f8] sm:$0xff] %vm1612, %v1609
      %s1677 = smul.u32 64, %s14
      %p1678 = scmp.lt.s32.totalorder %s1677, 895
      %s1679 = scalar_select %p1678, %s1677, 895
      %s1680 = smul.addr %s1679, 8
      %s1681 = scalar_lea.vmem %s3, %s1680
      // Predicated region
      $region33: #{decoder_forward.9} parent=31 // pred_check
        %p1682 = pneg %p100
      $region34: #{decoder_forward.9} parent=31 // pred_check_branch
        %1684 = sbr.rel (%p1682) target = $region36
      $region35: #{decoder_forward.9} parent=31 // pred_region
        %s1685 = smul.u32 64, %s14
      $region36: #{decoder_forward.9} parent=31 // pred_fallthru
        _
    $region32: #{decoder_forward.9} parent=5 // pred_fallthru
      _
    %p1686 = scmp.le.s32.totalorder 2, %s9
    // Predicated region
    $region37: #{decoder_forward.9} parent=5 // pred_check
      %p1687 = pneg %p1686
    $region38: #{decoder_forward.9} parent=5 // pred_check_branch
      %1689 = sbr.rel (%p1687) target = $region40
    $region39: #{decoder_forward.9} parent=5 // pred_region
      %s1690 = ssub.s32 %s9, 2
      // Predicated region
      $region41: #{decoder_forward.9} parent=39 // pred_check
        %p1691 = pneg %p106
      $region42: #{decoder_forward.9} parent=39 // pred_check_branch
        %1693 = sbr.rel (%p1691) target = $region44
      $region43: #{decoder_forward.9} parent=39 // pred_region
        %s1694 = smul.u32 64, %s15
        %p1695 = scmp.lt.s32.totalorder %s1694, 895
        %s1696 = scalar_select %p1695, %s1694, 895
        %s1697 = smul.addr %s1696, 8
        %s1698 = scalar_lea.vmem %s3, %s1697
      $region44: #{decoder_forward.9} parent=39 // pred_fallthru
        _
    $region40: #{decoder_forward.9} parent=5 // pred_fallthru
      _
  $region6: #{decoder_forward.9} parent=0 // loop_footer
    %s13 = sadd.s32 1, %s9
  $region7: #{decoder_forward.9} parent=0 // loop_footer_branch
    %8 = sbr.rel target = $region3
  $region8: #{decoder_forward.9} parent=0 // loop_exit
    _

</llo_original>
